<compile_context>
chip_gen: v7x
topology: tpu7x:2x2x1
jax: 0.10.0
libtpu: 0.0.40
codegen_flags: <defaults>
</compile_context>

<pallas_src>
import functools

import jax
import jax.numpy as jnp
from jax.experimental import pallas as pl
from jax.experimental.pallas import tpu as pltpu


DTYPE = jnp.bfloat16           # weights / activations; accumulation stays f32
_TM, _TN, _TK = 256, 256, 512  # tile caps (multiples of 256 for v6e/v7x MXU)


def _pick_tile(dim, cap):
    """Full dim if it fits, else the largest power-of-2-scaled divisor <= cap."""
    if dim <= cap:
        return dim
    t = cap
    while t >= 128 and dim % t:
        t //= 2
    return t if t >= 128 and dim % t == 0 else dim


# ----------------------------------------------------------------------------
# Pallas kernels
# ----------------------------------------------------------------------------
def _epilogue(y_f32, activation):
    if activation == "relu":
        return jnp.maximum(y_f32, 0.0)
    if activation == "log_softmax":
        m = jnp.max(y_f32, axis=-1, keepdims=True)
        s = y_f32 - m
        lse = jnp.log(jnp.sum(jnp.exp(s), axis=-1, keepdims=True))
        return s - lse
    return y_f32


def _matmul_single_k_kernel(x_ref, w_ref, b_ref, o_ref, *, activation):
    """Matmul where the whole K dim fits in one tile: no scratch accumulator."""
    y = jnp.dot(x_ref[...], w_ref[...], preferred_element_type=jnp.float32)
    y = y + b_ref[...].astype(jnp.float32)
    o_ref[...] = _epilogue(y, activation).astype(o_ref.dtype)


def _matmul_kernel(x_ref, w_ref, b_ref, o_ref, acc_ref, *, activation):
    """K-tiled matmul with f32 accumulator; bias + activation fused at last K step."""
    @pl.when(pl.program_id(2) == 0)
    def _():
        acc_ref[...] = jnp.zeros_like(acc_ref)

    acc_ref[...] += jnp.dot(x_ref[...], w_ref[...],
                            preferred_element_type=jnp.float32)

    @pl.when(pl.program_id(2) == pl.num_programs(2) - 1)
    def _():
        y = acc_ref[...] + b_ref[...].astype(jnp.float32)
        o_ref[...] = _epilogue(y, activation).astype(o_ref.dtype)


def _add_ln_kernel(x_ref, r_ref, g_ref, b_ref, o_ref):
    """Fused residual add + LayerNorm (math in f32)."""
    x = x_ref[...].astype(jnp.float32) + r_ref[...].astype(jnp.float32)
    mu = jnp.mean(x, axis=-1, keepdims=True)
    var = jnp.mean(jnp.square(x - mu), axis=-1, keepdims=True)
    y = (x - mu) * jax.lax.rsqrt(var + 1e-5)
    o_ref[...] = (y * g_ref[...].astype(jnp.float32)
                  + b_ref[...].astype(jnp.float32)).astype(o_ref.dtype)


def _attention_kernel(q_ref, k_ref, v_ref, kmask_ref, o_ref, *,
                      n_heads, scale, causal):
    """All heads of one batch row in a single grid step on lane-dense [L, d] tiles.

    Mask is built once per batch row from a (1, Lk) key pad mask plus an iota
    causal term (no broadcast (B*H,Lq,Lk) mask in HBM); Q is pre-scaled once.
    """
    q = q_ref[0]                       # (Lq, d)
    k = k_ref[0]                       # (Lk, d)
    v = v_ref[0]                       # (Lk, d)
    Lq, d = q.shape
    Lk = k.shape[0]
    dh = d // n_heads

    # pre-scale Q once (VPU pass over [Lq, d]) instead of scaling every
    # per-head [Lq, Lk] score matrix.
    q = (q.astype(jnp.float32) * scale).astype(q.dtype)

    valid = jnp.broadcast_to(kmask_ref[0] > 0, (Lq, Lk))
    if causal:
        row = jax.lax.broadcasted_iota(jnp.int32, (Lq, Lk), 0)
        col = jax.lax.broadcasted_iota(jnp.int32, (Lq, Lk), 1)
        valid = jnp.logical_and(valid, col <= row)
    bias = jnp.where(valid, 0.0, -1e9).astype(jnp.float32)   # shared by heads

    outs = []
    for h in range(n_heads):           # unrolled; heads share mask and tiles
        sl = slice(h * dh, (h + 1) * dh)
        s = jax.lax.dot_general(q[:, sl], k[:, sl], (((1,), (1,)), ((), ())),
                                preferred_element_type=jnp.float32) + bias
        s = s - jnp.max(s, axis=-1, keepdims=True)
        p = jnp.exp(s)
        p = p * pl.reciprocal(jnp.sum(p, axis=-1, keepdims=True), approx=True)
        outs.append(jnp.dot(p.astype(v.dtype), v[:, sl],
                            preferred_element_type=jnp.float32))
    # single lane-dense store (last dim = n_heads * dh = d)
    o_ref[0] = jnp.concatenate(outs, axis=-1).astype(o_ref.dtype)


# ----------------------------------------------------------------------------
# pallas_call wrappers
# ----------------------------------------------------------------------------
def matmul(x2d, w, b, activation=None, out_dtype=None):
    M, K = x2d.shape
    K2, N = w.shape
    assert K == K2
    out_dtype = out_dtype or x2d.dtype
    tm = _pick_tile(M, _TM)
    tk = _pick_tile(K, _TK)
    # log-softmax needs the full row in one block.
    # TODO(synk): at real vocab sizes (~50k) the LM head needs a two-pass
    # N-tiled log-softmax to stay inside v7x's 64 MiB VMEM.
    tn = N if activation == "log_softmax" else _pick_tile(N, _TN)

    if K // tk == 1:
        # fast path: whole K in one tile -> no accumulator scratch, 2-D grid.
        kern = functools.partial(_matmul_single_k_kernel, activation=activation)
        return pl.pallas_call(
            kern,
            out_shape=jax.ShapeDtypeStruct((M, N), out_dtype),
            grid=(M // tm, N // tn),
            in_specs=[
                pl.BlockSpec((tm, K), lambda i, j: (i, 0)),
                pl.BlockSpec((K, tn), lambda i, j: (0, j)),
                pl.BlockSpec((1, tn), lambda i, j: (0, j)),
            ],
            out_specs=pl.BlockSpec((tm, tn), lambda i, j: (i, j)),
            compiler_params=pltpu.CompilerParams(
                dimension_semantics=("parallel", "parallel")),
        )(x2d, w, b.reshape(1, N))

    grid = (M // tm, N // tn, K // tk)
    kern = functools.partial(_matmul_kernel, activation=activation)
    return pl.pallas_call(
        kern,
        out_shape=jax.ShapeDtypeStruct((M, N), out_dtype),
        grid=grid,
        in_specs=[
            pl.BlockSpec((tm, tk), lambda i, j, k: (i, k)),
            pl.BlockSpec((tk, tn), lambda i, j, k: (k, j)),
            pl.BlockSpec((1, tn), lambda i, j, k: (0, j)),
        ],
        out_specs=pl.BlockSpec((tm, tn), lambda i, j, k: (i, j)),
        scratch_shapes=[pltpu.VMEM((tm, tn), jnp.float32)],
        compiler_params=pltpu.CompilerParams(
            dimension_semantics=("parallel", "parallel", "arbitrary")),
    )(x2d, w, b.reshape(1, N))


def add_layernorm(x, res, g, b):
    B, L, d = x.shape
    M = B * L
    tm = _pick_tile(M, _TM)
    out = pl.pallas_call(
        _add_ln_kernel,
        out_shape=jax.ShapeDtypeStruct((M, d), x.dtype),
        grid=(M // tm,),
        in_specs=[
            pl.BlockSpec((tm, d), lambda i: (i, 0)),
            pl.BlockSpec((tm, d), lambda i: (i, 0)),
            pl.BlockSpec((1, d), lambda i: (0, 0)),
            pl.BlockSpec((1, d), lambda i: (0, 0)),
        ],
        out_specs=pl.BlockSpec((tm, d), lambda i: (i, 0)),
        compiler_params=pltpu.CompilerParams(dimension_semantics=("parallel",)),
    )(x.reshape(M, d), res.reshape(M, d), g.reshape(1, d), b.reshape(1, d))
    return out.reshape(B, L, d)


def attention(q, k, v, key_mask, n_heads, causal):
    B, Lq, d = q.shape
    Lk = k.shape[1]
    scale = 1.0 / float(d // n_heads) ** 0.5
    kern = functools.partial(_attention_kernel, n_heads=n_heads, scale=scale,
                             causal=causal)
    mask3 = key_mask.astype(jnp.int32).reshape(B, 1, Lk)
    return pl.pallas_call(
        kern,
        out_shape=jax.ShapeDtypeStruct((B, Lq, d), q.dtype),
        grid=(B,),
        in_specs=[
            pl.BlockSpec((1, Lq, d), lambda b: (b, 0, 0)),
            pl.BlockSpec((1, Lk, d), lambda b: (b, 0, 0)),
            pl.BlockSpec((1, Lk, d), lambda b: (b, 0, 0)),
            pl.BlockSpec((1, 1, Lk), lambda b: (b, 0, 0)),
        ],
        out_specs=pl.BlockSpec((1, Lq, d), lambda b: (b, 0, 0)),
        compiler_params=pltpu.CompilerParams(dimension_semantics=("parallel",)),
    )(q, k, v, mask3)


# ----------------------------------------------------------------------------
# Model glue (plain JAX around the Pallas kernels)
# ----------------------------------------------------------------------------
def self_mha(p, x, key_mask, n_heads, causal):
    B, L, d = x.shape
    qkv = matmul(x.reshape(B * L, d), p["wqkv"], p["bqkv"]).reshape(B, L, 3 * d)
    q, k, v = qkv[..., :d], qkv[..., d:2 * d], qkv[..., 2 * d:]
    o = attention(q, k, v, key_mask, n_heads, causal)
    return matmul(o.reshape(B * L, d), p["wo"], p["bo"]).reshape(B, L, d)


def cross_mha(p, x_q, x_kv, key_mask, n_heads):
    B, Lq, d = x_q.shape
    Lk = x_kv.shape[1]
    q = matmul(x_q.reshape(B * Lq, d), p["wq"], p["bq"]).reshape(B, Lq, d)
    kv = matmul(x_kv.reshape(B * Lk, d), p["wkv"], p["bkv"]).reshape(B, Lk, 2 * d)
    k, v = kv[..., :d], kv[..., d:]
    o = attention(q, k, v, key_mask, n_heads, False)
    return matmul(o.reshape(B * Lq, d), p["wo"], p["bo"]).reshape(B, Lq, d)


def ffn(p, x):
    B, L, d = x.shape
    h = matmul(x.reshape(B * L, d), p["w1"], p["b1"], activation="relu")
    return matmul(h, p["w2"], p["b2"]).reshape(B, L, d)


def encoder_layer(p, x, src_key_mask, n_heads):
    x = add_layernorm(x, self_mha(p["attn"], x, src_key_mask, n_heads, False),
                      p["ln1_g"], p["ln1_b"])
    x = add_layernorm(x, ffn(p, x), p["ln2_g"], p["ln2_b"])
    return x


def decoder_layer(p, x, dec_key_mask, enc, cross_key_mask, n_heads):
    x = add_layernorm(x, self_mha(p["self_attn"], x, dec_key_mask, n_heads, True),
                      p["ln1_g"], p["ln1_b"])
    x = add_layernorm(x, cross_mha(p["cross_attn"], x, enc, cross_key_mask, n_heads),
                      p["ln2_g"], p["ln2_b"])
    x = add_layernorm(x, ffn(p, x), p["ln3_g"], p["ln3_b"])
    return x


def embed(p, tokens):
    # TODO(synk): BartEmbedding body is not given in the reference; using
    # token embedding + learned positional embedding (gather left to XLA).
    tok = jnp.take(p["tok"], tokens, axis=0)
    pos = p["pos"][: tokens.shape[1]][None]
    return tok + pos


def shift_to_right(inp, start_tok):
    # TODO(synk): reference shift_to_right returns None; using standard BART
    # shift-right with `start_tok` as decoder start token.
    B = inp.shape[0]
    start = jnp.full((B, 1), start_tok, dtype=inp.dtype)
    return jnp.concatenate([start, inp[:, :-1]], axis=1)


def bart_forward_dense(params, inp_batch, inp_mask, *, cfg):
    B, L = inp_batch.shape
    d, V, H = cfg["d_m"], cfg["vocab_size"], cfg["attn_heads"]

    src_key_mask = inp_batch != 0                        # encoder key pad mask
    dec_inp = shift_to_right(inp_batch, cfg["sep_idx"])
    dec_key_mask = dec_inp != 0                          # decoder self-attn pad mask
    cross_key_mask = inp_mask                            # cross-attn key mask (reference)

    # encoder
    x = embed(params["enc"]["emb"], inp_batch)
    for lp in params["enc"]["layers"]:
        x = encoder_layer(lp, x, src_key_mask, H)
    enc_output = x

    # decoder
    y = embed(params["dec"]["emb"], dec_inp)
    for lp in params["dec"]["layers"]:
        y = decoder_layer(lp, y, dec_key_mask, enc_output, cross_key_mask, H)
    dec_output = y

    # LM head with log-softmax fused into the matmul epilogue
    lm_logsm = matmul(dec_output.reshape(B * L, d), params["lm_w"], params["lm_b"],
                      activation="log_softmax",
                      out_dtype=jnp.float32).reshape(B, L, V)

    # classification head at the SEP position of every example
    # TODO(synk): reference indexes dec_output with a [1, L] boolean mask
    # (ill-shaped); we take the first SEP position per example instead.
    sep_pos = jnp.argmax(inp_batch == cfg["sep_idx"], axis=1)
    cls = dec_output[jnp.arange(B), sep_pos]             # (B, d)
    rst_2 = matmul(cls, params["cls_w"], params["cls_b"],
                   activation="log_softmax", out_dtype=jnp.float32)
    return lm_logsm, rst_2


# ----------------------------------------------------------------------------
# Deterministic parameter init
# ----------------------------------------------------------------------------
def _init_self_attn(key, d):
    k1, k2 = jax.random.split(key)
    return dict(
        wqkv=jax.random.normal(k1, (d, 3 * d), jnp.float32) * 0.02,
        bqkv=jnp.zeros((3 * d,), jnp.float32),
        wo=jax.random.normal(k2, (d, d), jnp.float32) * 0.02,
        bo=jnp.zeros((d,), jnp.float32),
    )


def _init_cross_attn(key, d):
    k1, k2, k3 = jax.random.split(key, 3)
    return dict(
        wq=jax.random.normal(k1, (d, d), jnp.float32) * 0.02,
        bq=jnp.zeros((d,), jnp.float32),
        wkv=jax.random.normal(k2, (d, 2 * d), jnp.float32) * 0.02,
        bkv=jnp.zeros((2 * d,), jnp.float32),
        wo=jax.random.normal(k3, (d, d), jnp.float32) * 0.02,
        bo=jnp.zeros((d,), jnp.float32),
    )


def _init_enc_layer(key, d, d_ff):
    k1, k2, k3 = jax.random.split(key, 3)
    return dict(
        attn=_init_self_attn(k1, d),
        w1=jax.random.normal(k2, (d, d_ff), jnp.float32) * 0.02,
        b1=jnp.zeros((d_ff,), jnp.float32),
        w2=jax.random.normal(k3, (d_ff, d), jnp.float32) * 0.02,
        b2=jnp.zeros((d,), jnp.float32),
        ln1_g=jnp.ones((d,), jnp.float32), ln1_b=jnp.zeros((d,), jnp.float32),
        ln2_g=jnp.ones((d,), jnp.float32), ln2_b=jnp.zeros((d,), jnp.float32),
    )


def _init_dec_layer(key, d, d_ff):
    k1, k2, k3, k4 = jax.random.split(key, 4)
    return dict(
        self_attn=_init_self_attn(k1, d),
        cross_attn=_init_cross_attn(k2, d),
        w1=jax.random.normal(k3, (d, d_ff), jnp.float32) * 0.02,
        b1=jnp.zeros((d_ff,), jnp.float32),
        w2=jax.random.normal(k4, (d_ff, d), jnp.float32) * 0.02,
        b2=jnp.zeros((d,), jnp.float32),
        ln1_g=jnp.ones((d,), jnp.float32), ln1_b=jnp.zeros((d,), jnp.float32),
        ln2_g=jnp.ones((d,), jnp.float32), ln2_b=jnp.zeros((d,), jnp.float32),
        ln3_g=jnp.ones((d,), jnp.float32), ln3_b=jnp.zeros((d,), jnp.float32),
    )


def _init_emb(key, vocab, d, max_len):
    k1, k2 = jax.random.split(key)
    return dict(
        tok=jax.random.normal(k1, (vocab, d), jnp.float32) * 0.02,
        pos=jax.random.normal(k2, (max_len, d), jnp.float32) * 0.02,
    )


def init_params(key, cfg):
    d, d_ff = cfg["d_m"], cfg["d_m"] * 4
    V, n, L = cfg["vocab_size"], cfg["n_layers"], cfg["max_len"]
    keys = jax.random.split(key, 8)
    enc = dict(
        emb=_init_emb(keys[0], V, d, L),
        layers=[_init_enc_layer(k, d, d_ff) for k in jax.random.split(keys[1], n)],
    )
    dec = dict(
        emb=_init_emb(keys[2], V, d, L),
        layers=[_init_dec_layer(k, d, d_ff) for k in jax.random.split(keys[3], n)],
    )
    return dict(
        enc=enc,
        dec=dec,
        lm_w=jax.random.normal(keys[4], (d, V), jnp.float32) * 0.02,
        lm_b=jnp.zeros((V,), jnp.float32),
        cls_w=jax.random.normal(keys[5], (d, cfg["n_sent"]), jnp.float32) * 0.02,
        cls_b=jnp.zeros((cfg["n_sent"],), jnp.float32),
    )


# ----------------------------------------------------------------------------
# Main
# ----------------------------------------------------------------------------
if __name__ == "__main__":
    cfg = dict(vocab_size=64, d_m=32, attn_heads=4, n_layers=2,
               sep_idx=3, n_sent=4, max_len=8)
    B, L = 2, 8

    key = jax.random.PRNGKey(0)
    pkey, dkey = jax.random.split(key)
    params = jax.tree_util.tree_map(lambda a: a.astype(DTYPE),
                                    init_params(pkey, cfg))

    # tokens in [4, vocab); insert exactly one SEP per row; row 0 ends with PAD(0)
    inp_batch = jax.random.randint(dkey, (B, L), 4, cfg["vocab_size"], dtype=jnp.int32)
    inp_batch = inp_batch.at[0, 6].set(cfg["sep_idx"])
    inp_batch = inp_batch.at[0, 7].set(0)
    inp_batch = inp_batch.at[1, 7].set(cfg["sep_idx"])
    inp_mask = inp_batch != 0                            # (B, L) bool

    fwd = jax.jit(functools.partial(bart_forward_dense, cfg=cfg))
    lm_logsm, rst_2 = fwd(params, inp_batch, inp_mask)
    jax.block_until_ready((lm_logsm, rst_2))

    # rst_1: ragged per-example gather (reference returns a ragged Python list);
    # done once, outside the jitted dense forward.
    rst_1 = [lm_logsm[i][inp_mask[i]] for i in range(B)]
    for r in rst_1:
        jax.block_until_ready(r)

    assert rst_1[0].shape == (7, cfg["vocab_size"])
    assert rst_1[1].shape == (8, cfg["vocab_size"])
    assert rst_2.shape == (B, cfg["n_sent"])
    print("KERNEL_OK")
</pallas_src>

<mosaic_0001>
module attributes {stable_mosaic.version = 11 : i64} {
  func.func @_matmul_single_k_kernel(%arg0: i32, %arg1: i32, %arg2: memref<16x32xbf16, #tpu.memory_space<vmem>>, %arg3: memref<32x96xbf16, #tpu.memory_space<vmem>>, %arg4: memref<1x96xbf16, #tpu.memory_space<vmem>>, %arg5: memref<16x96xbf16, #tpu.memory_space<vmem>>) attributes {dimension_semantics = [#tpu.dimension_semantics<parallel>, #tpu.dimension_semantics<parallel>], iteration_bounds = array<i64: 1, 1>, scalar_prefetch = 0 : i64, scratch_operands = 0 : i64, tpu.core_type = #tpu.core_type<tc>, window_params = [{transform_indices = @transform_0, window_bounds = array<i64: 16, 32>}, {transform_indices = @transform_1, window_bounds = array<i64: 32, 96>}, {transform_indices = @transform_2, window_bounds = array<i64: 1, 96>}, {transform_indices = @transform_3, window_bounds = array<i64: 16, 96>}]} {
    %c0 = arith.constant 0 : index
    %c0_0 = arith.constant 0 : index
    %0 = vector.load %arg2[%c0, %c0_0] : memref<16x32xbf16, #tpu.memory_space<vmem>>, vector<16x32xbf16>
    %c0_1 = arith.constant 0 : index
    %c0_2 = arith.constant 0 : index
    %1 = vector.load %arg3[%c0_1, %c0_2] : memref<32x96xbf16, #tpu.memory_space<vmem>>, vector<32x96xbf16>
    %cst = arith.constant dense<0.000000e+00> : vector<16x96xf32>
    %2 = tpu.matmul %0, %1, %cst {dimension_numbers = #tpu.dot_dimension_numbers<[1], [0], [0], [1], [0, 0, 1, 1], [], []>} : vector<16x32xbf16>, vector<32x96xbf16>, vector<16x96xf32> -> vector<16x96xf32>
    %c0_3 = arith.constant 0 : index
    %c0_4 = arith.constant 0 : index
    %3 = vector.load %arg4[%c0_3, %c0_4] : memref<1x96xbf16, #tpu.memory_space<vmem>>, vector<1x96xbf16>
    %4 = arith.extf %3 : vector<1x96xbf16> to vector<1x96xf32>
    %5 = vector.broadcast %4 : vector<1x96xf32> to vector<16x96xf32>
    %6 = arith.addf %2, %5 : vector<16x96xf32>
    %7 = arith.truncf %6 : vector<16x96xf32> to vector<16x96xbf16>
    %c0_5 = arith.constant 0 : index
    %c0_6 = arith.constant 0 : index
    %8 = vector.load %arg5[%c0_5, %c0_6] : memref<16x96xbf16, #tpu.memory_space<vmem>>, vector<16x96xbf16>
    tpu.vector_store %arg5[%c0_5, %c0_6], %7 {strides = array<i32>} : memref<16x96xbf16, #tpu.memory_space<vmem>>, vector<16x96xbf16>,
    return
  }
  func.func @transform_0(%arg0: i32, %arg1: i32) -> (i32, i32) {
    %c0_i32 = arith.constant 0 : i32
    %c0_i32_0 = arith.constant 0 : i32
    return %arg0, %c0_i32 : i32, i32
  }
  func.func @transform_1(%arg0: i32, %arg1: i32) -> (i32, i32) {
    %c0_i32 = arith.constant 0 : i32
    %c0_i32_0 = arith.constant 0 : i32
    return %c0_i32, %arg1 : i32, i32
  }
  func.func @transform_2(%arg0: i32, %arg1: i32) -> (i32, i32) {
    %c0_i32 = arith.constant 0 : i32
    %c0_i32_0 = arith.constant 0 : i32
    return %c0_i32, %arg1 : i32, i32
  }
  func.func @transform_3(%arg0: i32, %arg1: i32) -> (i32, i32) {
    %c0_i32 = arith.constant 0 : i32
    return %arg0, %arg1 : i32, i32
  }
}

module attributes {stable_mosaic.version = 11 : i64} {
  func.func @_matmul_single_k_kernel(%arg0: i32, %arg1: i32, %arg2: memref<16x32xbf16, #tpu.memory_space<vmem>>, %arg3: memref<32x32xbf16, #tpu.memory_space<vmem>>, %arg4: memref<1x32xbf16, #tpu.memory_space<vmem>>, %arg5: memref<16x32xbf16, #tpu.memory_space<vmem>>) attributes {dimension_semantics = [#tpu.dimension_semantics<parallel>, #tpu.dimension_semantics<parallel>], iteration_bounds = array<i64: 1, 1>, scalar_prefetch = 0 : i64, scratch_operands = 0 : i64, tpu.core_type = #tpu.core_type<tc>, window_params = [{transform_indices = @transform_0, window_bounds = array<i64: 16, 32>}, {transform_indices = @transform_1, window_bounds = array<i64: 32, 32>}, {transform_indices = @transform_2, window_bounds = array<i64: 1, 32>}, {transform_indices = @transform_3, window_bounds = array<i64: 16, 32>}]} {
    %c0 = arith.constant 0 : index
    %c0_0 = arith.constant 0 : index
    %0 = vector.load %arg2[%c0, %c0_0] : memref<16x32xbf16, #tpu.memory_space<vmem>>, vector<16x32xbf16>
    %c0_1 = arith.constant 0 : index
    %c0_2 = arith.constant 0 : index
    %1 = vector.load %arg3[%c0_1, %c0_2] : memref<32x32xbf16, #tpu.memory_space<vmem>>, vector<32x32xbf16>
    %cst = arith.constant dense<0.000000e+00> : vector<16x32xf32>
    %2 = tpu.matmul %0, %1, %cst {dimension_numbers = #tpu.dot_dimension_numbers<[1], [0], [0], [1], [0, 0, 1, 1], [], []>} : vector<16x32xbf16>, vector<32x32xbf16>, vector<16x32xf32> -> vector<16x32xf32>
    %c0_3 = arith.constant 0 : index
    %c0_4 = arith.constant 0 : index
    %3 = vector.load %arg4[%c0_3, %c0_4] : memref<1x32xbf16, #tpu.memory_space<vmem>>, vector<1x32xbf16>
    %4 = arith.extf %3 : vector<1x32xbf16> to vector<1x32xf32>
    %5 = vector.broadcast %4 : vector<1x32xf32> to vector<16x32xf32>
    %6 = arith.addf %2, %5 : vector<16x32xf32>
    %7 = arith.truncf %6 : vector<16x32xf32> to vector<16x32xbf16>
    %c0_5 = arith.constant 0 : index
    %c0_6 = arith.constant 0 : index
    %8 = vector.load %arg5[%c0_5, %c0_6] : memref<16x32xbf16, #tpu.memory_space<vmem>>, vector<16x32xbf16>
    tpu.vector_store %arg5[%c0_5, %c0_6], %7 {strides = array<i32>} : memref<16x32xbf16, #tpu.memory_space<vmem>>, vector<16x32xbf16>,
    return
  }
  func.func @transform_0(%arg0: i32, %arg1: i32) -> (i32, i32) {
    %c0_i32 = arith.constant 0 : i32
    %c0_i32_0 = arith.constant 0 : i32
    return %arg0, %c0_i32 : i32, i32
  }
  func.func @transform_1(%arg0: i32, %arg1: i32) -> (i32, i32) {
    %c0_i32 = arith.constant 0 : i32
    %c0_i32_0 = arith.constant 0 : i32
    return %c0_i32, %arg1 : i32, i32
  }
  func.func @transform_2(%arg0: i32, %arg1: i32) -> (i32, i32) {
    %c0_i32 = arith.constant 0 : i32
    %c0_i32_0 = arith.constant 0 : i32
    return %c0_i32, %arg1 : i32, i32
  }
  func.func @transform_3(%arg0: i32, %arg1: i32) -> (i32, i32) {
    %c0_i32 = arith.constant 0 : i32
    return %arg0, %arg1 : i32, i32
  }
}

module attributes {stable_mosaic.version = 11 : i64} {
  func.func @_attention_kernel(%arg0: i32, %arg1: memref<1x8x32xbf16, #tpu.memory_space<vmem>>, %arg2: memref<1x8x32xbf16, #tpu.memory_space<vmem>>, %arg3: memref<1x8x32xbf16, #tpu.memory_space<vmem>>, %arg4: memref<1x1x8xi32, #tpu.memory_space<vmem>>, %arg5: memref<1x8x32xbf16, #tpu.memory_space<vmem>>) attributes {dimension_semantics = [#tpu.dimension_semantics<parallel>], iteration_bounds = array<i64: 2>, scalar_prefetch = 0 : i64, scratch_operands = 0 : i64, tpu.core_type = #tpu.core_type<tc>, window_params = [{transform_indices = @transform_0, window_bounds = array<i64: 1, 8, 32>}, {transform_indices = @transform_1, window_bounds = array<i64: 1, 8, 32>}, {transform_indices = @transform_2, window_bounds = array<i64: 1, 8, 32>}, {transform_indices = @transform_3, window_bounds = array<i64: 1, 1, 8>}, {transform_indices = @transform_4, window_bounds = array<i64: 1, 8, 32>}]} {
    %c0 = arith.constant 0 : index
    %c0_0 = arith.constant 0 : index
    %c0_1 = arith.constant 0 : index
    %0 = vector.load %arg1[%c0, %c0_0, %c0_1] : memref<1x8x32xbf16, #tpu.memory_space<vmem>>, vector<1x8x32xbf16>
    %1 = vector.shape_cast %0 : vector<1x8x32xbf16> to vector<8x32xbf16>
    %c0_2 = arith.constant 0 : index
    %c0_3 = arith.constant 0 : index
    %c0_4 = arith.constant 0 : index
    %2 = vector.load %arg2[%c0_2, %c0_3, %c0_4] : memref<1x8x32xbf16, #tpu.memory_space<vmem>>, vector<1x8x32xbf16>
    %3 = vector.shape_cast %2 : vector<1x8x32xbf16> to vector<8x32xbf16>
    %c0_5 = arith.constant 0 : index
    %c0_6 = arith.constant 0 : index
    %c0_7 = arith.constant 0 : index
    %4 = vector.load %arg3[%c0_5, %c0_6, %c0_7] : memref<1x8x32xbf16, #tpu.memory_space<vmem>>, vector<1x8x32xbf16>
    %5 = vector.shape_cast %4 : vector<1x8x32xbf16> to vector<8x32xbf16>
    %6 = arith.extf %1 : vector<8x32xbf16> to vector<8x32xf32>
    %cst = arith.constant 0.353553385 : f32
    %7 = vector.broadcast %cst : f32 to vector<8x32xf32>
    %8 = arith.mulf %6, %7 : vector<8x32xf32>
    %9 = arith.truncf %8 : vector<8x32xf32> to vector<8x32xbf16>
    %c0_8 = arith.constant 0 : index
    %c0_9 = arith.constant 0 : index
    %c0_10 = arith.constant 0 : index
    %10 = vector.load %arg4[%c0_8, %c0_9, %c0_10] : memref<1x1x8xi32, #tpu.memory_space<vmem>>, vector<1x1x8xi32>
    %11 = vector.shape_cast %10 : vector<1x1x8xi32> to vector<1x8xi32>
    %c0_i32 = arith.constant 0 : i32
    %12 = vector.broadcast %c0_i32 : i32 to vector<1x8xi32>
    %13 = arith.cmpi sgt, %11, %12 : vector<1x8xi32>
    %14 = vector.shape_cast %13 : vector<1x8xi1> to vector<1x8xi1>
    %15 = vector.broadcast %14 : vector<1x8xi1> to vector<8x8xi1>
    %cst_11 = arith.constant 0.000000e+00 : f32
    %cst_12 = arith.constant -1.000000e+09 : f32
    %16 = vector.broadcast %cst_11 : f32 to vector<8x8xf32>
    %17 = vector.broadcast %cst_12 : f32 to vector<8x8xf32>
    %18 = arith.select %15, %16, %17 : vector<8x8xi1>, vector<8x8xf32>
    %19 = vector.extract_strided_slice %9 {offsets = [0, 0], sizes = [8, 8], strides = [1, 1]} : vector<8x32xbf16> to vector<8x8xbf16>
    %20 = vector.extract_strided_slice %3 {offsets = [0, 0], sizes = [8, 8], strides = [1, 1]} : vector<8x32xbf16> to vector<8x8xbf16>
    %cst_13 = arith.constant dense<0.000000e+00> : vector<8x8xf32>
    %21 = tpu.matmul %19, %20, %cst_13 {dimension_numbers = #tpu.dot_dimension_numbers<[1], [1], [0], [0], [0, 0, 1, 0], [], []>} : vector<8x8xbf16>, vector<8x8xbf16>, vector<8x8xf32> -> vector<8x8xf32>
    %22 = arith.addf %21, %18 : vector<8x8xf32>
    %cst_14 = arith.constant dense<0xFF800000> : vector<8xf32>
    %23 = vector.multi_reduction <maximumf>, %22, %cst_14 [1] : vector<8x8xf32> to vector<8xf32>
    %24 = vector.shape_cast %23 : vector<8xf32> to vector<8x1xf32>
    %25 = vector.broadcast %24 : vector<8x1xf32> to vector<8x8xf32>
    %26 = arith.subf %22, %25 : vector<8x8xf32>
    %27 = math.exp %26 : vector<8x8xf32>
    %cst_15 = arith.constant dense<0.000000e+00> : vector<8xf32>
    %28 = vector.multi_reduction <add>, %27, %cst_15 [1] : vector<8x8xf32> to vector<8xf32>
    %29 = vector.shape_cast %28 : vector<8xf32> to vector<8x1xf32>
    %30 = tpu.reciprocal %29 {approx = true} : vector<8x1xf32> -> vector<8x1xf32>
    %31 = vector.broadcast %30 : vector<8x1xf32> to vector<8x8xf32>
    %32 = arith.mulf %27, %31 : vector<8x8xf32>
    %33 = arith.truncf %32 : vector<8x8xf32> to vector<8x8xbf16>
    %34 = vector.extract_strided_slice %5 {offsets = [0, 0], sizes = [8, 8], strides = [1, 1]} : vector<8x32xbf16> to vector<8x8xbf16>
    %cst_16 = arith.constant dense<0.000000e+00> : vector<8x8xf32>
    %35 = tpu.matmul %33, %34, %cst_16 {dimension_numbers = #tpu.dot_dimension_numbers<[1], [0], [0], [1], [0, 0, 1, 1], [], []>} : vector<8x8xbf16>, vector<8x8xbf16>, vector<8x8xf32> -> vector<8x8xf32>
    %36 = vector.extract_strided_slice %9 {offsets = [0, 8], sizes = [8, 8], strides = [1, 1]} : vector<8x32xbf16> to vector<8x8xbf16>
    %37 = vector.extract_strided_slice %3 {offsets = [0, 8], sizes = [8, 8], strides = [1, 1]} : vector<8x32xbf16> to vector<8x8xbf16>
    %cst_17 = arith.constant dense<0.000000e+00> : vector<8x8xf32>
    %38 = tpu.matmul %36, %37, %cst_17 {dimension_numbers = #tpu.dot_dimension_numbers<[1], [1], [0], [0], [0, 0, 1, 0], [], []>} : vector<8x8xbf16>, vector<8x8xbf16>, vector<8x8xf32> -> vector<8x8xf32>
    %39 = arith.addf %38, %18 : vector<8x8xf32>
    %cst_18 = arith.constant dense<0xFF800000> : vector<8xf32>
    %40 = vector.multi_reduction <maximumf>, %39, %cst_18 [1] : vector<8x8xf32> to vector<8xf32>
    %41 = vector.shape_cast %40 : vector<8xf32> to vector<8x1xf32>
    %42 = vector.broadcast %41 : vector<8x1xf32> to vector<8x8xf32>
    %43 = arith.subf %39, %42 : vector<8x8xf32>
    %44 = math.exp %43 : vector<8x8xf32>
    %cst_19 = arith.constant dense<0.000000e+00> : vector<8xf32>
    %45 = vector.multi_reduction <add>, %44, %cst_19 [1] : vector<8x8xf32> to vector<8xf32>
    %46 = vector.shape_cast %45 : vector<8xf32> to vector<8x1xf32>
    %47 = tpu.reciprocal %46 {approx = true} : vector<8x1xf32> -> vector<8x1xf32>
    %48 = vector.broadcast %47 : vector<8x1xf32> to vector<8x8xf32>
    %49 = arith.mulf %44, %48 : vector<8x8xf32>
    %50 = arith.truncf %49 : vector<8x8xf32> to vector<8x8xbf16>
    %51 = vector.extract_strided_slice %5 {offsets = [0, 8], sizes = [8, 8], strides = [1, 1]} : vector<8x32xbf16> to vector<8x8xbf16>
    %cst_20 = arith.constant dense<0.000000e+00> : vector<8x8xf32>
    %52 = tpu.matmul %50, %51, %cst_20 {dimension_numbers = #tpu.dot_dimension_numbers<[1], [0], [0], [1], [0, 0, 1, 1], [], []>} : vector<8x8xbf16>, vector<8x8xbf16>, vector<8x8xf32> -> vector<8x8xf32>
    %53 = vector.extract_strided_slice %9 {offsets = [0, 16], sizes = [8, 8], strides = [1, 1]} : vector<8x32xbf16> to vector<8x8xbf16>
    %54 = vector.extract_strided_slice %3 {offsets = [0, 16], sizes = [8, 8], strides = [1, 1]} : vector<8x32xbf16> to vector<8x8xbf16>
    %cst_21 = arith.constant dense<0.000000e+00> : vector<8x8xf32>
    %55 = tpu.matmul %53, %54, %cst_21 {dimension_numbers = #tpu.dot_dimension_numbers<[1], [1], [0], [0], [0, 0, 1, 0], [], []>} : vector<8x8xbf16>, vector<8x8xbf16>, vector<8x8xf32> -> vector<8x8xf32>
    %56 = arith.addf %55, %18 : vector<8x8xf32>
    %cst_22 = arith.constant dense<0xFF800000> : vector<8xf32>
    %57 = vector.multi_reduction <maximumf>, %56, %cst_22 [1] : vector<8x8xf32> to vector<8xf32>
    %58 = vector.shape_cast %57 : vector<8xf32> to vector<8x1xf32>
    %59 = vector.broadcast %58 : vector<8x1xf32> to vector<8x8xf32>
    %60 = arith.subf %56, %59 : vector<8x8xf32>
    %61 = math.exp %60 : vector<8x8xf32>
    %cst_23 = arith.constant dense<0.000000e+00> : vector<8xf32>
    %62 = vector.multi_reduction <add>, %61, %cst_23 [1] : vector<8x8xf32> to vector<8xf32>
    %63 = vector.shape_cast %62 : vector<8xf32> to vector<8x1xf32>
    %64 = tpu.reciprocal %63 {approx = true} : vector<8x1xf32> -> vector<8x1xf32>
    %65 = vector.broadcast %64 : vector<8x1xf32> to vector<8x8xf32>
    %66 = arith.mulf %61, %65 : vector<8x8xf32>
    %67 = arith.truncf %66 : vector<8x8xf32> to vector<8x8xbf16>
    %68 = vector.extract_strided_slice %5 {offsets = [0, 16], sizes = [8, 8], strides = [1, 1]} : vector<8x32xbf16> to vector<8x8xbf16>
    %cst_24 = arith.constant dense<0.000000e+00> : vector<8x8xf32>
    %69 = tpu.matmul %67, %68, %cst_24 {dimension_numbers = #tpu.dot_dimension_numbers<[1], [0], [0], [1], [0, 0, 1, 1], [], []>} : vector<8x8xbf16>, vector<8x8xbf16>, vector<8x8xf32> -> vector<8x8xf32>
    %70 = vector.extract_strided_slice %9 {offsets = [0, 24], sizes = [8, 8], strides = [1, 1]} : vector<8x32xbf16> to vector<8x8xbf16>
    %71 = vector.extract_strided_slice %3 {offsets = [0, 24], sizes = [8, 8], strides = [1, 1]} : vector<8x32xbf16> to vector<8x8xbf16>
    %cst_25 = arith.constant dense<0.000000e+00> : vector<8x8xf32>
    %72 = tpu.matmul %70, %71, %cst_25 {dimension_numbers = #tpu.dot_dimension_numbers<[1], [1], [0], [0], [0, 0, 1, 0], [], []>} : vector<8x8xbf16>, vector<8x8xbf16>, vector<8x8xf32> -> vector<8x8xf32>
    %73 = arith.addf %72, %18 : vector<8x8xf32>
    %cst_26 = arith.constant dense<0xFF800000> : vector<8xf32>
    %74 = vector.multi_reduction <maximumf>, %73, %cst_26 [1] : vector<8x8xf32> to vector<8xf32>
    %75 = vector.shape_cast %74 : vector<8xf32> to vector<8x1xf32>
    %76 = vector.broadcast %75 : vector<8x1xf32> to vector<8x8xf32>
    %77 = arith.subf %73, %76 : vector<8x8xf32>
    %78 = math.exp %77 : vector<8x8xf32>
    %cst_27 = arith.constant dense<0.000000e+00> : vector<8xf32>
    %79 = vector.multi_reduction <add>, %78, %cst_27 [1] : vector<8x8xf32> to vector<8xf32>
    %80 = vector.shape_cast %79 : vector<8xf32> to vector<8x1xf32>
    %81 = tpu.reciprocal %80 {approx = true} : vector<8x1xf32> -> vector<8x1xf32>
    %82 = vector.broadcast %81 : vector<8x1xf32> to vector<8x8xf32>
    %83 = arith.mulf %78, %82 : vector<8x8xf32>
    %84 = arith.truncf %83 : vector<8x8xf32> to vector<8x8xbf16>
    %85 = vector.extract_strided_slice %5 {offsets = [0, 24], sizes = [8, 8], strides = [1, 1]} : vector<8x32xbf16> to vector<8x8xbf16>
    %cst_28 = arith.constant dense<0.000000e+00> : vector<8x8xf32>
    %86 = tpu.matmul %84, %85, %cst_28 {dimension_numbers = #tpu.dot_dimension_numbers<[1], [0], [0], [1], [0, 0, 1, 1], [], []>} : vector<8x8xbf16>, vector<8x8xbf16>, vector<8x8xf32> -> vector<8x8xf32>
    %87 = tpu.concatenate %35, %52, %69, %86 in 1 : vector<8x8xf32>, vector<8x8xf32>, vector<8x8xf32>, vector<8x8xf32> -> vector<8x32xf32>
    %88 = arith.truncf %87 : vector<8x32xf32> to vector<8x32xbf16>
    %c0_29 = arith.constant 0 : index
    %c0_30 = arith.constant 0 : index
    %c0_31 = arith.constant 0 : index
    %89 = vector.load %arg5[%c0_29, %c0_30, %c0_31] : memref<1x8x32xbf16, #tpu.memory_space<vmem>>, vector<1x8x32xbf16>
    %90 = vector.shape_cast %89 : vector<1x8x32xbf16> to vector<8x32xbf16>
    %91 = vector.shape_cast %88 : vector<8x32xbf16> to vector<1x8x32xbf16>
    tpu.vector_store %arg5[%c0_29, %c0_30, %c0_31], %91 {strides = array<i32>} : memref<1x8x32xbf16, #tpu.memory_space<vmem>>, vector<1x8x32xbf16>,
    return
  }
  func.func @transform_0(%arg0: i32) -> (i32, i32, i32) {
    %c0_i32 = arith.constant 0 : i32
    %c0_i32_0 = arith.constant 0 : i32
    %c0_i32_1 = arith.constant 0 : i32
    return %arg0, %c0_i32, %c0_i32_0 : i32, i32, i32
  }
  func.func @transform_1(%arg0: i32) -> (i32, i32, i32) {
    %c0_i32 = arith.constant 0 : i32
    %c0_i32_0 = arith.constant 0 : i32
    %c0_i32_1 = arith.constant 0 : i32
    return %arg0, %c0_i32, %c0_i32_0 : i32, i32, i32
  }
  func.func @transform_2(%arg0: i32) -> (i32, i32, i32) {
    %c0_i32 = arith.constant 0 : i32
    %c0_i32_0 = arith.constant 0 : i32
    %c0_i32_1 = arith.constant 0 : i32
    return %arg0, %c0_i32, %c0_i32_0 : i32, i32, i32
  }
  func.func @transform_3(%arg0: i32) -> (i32, i32, i32) {
    %c0_i32 = arith.constant 0 : i32
    %c0_i32_0 = arith.constant 0 : i32
    %c0_i32_1 = arith.constant 0 : i32
    return %arg0, %c0_i32, %c0_i32_0 : i32, i32, i32
  }
  func.func @transform_4(%arg0: i32) -> (i32, i32, i32) {
    %c0_i32 = arith.constant 0 : i32
    %c0_i32_0 = arith.constant 0 : i32
    %c0_i32_1 = arith.constant 0 : i32
    return %arg0, %c0_i32, %c0_i32_0 : i32, i32, i32
  }
}

module attributes {stable_mosaic.version = 11 : i64} {
  func.func @_add_ln_kernel(%arg0: i32, %arg1: memref<16x32xbf16, #tpu.memory_space<vmem>>, %arg2: memref<16x32xbf16, #tpu.memory_space<vmem>>, %arg3: memref<1x32xbf16, #tpu.memory_space<vmem>>, %arg4: memref<1x32xbf16, #tpu.memory_space<vmem>>, %arg5: memref<16x32xbf16, #tpu.memory_space<vmem>>) attributes {dimension_semantics = [#tpu.dimension_semantics<parallel>], iteration_bounds = array<i64: 1>, scalar_prefetch = 0 : i64, scratch_operands = 0 : i64, tpu.core_type = #tpu.core_type<tc>, window_params = [{transform_indices = @transform_0, window_bounds = array<i64: 16, 32>}, {transform_indices = @transform_1, window_bounds = array<i64: 16, 32>}, {pipeline_mode = #tpu.pipeline_mode<synchronous>, transform_indices = @transform_2, window_bounds = array<i64: 1, 32>}, {pipeline_mode = #tpu.pipeline_mode<synchronous>, transform_indices = @transform_3, window_bounds = array<i64: 1, 32>}, {transform_indices = @transform_4, window_bounds = array<i64: 16, 32>}]} {
    %c0 = arith.constant 0 : index
    %c0_0 = arith.constant 0 : index
    %0 = vector.load %arg1[%c0, %c0_0] : memref<16x32xbf16, #tpu.memory_space<vmem>>, vector<16x32xbf16>
    %1 = arith.extf %0 : vector<16x32xbf16> to vector<16x32xf32>
    %c0_1 = arith.constant 0 : index
    %c0_2 = arith.constant 0 : index
    %2 = vector.load %arg2[%c0_1, %c0_2] : memref<16x32xbf16, #tpu.memory_space<vmem>>, vector<16x32xbf16>
    %3 = arith.extf %2 : vector<16x32xbf16> to vector<16x32xf32>
    %4 = arith.addf %1, %3 : vector<16x32xf32>
    %cst = arith.constant dense<0.000000e+00> : vector<16xf32>
    %5 = vector.multi_reduction <add>, %4, %cst [1] : vector<16x32xf32> to vector<16xf32>
    %6 = vector.shape_cast %5 : vector<16xf32> to vector<16x1xf32>
    %cst_3 = arith.constant 3.200000e+01 : f32
    %7 = vector.broadcast %cst_3 : f32 to vector<16x1xf32>
    %8 = arith.divf %6, %7 : vector<16x1xf32>
    %9 = vector.broadcast %8 : vector<16x1xf32> to vector<16x32xf32>
    %10 = arith.subf %4, %9 : vector<16x32xf32>
    %11 = arith.mulf %10, %10 : vector<16x32xf32>
    %cst_4 = arith.constant dense<0.000000e+00> : vector<16xf32>
    %12 = vector.multi_reduction <add>, %11, %cst_4 [1] : vector<16x32xf32> to vector<16xf32>
    %13 = vector.shape_cast %12 : vector<16xf32> to vector<16x1xf32>
    %cst_5 = arith.constant 3.200000e+01 : f32
    %14 = vector.broadcast %cst_5 : f32 to vector<16x1xf32>
    %15 = arith.divf %13, %14 : vector<16x1xf32>
    %16 = vector.broadcast %8 : vector<16x1xf32> to vector<16x32xf32>
    %17 = arith.subf %4, %16 : vector<16x32xf32>
    %cst_6 = arith.constant 9.99999974E-6 : f32
    %18 = vector.broadcast %cst_6 : f32 to vector<16x1xf32>
    %19 = arith.addf %15, %18 : vector<16x1xf32>
    %20 = math.rsqrt %19 : vector<16x1xf32>
    %21 = vector.broadcast %20 : vector<16x1xf32> to vector<16x32xf32>
    %22 = arith.mulf %17, %21 : vector<16x32xf32>
    %c0_7 = arith.constant 0 : index
    %c0_8 = arith.constant 0 : index
    %23 = vector.load %arg3[%c0_7, %c0_8] : memref<1x32xbf16, #tpu.memory_space<vmem>>, vector<1x32xbf16>
    %24 = arith.extf %23 : vector<1x32xbf16> to vector<1x32xf32>
    %25 = vector.broadcast %24 : vector<1x32xf32> to vector<16x32xf32>
    %26 = arith.mulf %22, %25 : vector<16x32xf32>
    %c0_9 = arith.constant 0 : index
    %c0_10 = arith.constant 0 : index
    %27 = vector.load %arg4[%c0_9, %c0_10] : memref<1x32xbf16, #tpu.memory_space<vmem>>, vector<1x32xbf16>
    %28 = arith.extf %27 : vector<1x32xbf16> to vector<1x32xf32>
    %29 = vector.broadcast %28 : vector<1x32xf32> to vector<16x32xf32>
    %30 = arith.addf %26, %29 : vector<16x32xf32>
    %31 = arith.truncf %30 : vector<16x32xf32> to vector<16x32xbf16>
    %c0_11 = arith.constant 0 : index
    %c0_12 = arith.constant 0 : index
    %32 = vector.load %arg5[%c0_11, %c0_12] : memref<16x32xbf16, #tpu.memory_space<vmem>>, vector<16x32xbf16>
    tpu.vector_store %arg5[%c0_11, %c0_12], %31 {strides = array<i32>} : memref<16x32xbf16, #tpu.memory_space<vmem>>, vector<16x32xbf16>,
    return
  }
  func.func @transform_0(%arg0: i32) -> (i32, i32) {
    %c0_i32 = arith.constant 0 : i32
    %c0_i32_0 = arith.constant 0 : i32
    return %arg0, %c0_i32 : i32, i32
  }
  func.func @transform_1(%arg0: i32) -> (i32, i32) {
    %c0_i32 = arith.constant 0 : i32
    %c0_i32_0 = arith.constant 0 : i32
    return %arg0, %c0_i32 : i32, i32
  }
  func.func @transform_2(%arg0: i32) -> (i32, i32) {
    %c0_i32 = arith.constant 0 : i32
    %c0_i32_0 = arith.constant 0 : i32
    %c0_i32_1 = arith.constant 0 : i32
    return %c0_i32, %c0_i32_0 : i32, i32
  }
  func.func @transform_3(%arg0: i32) -> (i32, i32) {
    %c0_i32 = arith.constant 0 : i32
    %c0_i32_0 = arith.constant 0 : i32
    %c0_i32_1 = arith.constant 0 : i32
    return %c0_i32, %c0_i32_0 : i32, i32
  }
  func.func @transform_4(%arg0: i32) -> (i32, i32) {
    %c0_i32 = arith.constant 0 : i32
    %c0_i32_0 = arith.constant 0 : i32
    return %arg0, %c0_i32 : i32, i32
  }
}

module attributes {stable_mosaic.version = 11 : i64} {
  func.func @_matmul_single_k_kernel(%arg0: i32, %arg1: i32, %arg2: memref<16x128xbf16, #tpu.memory_space<vmem>>, %arg3: memref<128x32xbf16, #tpu.memory_space<vmem>>, %arg4: memref<1x32xbf16, #tpu.memory_space<vmem>>, %arg5: memref<16x32xbf16, #tpu.memory_space<vmem>>) attributes {dimension_semantics = [#tpu.dimension_semantics<parallel>, #tpu.dimension_semantics<parallel>], iteration_bounds = array<i64: 1, 1>, scalar_prefetch = 0 : i64, scratch_operands = 0 : i64, tpu.core_type = #tpu.core_type<tc>, window_params = [{transform_indices = @transform_0, window_bounds = array<i64: 16, 128>}, {transform_indices = @transform_1, window_bounds = array<i64: 128, 32>}, {transform_indices = @transform_2, window_bounds = array<i64: 1, 32>}, {transform_indices = @transform_3, window_bounds = array<i64: 16, 32>}]} {
    %c0 = arith.constant 0 : index
    %c0_0 = arith.constant 0 : index
    %0 = vector.load %arg2[%c0, %c0_0] : memref<16x128xbf16, #tpu.memory_space<vmem>>, vector<16x128xbf16>
    %c0_1 = arith.constant 0 : index
    %c0_2 = arith.constant 0 : index
    %1 = vector.load %arg3[%c0_1, %c0_2] : memref<128x32xbf16, #tpu.memory_space<vmem>>, vector<128x32xbf16>
    %cst = arith.constant dense<0.000000e+00> : vector<16x32xf32>
    %2 = tpu.matmul %0, %1, %cst {dimension_numbers = #tpu.dot_dimension_numbers<[1], [0], [0], [1], [0, 0, 1, 1], [], []>} : vector<16x128xbf16>, vector<128x32xbf16>, vector<16x32xf32> -> vector<16x32xf32>
    %c0_3 = arith.constant 0 : index
    %c0_4 = arith.constant 0 : index
    %3 = vector.load %arg4[%c0_3, %c0_4] : memref<1x32xbf16, #tpu.memory_space<vmem>>, vector<1x32xbf16>
    %4 = arith.extf %3 : vector<1x32xbf16> to vector<1x32xf32>
    %5 = vector.broadcast %4 : vector<1x32xf32> to vector<16x32xf32>
    %6 = arith.addf %2, %5 : vector<16x32xf32>
    %7 = arith.truncf %6 : vector<16x32xf32> to vector<16x32xbf16>
    %c0_5 = arith.constant 0 : index
    %c0_6 = arith.constant 0 : index
    %8 = vector.load %arg5[%c0_5, %c0_6] : memref<16x32xbf16, #tpu.memory_space<vmem>>, vector<16x32xbf16>
    tpu.vector_store %arg5[%c0_5, %c0_6], %7 {strides = array<i32>} : memref<16x32xbf16, #tpu.memory_space<vmem>>, vector<16x32xbf16>,
    return
  }
  func.func @transform_0(%arg0: i32, %arg1: i32) -> (i32, i32) {
    %c0_i32 = arith.constant 0 : i32
    %c0_i32_0 = arith.constant 0 : i32
    return %arg0, %c0_i32 : i32, i32
  }
  func.func @transform_1(%arg0: i32, %arg1: i32) -> (i32, i32) {
    %c0_i32 = arith.constant 0 : i32
    %c0_i32_0 = arith.constant 0 : i32
    return %c0_i32, %arg1 : i32, i32
  }
  func.func @transform_2(%arg0: i32, %arg1: i32) -> (i32, i32) {
    %c0_i32 = arith.constant 0 : i32
    %c0_i32_0 = arith.constant 0 : i32
    return %c0_i32, %arg1 : i32, i32
  }
  func.func @transform_3(%arg0: i32, %arg1: i32) -> (i32, i32) {
    %c0_i32 = arith.constant 0 : i32
    return %arg0, %arg1 : i32, i32
  }
}

module attributes {stable_mosaic.version = 11 : i64} {
  func.func @_matmul_single_k_kernel(%arg0: i32, %arg1: i32, %arg2: memref<16x32xbf16, #tpu.memory_space<vmem>>, %arg3: memref<32x64xbf16, #tpu.memory_space<vmem>>, %arg4: memref<1x64xbf16, #tpu.memory_space<vmem>>, %arg5: memref<16x64xbf16, #tpu.memory_space<vmem>>) attributes {dimension_semantics = [#tpu.dimension_semantics<parallel>, #tpu.dimension_semantics<parallel>], iteration_bounds = array<i64: 1, 1>, scalar_prefetch = 0 : i64, scratch_operands = 0 : i64, tpu.core_type = #tpu.core_type<tc>, window_params = [{transform_indices = @transform_0, window_bounds = array<i64: 16, 32>}, {transform_indices = @transform_1, window_bounds = array<i64: 32, 64>}, {transform_indices = @transform_2, window_bounds = array<i64: 1, 64>}, {transform_indices = @transform_3, window_bounds = array<i64: 16, 64>}]} {
    %c0 = arith.constant 0 : index
    %c0_0 = arith.constant 0 : index
    %0 = vector.load %arg2[%c0, %c0_0] : memref<16x32xbf16, #tpu.memory_space<vmem>>, vector<16x32xbf16>
    %c0_1 = arith.constant 0 : index
    %c0_2 = arith.constant 0 : index
    %1 = vector.load %arg3[%c0_1, %c0_2] : memref<32x64xbf16, #tpu.memory_space<vmem>>, vector<32x64xbf16>
    %cst = arith.constant dense<0.000000e+00> : vector<16x64xf32>
    %2 = tpu.matmul %0, %1, %cst {dimension_numbers = #tpu.dot_dimension_numbers<[1], [0], [0], [1], [0, 0, 1, 1], [], []>} : vector<16x32xbf16>, vector<32x64xbf16>, vector<16x64xf32> -> vector<16x64xf32>
    %c0_3 = arith.constant 0 : index
    %c0_4 = arith.constant 0 : index
    %3 = vector.load %arg4[%c0_3, %c0_4] : memref<1x64xbf16, #tpu.memory_space<vmem>>, vector<1x64xbf16>
    %4 = arith.extf %3 : vector<1x64xbf16> to vector<1x64xf32>
    %5 = vector.broadcast %4 : vector<1x64xf32> to vector<16x64xf32>
    %6 = arith.addf %2, %5 : vector<16x64xf32>
    %7 = arith.truncf %6 : vector<16x64xf32> to vector<16x64xbf16>
    %c0_5 = arith.constant 0 : index
    %c0_6 = arith.constant 0 : index
    %8 = vector.load %arg5[%c0_5, %c0_6] : memref<16x64xbf16, #tpu.memory_space<vmem>>, vector<16x64xbf16>
    tpu.vector_store %arg5[%c0_5, %c0_6], %7 {strides = array<i32>} : memref<16x64xbf16, #tpu.memory_space<vmem>>, vector<16x64xbf16>,
    return
  }
  func.func @transform_0(%arg0: i32, %arg1: i32) -> (i32, i32) {
    %c0_i32 = arith.constant 0 : i32
    %c0_i32_0 = arith.constant 0 : i32
    return %arg0, %c0_i32 : i32, i32
  }
  func.func @transform_1(%arg0: i32, %arg1: i32) -> (i32, i32) {
    %c0_i32 = arith.constant 0 : i32
    %c0_i32_0 = arith.constant 0 : i32
    return %c0_i32, %arg1 : i32, i32
  }
  func.func @transform_2(%arg0: i32, %arg1: i32) -> (i32, i32) {
    %c0_i32 = arith.constant 0 : i32
    %c0_i32_0 = arith.constant 0 : i32
    return %c0_i32, %arg1 : i32, i32
  }
  func.func @transform_3(%arg0: i32, %arg1: i32) -> (i32, i32) {
    %c0_i32 = arith.constant 0 : i32
    return %arg0, %arg1 : i32, i32
  }
}

module attributes {stable_mosaic.version = 11 : i64} {
  func.func @_matmul_single_k_kernel(%arg0: i32, %arg1: i32, %arg2: memref<16x32xbf16, #tpu.memory_space<vmem>>, %arg3: memref<32x128xbf16, #tpu.memory_space<vmem>>, %arg4: memref<1x128xbf16, #tpu.memory_space<vmem>>, %arg5: memref<16x128xbf16, #tpu.memory_space<vmem>>) attributes {dimension_semantics = [#tpu.dimension_semantics<parallel>, #tpu.dimension_semantics<parallel>], iteration_bounds = array<i64: 1, 1>, scalar_prefetch = 0 : i64, scratch_operands = 0 : i64, tpu.core_type = #tpu.core_type<tc>, window_params = [{transform_indices = @transform_0, window_bounds = array<i64: 16, 32>}, {transform_indices = @transform_1, window_bounds = array<i64: 32, 128>}, {transform_indices = @transform_2, window_bounds = array<i64: 1, 128>}, {transform_indices = @transform_3, window_bounds = array<i64: 16, 128>}]} {
    %c0 = arith.constant 0 : index
    %c0_0 = arith.constant 0 : index
    %0 = vector.load %arg2[%c0, %c0_0] : memref<16x32xbf16, #tpu.memory_space<vmem>>, vector<16x32xbf16>
    %c0_1 = arith.constant 0 : index
    %c0_2 = arith.constant 0 : index
    %1 = vector.load %arg3[%c0_1, %c0_2] : memref<32x128xbf16, #tpu.memory_space<vmem>>, vector<32x128xbf16>
    %cst = arith.constant dense<0.000000e+00> : vector<16x128xf32>
    %2 = tpu.matmul %0, %1, %cst {dimension_numbers = #tpu.dot_dimension_numbers<[1], [0], [0], [1], [0, 0, 1, 1], [], []>} : vector<16x32xbf16>, vector<32x128xbf16>, vector<16x128xf32> -> vector<16x128xf32>
    %c0_3 = arith.constant 0 : index
    %c0_4 = arith.constant 0 : index
    %3 = vector.load %arg4[%c0_3, %c0_4] : memref<1x128xbf16, #tpu.memory_space<vmem>>, vector<1x128xbf16>
    %4 = arith.extf %3 : vector<1x128xbf16> to vector<1x128xf32>
    %5 = vector.broadcast %4 : vector<1x128xf32> to vector<16x128xf32>
    %6 = arith.addf %2, %5 : vector<16x128xf32>
    %cst_5 = arith.constant 0.000000e+00 : f32
    %7 = vector.broadcast %cst_5 : f32 to vector<16x128xf32>
    %8 = arith.maximumf %6, %7 : vector<16x128xf32>
    %9 = arith.truncf %8 : vector<16x128xf32> to vector<16x128xbf16>
    %c0_6 = arith.constant 0 : index
    %c0_7 = arith.constant 0 : index
    %10 = vector.load %arg5[%c0_6, %c0_7] : memref<16x128xbf16, #tpu.memory_space<vmem>>, vector<16x128xbf16>
    tpu.vector_store %arg5[%c0_6, %c0_7], %9 {strides = array<i32>} : memref<16x128xbf16, #tpu.memory_space<vmem>>, vector<16x128xbf16>,
    return
  }
  func.func @transform_0(%arg0: i32, %arg1: i32) -> (i32, i32) {
    %c0_i32 = arith.constant 0 : i32
    %c0_i32_0 = arith.constant 0 : i32
    return %arg0, %c0_i32 : i32, i32
  }
  func.func @transform_1(%arg0: i32, %arg1: i32) -> (i32, i32) {
    %c0_i32 = arith.constant 0 : i32
    %c0_i32_0 = arith.constant 0 : i32
    return %c0_i32, %arg1 : i32, i32
  }
  func.func @transform_2(%arg0: i32, %arg1: i32) -> (i32, i32) {
    %c0_i32 = arith.constant 0 : i32
    %c0_i32_0 = arith.constant 0 : i32
    return %c0_i32, %arg1 : i32, i32
  }
  func.func @transform_3(%arg0: i32, %arg1: i32) -> (i32, i32) {
    %c0_i32 = arith.constant 0 : i32
    return %arg0, %arg1 : i32, i32
  }
}

module attributes {stable_mosaic.version = 11 : i64} {
  func.func @_attention_kernel(%arg0: i32, %arg1: memref<1x8x32xbf16, #tpu.memory_space<vmem>>, %arg2: memref<1x8x32xbf16, #tpu.memory_space<vmem>>, %arg3: memref<1x8x32xbf16, #tpu.memory_space<vmem>>, %arg4: memref<1x1x8xi32, #tpu.memory_space<vmem>>, %arg5: memref<1x8x32xbf16, #tpu.memory_space<vmem>>) attributes {dimension_semantics = [#tpu.dimension_semantics<parallel>], iteration_bounds = array<i64: 2>, scalar_prefetch = 0 : i64, scratch_operands = 0 : i64, tpu.core_type = #tpu.core_type<tc>, window_params = [{transform_indices = @transform_0, window_bounds = array<i64: 1, 8, 32>}, {transform_indices = @transform_1, window_bounds = array<i64: 1, 8, 32>}, {transform_indices = @transform_2, window_bounds = array<i64: 1, 8, 32>}, {transform_indices = @transform_3, window_bounds = array<i64: 1, 1, 8>}, {transform_indices = @transform_4, window_bounds = array<i64: 1, 8, 32>}]} {
    %c0 = arith.constant 0 : index
    %c0_0 = arith.constant 0 : index
    %c0_1 = arith.constant 0 : index
    %0 = vector.load %arg1[%c0, %c0_0, %c0_1] : memref<1x8x32xbf16, #tpu.memory_space<vmem>>, vector<1x8x32xbf16>
    %1 = vector.shape_cast %0 : vector<1x8x32xbf16> to vector<8x32xbf16>
    %c0_2 = arith.constant 0 : index
    %c0_3 = arith.constant 0 : index
    %c0_4 = arith.constant 0 : index
    %2 = vector.load %arg2[%c0_2, %c0_3, %c0_4] : memref<1x8x32xbf16, #tpu.memory_space<vmem>>, vector<1x8x32xbf16>
    %3 = vector.shape_cast %2 : vector<1x8x32xbf16> to vector<8x32xbf16>
    %c0_5 = arith.constant 0 : index
    %c0_6 = arith.constant 0 : index
    %c0_7 = arith.constant 0 : index
    %4 = vector.load %arg3[%c0_5, %c0_6, %c0_7] : memref<1x8x32xbf16, #tpu.memory_space<vmem>>, vector<1x8x32xbf16>
    %5 = vector.shape_cast %4 : vector<1x8x32xbf16> to vector<8x32xbf16>
    %6 = arith.extf %1 : vector<8x32xbf16> to vector<8x32xf32>
    %cst = arith.constant 0.353553385 : f32
    %7 = vector.broadcast %cst : f32 to vector<8x32xf32>
    %8 = arith.mulf %6, %7 : vector<8x32xf32>
    %9 = arith.truncf %8 : vector<8x32xf32> to vector<8x32xbf16>
    %c0_8 = arith.constant 0 : index
    %c0_9 = arith.constant 0 : index
    %c0_10 = arith.constant 0 : index
    %10 = vector.load %arg4[%c0_8, %c0_9, %c0_10] : memref<1x1x8xi32, #tpu.memory_space<vmem>>, vector<1x1x8xi32>
    %11 = vector.shape_cast %10 : vector<1x1x8xi32> to vector<1x8xi32>
    %c0_i32 = arith.constant 0 : i32
    %12 = vector.broadcast %c0_i32 : i32 to vector<1x8xi32>
    %13 = arith.cmpi sgt, %11, %12 : vector<1x8xi32>
    %14 = vector.shape_cast %13 : vector<1x8xi1> to vector<1x8xi1>
    %15 = vector.broadcast %14 : vector<1x8xi1> to vector<8x8xi1>
    %16 = tpu.iota {dimensions = array<i32: 0>} : vector<8x8xi32>
    %17 = tpu.iota {dimensions = array<i32: 1>} : vector<8x8xi32>
    %18 = arith.cmpi sle, %17, %16 : vector<8x8xi32>
    %19 = arith.andi %15, %18 : vector<8x8xi1>
    %cst_11 = arith.constant 0.000000e+00 : f32
    %cst_12 = arith.constant -1.000000e+09 : f32
    %20 = vector.broadcast %cst_11 : f32 to vector<8x8xf32>
    %21 = vector.broadcast %cst_12 : f32 to vector<8x8xf32>
    %22 = arith.select %19, %20, %21 : vector<8x8xi1>, vector<8x8xf32>
    %23 = vector.extract_strided_slice %9 {offsets = [0, 0], sizes = [8, 8], strides = [1, 1]} : vector<8x32xbf16> to vector<8x8xbf16>
    %24 = vector.extract_strided_slice %3 {offsets = [0, 0], sizes = [8, 8], strides = [1, 1]} : vector<8x32xbf16> to vector<8x8xbf16>
    %cst_13 = arith.constant dense<0.000000e+00> : vector<8x8xf32>
    %25 = tpu.matmul %23, %24, %cst_13 {dimension_numbers = #tpu.dot_dimension_numbers<[1], [1], [0], [0], [0, 0, 1, 0], [], []>} : vector<8x8xbf16>, vector<8x8xbf16>, vector<8x8xf32> -> vector<8x8xf32>
    %26 = arith.addf %25, %22 : vector<8x8xf32>
    %cst_14 = arith.constant dense<0xFF800000> : vector<8xf32>
    %27 = vector.multi_reduction <maximumf>, %26, %cst_14 [1] : vector<8x8xf32> to vector<8xf32>
    %28 = vector.shape_cast %27 : vector<8xf32> to vector<8x1xf32>
    %29 = vector.broadcast %28 : vector<8x1xf32> to vector<8x8xf32>
    %30 = arith.subf %26, %29 : vector<8x8xf32>
    %31 = math.exp %30 : vector<8x8xf32>
    %cst_15 = arith.constant dense<0.000000e+00> : vector<8xf32>
    %32 = vector.multi_reduction <add>, %31, %cst_15 [1] : vector<8x8xf32> to vector<8xf32>
    %33 = vector.shape_cast %32 : vector<8xf32> to vector<8x1xf32>
    %34 = tpu.reciprocal %33 {approx = true} : vector<8x1xf32> -> vector<8x1xf32>
    %35 = vector.broadcast %34 : vector<8x1xf32> to vector<8x8xf32>
    %36 = arith.mulf %31, %35 : vector<8x8xf32>
    %37 = arith.truncf %36 : vector<8x8xf32> to vector<8x8xbf16>
    %38 = vector.extract_strided_slice %5 {offsets = [0, 0], sizes = [8, 8], strides = [1, 1]} : vector<8x32xbf16> to vector<8x8xbf16>
    %cst_16 = arith.constant dense<0.000000e+00> : vector<8x8xf32>
    %39 = tpu.matmul %37, %38, %cst_16 {dimension_numbers = #tpu.dot_dimension_numbers<[1], [0], [0], [1], [0, 0, 1, 1], [], []>} : vector<8x8xbf16>, vector<8x8xbf16>, vector<8x8xf32> -> vector<8x8xf32>
    %40 = vector.extract_strided_slice %9 {offsets = [0, 8], sizes = [8, 8], strides = [1, 1]} : vector<8x32xbf16> to vector<8x8xbf16>
    %41 = vector.extract_strided_slice %3 {offsets = [0, 8], sizes = [8, 8], strides = [1, 1]} : vector<8x32xbf16> to vector<8x8xbf16>
    %cst_17 = arith.constant dense<0.000000e+00> : vector<8x8xf32>
    %42 = tpu.matmul %40, %41, %cst_17 {dimension_numbers = #tpu.dot_dimension_numbers<[1], [1], [0], [0], [0, 0, 1, 0], [], []>} : vector<8x8xbf16>, vector<8x8xbf16>, vector<8x8xf32> -> vector<8x8xf32>
    %43 = arith.addf %42, %22 : vector<8x8xf32>
    %cst_18 = arith.constant dense<0xFF800000> : vector<8xf32>
    %44 = vector.multi_reduction <maximumf>, %43, %cst_18 [1] : vector<8x8xf32> to vector<8xf32>
    %45 = vector.shape_cast %44 : vector<8xf32> to vector<8x1xf32>
    %46 = vector.broadcast %45 : vector<8x1xf32> to vector<8x8xf32>
    %47 = arith.subf %43, %46 : vector<8x8xf32>
    %48 = math.exp %47 : vector<8x8xf32>
    %cst_19 = arith.constant dense<0.000000e+00> : vector<8xf32>
    %49 = vector.multi_reduction <add>, %48, %cst_19 [1] : vector<8x8xf32> to vector<8xf32>
    %50 = vector.shape_cast %49 : vector<8xf32> to vector<8x1xf32>
    %51 = tpu.reciprocal %50 {approx = true} : vector<8x1xf32> -> vector<8x1xf32>
    %52 = vector.broadcast %51 : vector<8x1xf32> to vector<8x8xf32>
    %53 = arith.mulf %48, %52 : vector<8x8xf32>
    %54 = arith.truncf %53 : vector<8x8xf32> to vector<8x8xbf16>
    %55 = vector.extract_strided_slice %5 {offsets = [0, 8], sizes = [8, 8], strides = [1, 1]} : vector<8x32xbf16> to vector<8x8xbf16>
    %cst_20 = arith.constant dense<0.000000e+00> : vector<8x8xf32>
    %56 = tpu.matmul %54, %55, %cst_20 {dimension_numbers = #tpu.dot_dimension_numbers<[1], [0], [0], [1], [0, 0, 1, 1], [], []>} : vector<8x8xbf16>, vector<8x8xbf16>, vector<8x8xf32> -> vector<8x8xf32>
    %57 = vector.extract_strided_slice %9 {offsets = [0, 16], sizes = [8, 8], strides = [1, 1]} : vector<8x32xbf16> to vector<8x8xbf16>
    %58 = vector.extract_strided_slice %3 {offsets = [0, 16], sizes = [8, 8], strides = [1, 1]} : vector<8x32xbf16> to vector<8x8xbf16>
    %cst_21 = arith.constant dense<0.000000e+00> : vector<8x8xf32>
    %59 = tpu.matmul %57, %58, %cst_21 {dimension_numbers = #tpu.dot_dimension_numbers<[1], [1], [0], [0], [0, 0, 1, 0], [], []>} : vector<8x8xbf16>, vector<8x8xbf16>, vector<8x8xf32> -> vector<8x8xf32>
    %60 = arith.addf %59, %22 : vector<8x8xf32>
    %cst_22 = arith.constant dense<0xFF800000> : vector<8xf32>
    %61 = vector.multi_reduction <maximumf>, %60, %cst_22 [1] : vector<8x8xf32> to vector<8xf32>
    %62 = vector.shape_cast %61 : vector<8xf32> to vector<8x1xf32>
    %63 = vector.broadcast %62 : vector<8x1xf32> to vector<8x8xf32>
    %64 = arith.subf %60, %63 : vector<8x8xf32>
    %65 = math.exp %64 : vector<8x8xf32>
    %cst_23 = arith.constant dense<0.000000e+00> : vector<8xf32>
    %66 = vector.multi_reduction <add>, %65, %cst_23 [1] : vector<8x8xf32> to vector<8xf32>
    %67 = vector.shape_cast %66 : vector<8xf32> to vector<8x1xf32>
    %68 = tpu.reciprocal %67 {approx = true} : vector<8x1xf32> -> vector<8x1xf32>
    %69 = vector.broadcast %68 : vector<8x1xf32> to vector<8x8xf32>
    %70 = arith.mulf %65, %69 : vector<8x8xf32>
    %71 = arith.truncf %70 : vector<8x8xf32> to vector<8x8xbf16>
    %72 = vector.extract_strided_slice %5 {offsets = [0, 16], sizes = [8, 8], strides = [1, 1]} : vector<8x32xbf16> to vector<8x8xbf16>
    %cst_24 = arith.constant dense<0.000000e+00> : vector<8x8xf32>
    %73 = tpu.matmul %71, %72, %cst_24 {dimension_numbers = #tpu.dot_dimension_numbers<[1], [0], [0], [1], [0, 0, 1, 1], [], []>} : vector<8x8xbf16>, vector<8x8xbf16>, vector<8x8xf32> -> vector<8x8xf32>
    %74 = vector.extract_strided_slice %9 {offsets = [0, 24], sizes = [8, 8], strides = [1, 1]} : vector<8x32xbf16> to vector<8x8xbf16>
    %75 = vector.extract_strided_slice %3 {offsets = [0, 24], sizes = [8, 8], strides = [1, 1]} : vector<8x32xbf16> to vector<8x8xbf16>
    %cst_25 = arith.constant dense<0.000000e+00> : vector<8x8xf32>
    %76 = tpu.matmul %74, %75, %cst_25 {dimension_numbers = #tpu.dot_dimension_numbers<[1], [1], [0], [0], [0, 0, 1, 0], [], []>} : vector<8x8xbf16>, vector<8x8xbf16>, vector<8x8xf32> -> vector<8x8xf32>
    %77 = arith.addf %76, %22 : vector<8x8xf32>
    %cst_26 = arith.constant dense<0xFF800000> : vector<8xf32>
    %78 = vector.multi_reduction <maximumf>, %77, %cst_26 [1] : vector<8x8xf32> to vector<8xf32>
    %79 = vector.shape_cast %78 : vector<8xf32> to vector<8x1xf32>
    %80 = vector.broadcast %79 : vector<8x1xf32> to vector<8x8xf32>
    %81 = arith.subf %77, %80 : vector<8x8xf32>
    %82 = math.exp %81 : vector<8x8xf32>
    %cst_27 = arith.constant dense<0.000000e+00> : vector<8xf32>
    %83 = vector.multi_reduction <add>, %82, %cst_27 [1] : vector<8x8xf32> to vector<8xf32>
    %84 = vector.shape_cast %83 : vector<8xf32> to vector<8x1xf32>
    %85 = tpu.reciprocal %84 {approx = true} : vector<8x1xf32> -> vector<8x1xf32>
    %86 = vector.broadcast %85 : vector<8x1xf32> to vector<8x8xf32>
    %87 = arith.mulf %82, %86 : vector<8x8xf32>
    %88 = arith.truncf %87 : vector<8x8xf32> to vector<8x8xbf16>
    %89 = vector.extract_strided_slice %5 {offsets = [0, 24], sizes = [8, 8], strides = [1, 1]} : vector<8x32xbf16> to vector<8x8xbf16>
    %cst_28 = arith.constant dense<0.000000e+00> : vector<8x8xf32>
    %90 = tpu.matmul %88, %89, %cst_28 {dimension_numbers = #tpu.dot_dimension_numbers<[1], [0], [0], [1], [0, 0, 1, 1], [], []>} : vector<8x8xbf16>, vector<8x8xbf16>, vector<8x8xf32> -> vector<8x8xf32>
    %91 = tpu.concatenate %39, %56, %73, %90 in 1 : vector<8x8xf32>, vector<8x8xf32>, vector<8x8xf32>, vector<8x8xf32> -> vector<8x32xf32>
    %92 = arith.truncf %91 : vector<8x32xf32> to vector<8x32xbf16>
    %c0_29 = arith.constant 0 : index
    %c0_30 = arith.constant 0 : index
    %c0_31 = arith.constant 0 : index
    %93 = vector.load %arg5[%c0_29, %c0_30, %c0_31] : memref<1x8x32xbf16, #tpu.memory_space<vmem>>, vector<1x8x32xbf16>
    %94 = vector.shape_cast %93 : vector<1x8x32xbf16> to vector<8x32xbf16>
    %95 = vector.shape_cast %92 : vector<8x32xbf16> to vector<1x8x32xbf16>
    tpu.vector_store %arg5[%c0_29, %c0_30, %c0_31], %95 {strides = array<i32>} : memref<1x8x32xbf16, #tpu.memory_space<vmem>>, vector<1x8x32xbf16>,
    return
  }
  func.func @transform_0(%arg0: i32) -> (i32, i32, i32) {
    %c0_i32 = arith.constant 0 : i32
    %c0_i32_0 = arith.constant 0 : i32
    %c0_i32_1 = arith.constant 0 : i32
    return %arg0, %c0_i32, %c0_i32_0 : i32, i32, i32
  }
  func.func @transform_1(%arg0: i32) -> (i32, i32, i32) {
    %c0_i32 = arith.constant 0 : i32
    %c0_i32_0 = arith.constant 0 : i32
    %c0_i32_1 = arith.constant 0 : i32
    return %arg0, %c0_i32, %c0_i32_0 : i32, i32, i32
  }
  func.func @transform_2(%arg0: i32) -> (i32, i32, i32) {
    %c0_i32 = arith.constant 0 : i32
    %c0_i32_0 = arith.constant 0 : i32
    %c0_i32_1 = arith.constant 0 : i32
    return %arg0, %c0_i32, %c0_i32_0 : i32, i32, i32
  }
  func.func @transform_3(%arg0: i32) -> (i32, i32, i32) {
    %c0_i32 = arith.constant 0 : i32
    %c0_i32_0 = arith.constant 0 : i32
    %c0_i32_1 = arith.constant 0 : i32
    return %arg0, %c0_i32, %c0_i32_0 : i32, i32, i32
  }
  func.func @transform_4(%arg0: i32) -> (i32, i32, i32) {
    %c0_i32 = arith.constant 0 : i32
    %c0_i32_0 = arith.constant 0 : i32
    %c0_i32_1 = arith.constant 0 : i32
    return %arg0, %c0_i32, %c0_i32_0 : i32, i32, i32
  }
}

module attributes {stable_mosaic.version = 11 : i64} {
  func.func @_matmul_single_k_kernel(%arg0: i32, %arg1: i32, %arg2: memref<2x32xbf16, #tpu.memory_space<vmem>>, %arg3: memref<32x4xbf16, #tpu.memory_space<vmem>>, %arg4: memref<1x4xbf16, #tpu.memory_space<vmem>>, %arg5: memref<2x4xf32, #tpu.memory_space<vmem>>) attributes {dimension_semantics = [#tpu.dimension_semantics<parallel>, #tpu.dimension_semantics<parallel>], iteration_bounds = array<i64: 1, 1>, scalar_prefetch = 0 : i64, scratch_operands = 0 : i64, tpu.core_type = #tpu.core_type<tc>, window_params = [{transform_indices = @transform_0, window_bounds = array<i64: 2, 32>}, {transform_indices = @transform_1, window_bounds = array<i64: 32, 4>}, {transform_indices = @transform_2, window_bounds = array<i64: 1, 4>}, {transform_indices = @transform_3, window_bounds = array<i64: 2, 4>}]} {
    %c0 = arith.constant 0 : index
    %c0_0 = arith.constant 0 : index
    %0 = vector.load %arg2[%c0, %c0_0] : memref<2x32xbf16, #tpu.memory_space<vmem>>, vector<2x32xbf16>
    %c0_1 = arith.constant 0 : index
    %c0_2 = arith.constant 0 : index
    %1 = vector.load %arg3[%c0_1, %c0_2] : memref<32x4xbf16, #tpu.memory_space<vmem>>, vector<32x4xbf16>
    %cst = arith.constant dense<0.000000e+00> : vector<2x4xf32>
    %2 = tpu.matmul %0, %1, %cst {dimension_numbers = #tpu.dot_dimension_numbers<[1], [0], [0], [1], [0, 0, 1, 1], [], []>} : vector<2x32xbf16>, vector<32x4xbf16>, vector<2x4xf32> -> vector<2x4xf32>
    %c0_3 = arith.constant 0 : index
    %c0_4 = arith.constant 0 : index
    %3 = vector.load %arg4[%c0_3, %c0_4] : memref<1x4xbf16, #tpu.memory_space<vmem>>, vector<1x4xbf16>
    %4 = arith.extf %3 : vector<1x4xbf16> to vector<1x4xf32>
    %5 = vector.broadcast %4 : vector<1x4xf32> to vector<2x4xf32>
    %6 = arith.addf %2, %5 : vector<2x4xf32>
    %cst_5 = arith.constant dense<0xFF800000> : vector<2xf32>
    %7 = vector.multi_reduction <maximumf>, %6, %cst_5 [1] : vector<2x4xf32> to vector<2xf32>
    %8 = vector.shape_cast %7 : vector<2xf32> to vector<2x1xf32>
    %9 = vector.broadcast %8 : vector<2x1xf32> to vector<2x4xf32>
    %10 = arith.subf %6, %9 : vector<2x4xf32>
    %11 = math.exp %10 : vector<2x4xf32>
    %cst_6 = arith.constant dense<0.000000e+00> : vector<2xf32>
    %12 = vector.multi_reduction <add>, %11, %cst_6 [1] : vector<2x4xf32> to vector<2xf32>
    %13 = vector.shape_cast %12 : vector<2xf32> to vector<2x1xf32>
    %14 = math.log %13 : vector<2x1xf32>
    %15 = vector.broadcast %14 : vector<2x1xf32> to vector<2x4xf32>
    %16 = arith.subf %10, %15 : vector<2x4xf32>
    %c0_7 = arith.constant 0 : index
    %c0_8 = arith.constant 0 : index
    %17 = vector.load %arg5[%c0_7, %c0_8] : memref<2x4xf32, #tpu.memory_space<vmem>>, vector<2x4xf32>
    tpu.vector_store %arg5[%c0_7, %c0_8], %16 {strides = array<i32>} : memref<2x4xf32, #tpu.memory_space<vmem>>, vector<2x4xf32>,
    return
  }
  func.func @transform_0(%arg0: i32, %arg1: i32) -> (i32, i32) {
    %c0_i32 = arith.constant 0 : i32
    %c0_i32_0 = arith.constant 0 : i32
    return %arg0, %c0_i32 : i32, i32
  }
  func.func @transform_1(%arg0: i32, %arg1: i32) -> (i32, i32) {
    %c0_i32 = arith.constant 0 : i32
    %c0_i32_0 = arith.constant 0 : i32
    return %c0_i32, %arg1 : i32, i32
  }
  func.func @transform_2(%arg0: i32, %arg1: i32) -> (i32, i32) {
    %c0_i32 = arith.constant 0 : i32
    %c0_i32_0 = arith.constant 0 : i32
    return %c0_i32, %arg1 : i32, i32
  }
  func.func @transform_3(%arg0: i32, %arg1: i32) -> (i32, i32) {
    %c0_i32 = arith.constant 0 : i32
    return %arg0, %arg1 : i32, i32
  }
}

module attributes {stable_mosaic.version = 11 : i64} {
  func.func @_matmul_single_k_kernel(%arg0: i32, %arg1: i32, %arg2: memref<16x32xbf16, #tpu.memory_space<vmem>>, %arg3: memref<32x64xbf16, #tpu.memory_space<vmem>>, %arg4: memref<1x64xbf16, #tpu.memory_space<vmem>>, %arg5: memref<16x64xf32, #tpu.memory_space<vmem>>) attributes {dimension_semantics = [#tpu.dimension_semantics<parallel>, #tpu.dimension_semantics<parallel>], iteration_bounds = array<i64: 1, 1>, scalar_prefetch = 0 : i64, scratch_operands = 0 : i64, tpu.core_type = #tpu.core_type<tc>, window_params = [{transform_indices = @transform_0, window_bounds = array<i64: 16, 32>}, {transform_indices = @transform_1, window_bounds = array<i64: 32, 64>}, {transform_indices = @transform_2, window_bounds = array<i64: 1, 64>}, {transform_indices = @transform_3, window_bounds = array<i64: 16, 64>}]} {
    %c0 = arith.constant 0 : index
    %c0_0 = arith.constant 0 : index
    %0 = vector.load %arg2[%c0, %c0_0] : memref<16x32xbf16, #tpu.memory_space<vmem>>, vector<16x32xbf16>
    %c0_1 = arith.constant 0 : index
    %c0_2 = arith.constant 0 : index
    %1 = vector.load %arg3[%c0_1, %c0_2] : memref<32x64xbf16, #tpu.memory_space<vmem>>, vector<32x64xbf16>
    %cst = arith.constant dense<0.000000e+00> : vector<16x64xf32>
    %2 = tpu.matmul %0, %1, %cst {dimension_numbers = #tpu.dot_dimension_numbers<[1], [0], [0], [1], [0, 0, 1, 1], [], []>} : vector<16x32xbf16>, vector<32x64xbf16>, vector<16x64xf32> -> vector<16x64xf32>
    %c0_3 = arith.constant 0 : index
    %c0_4 = arith.constant 0 : index
    %3 = vector.load %arg4[%c0_3, %c0_4] : memref<1x64xbf16, #tpu.memory_space<vmem>>, vector<1x64xbf16>
    %4 = arith.extf %3 : vector<1x64xbf16> to vector<1x64xf32>
    %5 = vector.broadcast %4 : vector<1x64xf32> to vector<16x64xf32>
    %6 = arith.addf %2, %5 : vector<16x64xf32>
    %cst_5 = arith.constant dense<0xFF800000> : vector<16xf32>
    %7 = vector.multi_reduction <maximumf>, %6, %cst_5 [1] : vector<16x64xf32> to vector<16xf32>
    %8 = vector.shape_cast %7 : vector<16xf32> to vector<16x1xf32>
    %9 = vector.broadcast %8 : vector<16x1xf32> to vector<16x64xf32>
    %10 = arith.subf %6, %9 : vector<16x64xf32>
    %11 = math.exp %10 : vector<16x64xf32>
    %cst_6 = arith.constant dense<0.000000e+00> : vector<16xf32>
    %12 = vector.multi_reduction <add>, %11, %cst_6 [1] : vector<16x64xf32> to vector<16xf32>
    %13 = vector.shape_cast %12 : vector<16xf32> to vector<16x1xf32>
    %14 = math.log %13 : vector<16x1xf32>
    %15 = vector.broadcast %14 : vector<16x1xf32> to vector<16x64xf32>
    %16 = arith.subf %10, %15 : vector<16x64xf32>
    %c0_7 = arith.constant 0 : index
    %c0_8 = arith.constant 0 : index
    %17 = vector.load %arg5[%c0_7, %c0_8] : memref<16x64xf32, #tpu.memory_space<vmem>>, vector<16x64xf32>
    tpu.vector_store %arg5[%c0_7, %c0_8], %16 {strides = array<i32>} : memref<16x64xf32, #tpu.memory_space<vmem>>, vector<16x64xf32>,
    return
  }
  func.func @transform_0(%arg0: i32, %arg1: i32) -> (i32, i32) {
    %c0_i32 = arith.constant 0 : i32
    %c0_i32_0 = arith.constant 0 : i32
    return %arg0, %c0_i32 : i32, i32
  }
  func.func @transform_1(%arg0: i32, %arg1: i32) -> (i32, i32) {
    %c0_i32 = arith.constant 0 : i32
    %c0_i32_0 = arith.constant 0 : i32
    return %c0_i32, %arg1 : i32, i32
  }
  func.func @transform_2(%arg0: i32, %arg1: i32) -> (i32, i32) {
    %c0_i32 = arith.constant 0 : i32
    %c0_i32_0 = arith.constant 0 : i32
    return %c0_i32, %arg1 : i32, i32
  }
  func.func @transform_3(%arg0: i32, %arg1: i32) -> (i32, i32) {
    %c0_i32 = arith.constant 0 : i32
    return %arg0, %arg1 : i32, i32
  }
}

</mosaic_0001>

<llo_original>
// kernel: bart_forward_dense.40
$region0: #{bart_forward_dense.40}
  #allocation0 [shape = 'u32[]', space=smem, size = 0x4, offset = 0x4, fixed_abs, tag = 'smem constant byte address 0x4 - core index']
  #allocation1 [shape = 'u32[144,128]{1,0:T(1,128)}', space=vmem, size = 0x12000, scoped, tag = 'internal scratch']
  %s0 = inlined_call_operand.vmem [shape: bf16[16,32], index: 0, kind: input, shape index: {}]
  %s1 = inlined_call_operand.vmem [shape: bf16[32,96], index: 1, kind: input, shape index: {}]
  %s2 = inlined_call_operand.vmem [shape: bf16[1,96], index: 2, kind: input, shape index: {}]
  %s3 = inlined_call_operand.vmem [shape: bf16[16,96], index: 3, kind: output, shape index: {}]
  %s4 = sld [smem:[#allocation0]]
  $region22: #{bart_forward_dense.40} parent=0
    _
  %s6 = ssub.s32 1, %s4
  %s7 = scalar_select 0, %s6, %s4
  // Predicated region
  $region2: #{bart_forward_dense.40} parent=0 // pred_check
    _
  $region3: #{bart_forward_dense.40} parent=0 // pred_check_branch
    %9 = sbr.rel (0) target = $region5
  $region4: #{bart_forward_dense.40} parent=0 // pred_region
    _
  $region5: #{bart_forward_dense.40} parent=0 // pred_fallthru
    _
  // Predicated region
  $region6: #{bart_forward_dense.40} parent=0 // pred_check
    _
  $region7: #{bart_forward_dense.40} parent=0 // pred_check_branch
    %11 = sbr.rel (0) target = $region9
  $region8: #{bart_forward_dense.40} parent=0 // pred_region
    _
  $region9: #{bart_forward_dense.40} parent=0 // pred_fallthru
    _
  // Predicated region
  $region10: #{bart_forward_dense.40} parent=0 // pred_check
    _
  $region11: #{bart_forward_dense.40} parent=0 // pred_check_branch
    %13 = sbr.rel (0) target = $region13
  $region12: #{bart_forward_dense.40} parent=0 // pred_region
    _
  $region13: #{bart_forward_dense.40} parent=0 // pred_fallthru
    _
  %v15 = vld [vmem:[%s0] sm:$0xf]
  %v16 = vld [vmem:[%s0 + $0x4] sm:$0xf]
  %v17 = vld [vmem:[%s1] sm:$0xf]
  %v18 = vld [vmem:[%s1 + $0x4] sm:$0xf]
  %v19 = vld [vmem:[%s1 + $0x8] sm:$0xf]
  %v20 = vld [vmem:[%s1 + $0xc] sm:$0xf]
  %v21 = vld [vmem:[%s2] sm:$0x1]
  %v22 = vunpack.c.l.bf16 %v21
  %v23 = vlaneseq
  %v24 = vshrl.u32 %v23, 7
  %v25 = vsub.s32 0, %v24
  %v26 = vrot.slane %v22, %v25
  %v29 = vunpack.c.l.b16 %v15
  %v30 = vunpack.c.l.b16 %v16
  %v31 = vpack.c.b16 %v30, %v29
  %v36 = vunpack.c.l.b16 %v17
  %v37 = vunpack.c.l.b16 %v18
  %v38 = vunpack.c.l.b16 %v19
  %v39 = vunpack.c.l.b16 %v20
  %v40 = vpack.c.b16 %v37, %v36
  %v41 = vpack.c.b16 %v39, %v38
  %vm44 = vcmask 261120
  %v46 = vsel %vm44, %v31, 0
  %48 = vmatprep.subr.bf16.mxu0 0
  %49 = vmatpush1.bf16.msra.mxu0 %v40
  %50 = vmatprep.subr.bf16.mxu0 0
  %51 = vmatpush1.bf16.msra.mxu0 %v41
  %52 = vmatprep.subr.bf16.mxu0 0
  %53 = vmatpush1.bf16.msra.mxu0 0
  %54 = vmatprep.subr.bf16.mxu0 0
  %55 = vmatpush1.bf16.msra.mxu0 0
  %56 = vmatprep.subr.bf16.mxu0 0
  %57 = vmatpush1.bf16.msra.mxu0 0
  %58 = vmatprep.subr.bf16.mxu0 0
  %59 = vmatpush1.bf16.msra.mxu0 0
  %60 = vmatprep.subr.bf16.mxu0 0
  %61 = vmatpush1.bf16.msra.mxu0 0
  %62 = vmatprep.subr.bf16.mxu0 0
  %63 = vmatpush1.bf16.msra.mxu0 0
  %64 = vmatprep.subr.bf16.mxu0 0
  %65 = vmatpush1.bf16.msra.mxu0 0
  %66 = vmatprep.subr.bf16.mxu0 0
  %67 = vmatpush1.bf16.msra.mxu0 0
  %68 = vmatprep.subr.bf16.mxu0 0
  %69 = vmatpush1.bf16.msra.mxu0 0
  %70 = vmatprep.subr.bf16.mxu0 0
  %71 = vmatpush1.bf16.msra.mxu0 0
  %72 = vmatprep.subr.bf16.mxu0 0
  %73 = vmatpush1.bf16.msra.mxu0 0
  %74 = vmatprep.subr.bf16.mxu0 0
  %75 = vmatpush1.bf16.msra.mxu0 0
  %76 = vmatprep.subr.bf16.mxu0 0
  %77 = vmatpush1.bf16.msra.mxu0 0
  %78 = vmatprep.subr.bf16.mxu0 0
  %79 = vmatpush1.bf16.msra.mxu0 0
  %80 = vmatprep.mubr.bf16.mxu0 0
  %81 = vmatmul.mubr.bf16.gmra.mrb[0].mxu0 %v46
  %v82 = vpop.f32.mrb[0].mxu0
  %v83 = vadd.f32 %v26, %v82
  %v84 = vpop.f32.mrb[0].mxu0
  %v85 = vpop.f32.mrb[0].mxu0
  %v86 = vadd.f32 %v26, %v85
  %v87 = vpop.f32.mrb[0].mxu0
  %88 = vdwg.mxu0
  %v89 = vpack.c.bf16 %v86, %v83
  %v91 = vunpack.c.l.b16 %v89
  %v92 = vunpack.c.h.b16 %v89
  %v93 = vpack.c.b16 %v91, %v91
  %v94 = vpack.c.b16 %v92, %v92
  %vm97 = vcmask 781312
  %98 = vst.msk [vmem:[%s3] sm:$0xf] %vm97, %v93
  %99 = vst.msk [vmem:[%s3 + $0x4] sm:$0xf] %vm97, %v94
  // Predicated region
  $region14: #{bart_forward_dense.40} parent=0 // pred_check
    _
  $region15: #{bart_forward_dense.40} parent=0 // pred_check_branch
    %101 = sbr.rel (0) target = $region17
  $region16: #{bart_forward_dense.40} parent=0 // pred_region
    _
  $region17: #{bart_forward_dense.40} parent=0 // pred_fallthru
    _
  // Predicated region
  $region18: #{bart_forward_dense.40} parent=0 // pred_check
    _
  $region19: #{bart_forward_dense.40} parent=0 // pred_check_branch
    %103 = sbr.rel (0) target = $region21
  $region20: #{bart_forward_dense.40} parent=0 // pred_region
    _
  $region21: #{bart_forward_dense.40} parent=0 // pred_fallthru
    _

// kernel: bart_forward_dense.42
$region0: #{bart_forward_dense.42}
  #allocation0 [shape = 'u32[]', space=smem, size = 0x4, offset = 0x4, fixed_abs, tag = 'smem constant byte address 0x4 - core index']
  #allocation1 [shape = 'u32[144,128]{1,0:T(1,128)}', space=vmem, size = 0x12000, scoped, tag = 'internal scratch']
  %s0 = inlined_call_operand.vmem [shape: bf16[16,32], index: 0, kind: input, shape index: {}]
  %s1 = inlined_call_operand.vmem [shape: bf16[32,32], index: 1, kind: input, shape index: {}]
  %s2 = inlined_call_operand.vmem [shape: bf16[1,32], index: 2, kind: input, shape index: {}]
  %s3 = inlined_call_operand.vmem [shape: bf16[16,32], index: 3, kind: output, shape index: {}]
  %s4 = sld [smem:[#allocation0]]
  $region22: #{bart_forward_dense.42} parent=0
    _
  %s6 = ssub.s32 1, %s4
  %s7 = scalar_select 0, %s6, %s4
  // Predicated region
  $region2: #{bart_forward_dense.42} parent=0 // pred_check
    _
  $region3: #{bart_forward_dense.42} parent=0 // pred_check_branch
    %9 = sbr.rel (0) target = $region5
  $region4: #{bart_forward_dense.42} parent=0 // pred_region
    _
  $region5: #{bart_forward_dense.42} parent=0 // pred_fallthru
    _
  // Predicated region
  $region6: #{bart_forward_dense.42} parent=0 // pred_check
    _
  $region7: #{bart_forward_dense.42} parent=0 // pred_check_branch
    %11 = sbr.rel (0) target = $region9
  $region8: #{bart_forward_dense.42} parent=0 // pred_region
    _
  $region9: #{bart_forward_dense.42} parent=0 // pred_fallthru
    _
  // Predicated region
  $region10: #{bart_forward_dense.42} parent=0 // pred_check
    _
  $region11: #{bart_forward_dense.42} parent=0 // pred_check_branch
    %13 = sbr.rel (0) target = $region13
  $region12: #{bart_forward_dense.42} parent=0 // pred_region
    _
  $region13: #{bart_forward_dense.42} parent=0 // pred_fallthru
    _
  %v15 = vld [vmem:[%s0] sm:$0xf]
  %v16 = vld [vmem:[%s0 + $0x4] sm:$0xf]
  %v17 = vld [vmem:[%s1] sm:$0xf]
  %v18 = vld [vmem:[%s1 + $0x4] sm:$0xf]
  %v19 = vld [vmem:[%s1 + $0x8] sm:$0xf]
  %v20 = vld [vmem:[%s1 + $0xc] sm:$0xf]
  %v21 = vld [vmem:[%s2] sm:$0x1]
  %v22 = vunpack.c.l.bf16 %v21
  %v23 = vlaneseq
  %v24 = vshrl.u32 %v23, 7
  %v25 = vsub.s32 0, %v24
  %v26 = vrot.slane %v22, %v25
  %v29 = vunpack.c.l.b16 %v15
  %v30 = vunpack.c.l.b16 %v16
  %v31 = vpack.c.b16 %v30, %v29
  %v36 = vunpack.c.l.b16 %v17
  %v37 = vunpack.c.l.b16 %v18
  %v38 = vunpack.c.l.b16 %v19
  %v39 = vunpack.c.l.b16 %v20
  %v40 = vpack.c.b16 %v37, %v36
  %v41 = vpack.c.b16 %v39, %v38
  %vm44 = vcmask 261120
  %v46 = vsel %vm44, %v31, 0
  %48 = vmatprep.subr.bf16.mxu0 0
  %49 = vmatpush1.bf16.msra.mxu0 %v40
  %50 = vmatprep.subr.bf16.mxu0 0
  %51 = vmatpush1.bf16.msra.mxu0 %v41
  %52 = vmatprep.subr.bf16.mxu0 0
  %53 = vmatpush1.bf16.msra.mxu0 0
  %54 = vmatprep.subr.bf16.mxu0 0
  %55 = vmatpush1.bf16.msra.mxu0 0
  %56 = vmatprep.subr.bf16.mxu0 0
  %57 = vmatpush1.bf16.msra.mxu0 0
  %58 = vmatprep.subr.bf16.mxu0 0
  %59 = vmatpush1.bf16.msra.mxu0 0
  %60 = vmatprep.subr.bf16.mxu0 0
  %61 = vmatpush1.bf16.msra.mxu0 0
  %62 = vmatprep.subr.bf16.mxu0 0
  %63 = vmatpush1.bf16.msra.mxu0 0
  %64 = vmatprep.subr.bf16.mxu0 0
  %65 = vmatpush1.bf16.msra.mxu0 0
  %66 = vmatprep.subr.bf16.mxu0 0
  %67 = vmatpush1.bf16.msra.mxu0 0
  %68 = vmatprep.subr.bf16.mxu0 0
  %69 = vmatpush1.bf16.msra.mxu0 0
  %70 = vmatprep.subr.bf16.mxu0 0
  %71 = vmatpush1.bf16.msra.mxu0 0
  %72 = vmatprep.subr.bf16.mxu0 0
  %73 = vmatpush1.bf16.msra.mxu0 0
  %74 = vmatprep.subr.bf16.mxu0 0
  %75 = vmatpush1.bf16.msra.mxu0 0
  %76 = vmatprep.subr.bf16.mxu0 0
  %77 = vmatpush1.bf16.msra.mxu0 0
  %78 = vmatprep.subr.bf16.mxu0 0
  %79 = vmatpush1.bf16.msra.mxu0 0
  %80 = vmatprep.mubr.bf16.mxu0 0
  %81 = vmatmul.mubr.bf16.gmra.mrb[0].mxu0 %v46
  %v82 = vpop.f32.mrb[0].mxu0
  %v83 = vadd.f32 %v26, %v82
  %v84 = vpop.f32.mrb[0].mxu0
  %v85 = vpop.f32.mrb[0].mxu0
  %v86 = vadd.f32 %v26, %v85
  %v87 = vpop.f32.mrb[0].mxu0
  %88 = vdwg.mxu0
  %v89 = vpack.c.bf16 %v86, %v83
  %v91 = vunpack.c.l.b16 %v89
  %v92 = vunpack.c.h.b16 %v89
  %v93 = vpack.c.b16 %v91, %v91
  %v94 = vpack.c.b16 %v92, %v92
  %vm97 = vcmask 257024
  %98 = vst.msk [vmem:[%s3] sm:$0xf] %vm97, %v93
  %99 = vst.msk [vmem:[%s3 + $0x4] sm:$0xf] %vm97, %v94
  // Predicated region
  $region14: #{bart_forward_dense.42} parent=0 // pred_check
    _
  $region15: #{bart_forward_dense.42} parent=0 // pred_check_branch
    %101 = sbr.rel (0) target = $region17
  $region16: #{bart_forward_dense.42} parent=0 // pred_region
    _
  $region17: #{bart_forward_dense.42} parent=0 // pred_fallthru
    _
  // Predicated region
  $region18: #{bart_forward_dense.42} parent=0 // pred_check
    _
  $region19: #{bart_forward_dense.42} parent=0 // pred_check_branch
    %103 = sbr.rel (0) target = $region21
  $region20: #{bart_forward_dense.42} parent=0 // pred_region
    _
  $region21: #{bart_forward_dense.42} parent=0 // pred_fallthru
    _

// kernel: bart_forward_dense.43
$region0: #{bart_forward_dense.43}
  #allocation0 [shape = 'u32[]', space=smem, size = 0x4, offset = 0x4, fixed_abs, tag = 'smem constant byte address 0x4 - core index']
  #allocation1 [shape = 'u32[144,128]{1,0:T(1,128)}', space=vmem, size = 0x12000, scoped, tag = 'internal scratch']
  %s0 = inlined_call_operand.vmem [shape: bf16[16,32], index: 0, kind: input, shape index: {}]
  %s1 = inlined_call_operand.vmem [shape: bf16[16,32], index: 1, kind: input, shape index: {}]
  %s2 = inlined_call_operand.vmem [shape: bf16[1,32], index: 2, kind: input, shape index: {}]
  %s3 = inlined_call_operand.vmem [shape: bf16[1,32], index: 3, kind: input, shape index: {}]
  %s4 = inlined_call_operand.vmem [shape: bf16[16,32], index: 4, kind: output, shape index: {}]
  %s5 = sld [smem:[#allocation0]]
  $region26: #{bart_forward_dense.43} parent=0
    _
  %s7 = ssub.s32 1, %s5
  %s8 = scalar_select 0, %s7, %s5
  // Predicated region
  $region2: #{bart_forward_dense.43} parent=0 // pred_check
    _
  $region3: #{bart_forward_dense.43} parent=0 // pred_check_branch
    %10 = sbr.rel (0) target = $region5
  $region4: #{bart_forward_dense.43} parent=0 // pred_region
    _
  $region5: #{bart_forward_dense.43} parent=0 // pred_fallthru
    _
  // Predicated region
  $region6: #{bart_forward_dense.43} parent=0 // pred_check
    _
  $region7: #{bart_forward_dense.43} parent=0 // pred_check_branch
    %12 = sbr.rel (0) target = $region9
  $region8: #{bart_forward_dense.43} parent=0 // pred_region
    _
  $region9: #{bart_forward_dense.43} parent=0 // pred_fallthru
    _
  // Predicated region
  $region10: #{bart_forward_dense.43} parent=0 // pred_check
    _
  $region11: #{bart_forward_dense.43} parent=0 // pred_check_branch
    %14 = sbr.rel (0) target = $region13
  $region12: #{bart_forward_dense.43} parent=0 // pred_region
    _
  $region13: #{bart_forward_dense.43} parent=0 // pred_fallthru
    _
  // Predicated region
  $region14: #{bart_forward_dense.43} parent=0 // pred_check
    _
  $region15: #{bart_forward_dense.43} parent=0 // pred_check_branch
    %16 = sbr.rel (0) target = $region17
  $region16: #{bart_forward_dense.43} parent=0 // pred_region
    _
  $region17: #{bart_forward_dense.43} parent=0 // pred_fallthru
    _
  %v17 = vld [vmem:[%s0] sm:$0xf]
  %v18 = vld [vmem:[%s0 + $0x4] sm:$0xf]
  %v19 = vunpack.c.l.bf16 %v17
  %v20 = vunpack.c.l.bf16 %v18
  %v21 = vld [vmem:[%s1] sm:$0xf]
  %v22 = vld [vmem:[%s1 + $0x4] sm:$0xf]
  %v23 = vunpack.c.l.bf16 %v21
  %v24 = vunpack.c.l.bf16 %v22
  %v25 = vadd.f32 %v19, %v23
  %v26 = vadd.f32 %v20, %v24
  %vm27 = vcmask 261120
  %v28 = vsel %vm27, %v25, 0.0
  %29 = vadd.xlane.f32.xlu0 %v28
  %v30 = vpop.xlane.xlu0 %29
  %v31 = vsel %vm27, %v26, 0.0
  %32 = vadd.xlane.f32.xlu0 %v31
  %v33 = vpop.xlane.xlu0 %32
  %v34 = vrcp.pop 32.0
  %v35 = vmul.f32 %v30, %v34
  %v36 = vmul.f32 %v33, %v34
  %v37 = vsub.f32 %v25, %v35
  %v38 = vsub.f32 %v26, %v36
  %v39 = vmul.f32 %v37, %v37
  %v40 = vmul.f32 %v38, %v38
  %v41 = vsel %vm27, %v39, 0.0
  %42 = vadd.xlane.f32.xlu0 %v41
  %v43 = vpop.xlane.xlu0 %42
  %v44 = vsel %vm27, %v40, 0.0
  %45 = vadd.xlane.f32.xlu0 %v44
  %v46 = vpop.xlane.xlu0 %45
  %v47 = vmul.f32 %v43, %v34
  %v48 = vmul.f32 %v46, %v34
  %v49 = vadd.f32 %v47, 1e-05
  %v50 = vadd.f32 %v48, 1e-05
  %v51 = vrsqrt.pop %v49
  %v52 = vrsqrt.pop %v50
  %v53 = vmul.f32 %v37, %v51
  %v54 = vmul.f32 %v38, %v52
  %v55 = vld [vmem:[%s2] sm:$0x1]
  %v56 = vunpack.c.l.bf16 %v55
  %v57 = vlaneseq
  %v58 = vshrl.u32 %v57, 7
  %v59 = vsub.s32 0, %v58
  %v60 = vrot.slane %v56, %v59
  %v61 = vmul.f32 %v53, %v60
  %v62 = vmul.f32 %v54, %v60
  %v63 = vld [vmem:[%s3] sm:$0x1]
  %v64 = vunpack.c.l.bf16 %v63
  %v65 = vlaneseq
  %v66 = vshrl.u32 %v65, 7
  %v67 = vsub.s32 0, %v66
  %v68 = vrot.slane %v64, %v67
  %v69 = vadd.f32 %v61, %v68
  %v70 = vadd.f32 %v62, %v68
  %v71 = vpack.c.bf16 %v70, %v69
  %v73 = vunpack.c.l.b16 %v71
  %v74 = vunpack.c.h.b16 %v71
  %v75 = vpack.c.b16 %v73, %v73
  %v76 = vpack.c.b16 %v74, %v74
  %vm79 = vcmask 257024
  %80 = vst.msk [vmem:[%s4] sm:$0xf] %vm79, %v75
  %81 = vst.msk [vmem:[%s4 + $0x4] sm:$0xf] %vm79, %v76
  // Predicated region
  $region18: #{bart_forward_dense.43} parent=0 // pred_check
    _
  $region19: #{bart_forward_dense.43} parent=0 // pred_check_branch
    %83 = sbr.rel (0) target = $region21
  $region20: #{bart_forward_dense.43} parent=0 // pred_region
    _
  $region21: #{bart_forward_dense.43} parent=0 // pred_fallthru
    _
  // Predicated region
  $region22: #{bart_forward_dense.43} parent=0 // pred_check
    _
  $region23: #{bart_forward_dense.43} parent=0 // pred_check_branch
    %85 = sbr.rel (0) target = $region25
  $region24: #{bart_forward_dense.43} parent=0 // pred_region
    _
  $region25: #{bart_forward_dense.43} parent=0 // pred_fallthru
    _

// kernel: bart_forward_dense.41
$region0: #{bart_forward_dense.41}
  #allocation0 [shape = 'u32[]', space=smem, size = 0x4, offset = 0x4, fixed_abs, tag = 'smem constant byte address 0x4 - core index']
  #allocation1 [shape = 'u32[144,128]{1,0:T(1,128)}', space=vmem, size = 0x12000, scoped, tag = 'internal scratch']
  %s0 = inlined_call_operand.vmem [shape: bf16[2,8,32], index: 0, kind: input, shape index: {}]
  %s1 = inlined_call_operand.vmem [shape: bf16[2,8,32], index: 1, kind: input, shape index: {}]
  %s2 = inlined_call_operand.vmem [shape: bf16[2,8,32], index: 2, kind: input, shape index: {}]
  %s3 = inlined_call_operand.vmem [shape: s32[2,1,8], index: 3, kind: input, shape index: {}]
  %s4 = inlined_call_operand.vmem [shape: bf16[2,8,32], index: 4, kind: output, shape index: {}]
  %s5 = sld [smem:[#allocation0]]
  $region49: #{bart_forward_dense.41} parent=0
    _
  %s7 = ssub.s32 1, %s5
  %s8 = scalar_select 0, %s7, %s5
  loop: start=0, step=1, limit=4
  $region2: #{bart_forward_dense.41} parent=0 // loop_pre_header
    _
  $region3: #{bart_forward_dense.41} parent=0 // loop_header
    %s10 = sphi 0, %s14
    %p11 = scmp.ge.s32.totalorder %s10, 4
    %s20 = sphi 0, %s22
    %s23 = sphi 0, %s20
    %s24 = sphi 0, %s23
    %s40 = sphi 0, %s24
    %s46 = sphi 0, %s48
    %s49 = sphi 0, %s46
    %s50 = sphi 0, %s49
    %s66 = sphi 0, %s50
    %s72 = sphi 0, %s74
    %s75 = sphi 0, %s72
    %s76 = sphi 0, %s75
    %s92 = sphi 0, %s76
    %s98 = sphi 0, %s100
    %s101 = sphi 0, %s98
    %s102 = sphi 0, %s101
    %s118 = sphi 0, %s102
    %s124 = sphi 0, %s126
    %s127 = sphi 0, %s124
    %s128 = sphi 0, %s127
    %s144 = sphi 0, %s128
  $region4: #{bart_forward_dense.41} parent=0 // loop_header_branch
    %13 = sbr.rel (%p11) target = $region8
  $region5: #{bart_forward_dense.41} parent=0 // loop_body
    %s15 = ssub.s32 %s10, 1
    %s16 = ssub.s32 %s10, 2
    %s17 = sadd.s32 %s10, 1
    %s18 = ssub.s32 %s10, %s17
    %p19 = scmp.eq.s32.totalorder %s18, 0
    %s21 = sadd.s32 %s20, 1
    %s22 = scalar_select %p19, %s20, %s21
    %p25 = pneg %p19
    %p26 = scmp.eq.s32.totalorder %s10, 1
    %p27 = por %p25, %p26
    %p28 = scmp.ne.s32.totalorder %s20, %s23
    %p29 = scmp.eq.s32.totalorder %s10, 0
    %p30 = por %p28, %p29
    %p31 = scmp.ne.s32.totalorder %s20, %s23
    %p32 = scmp.eq.s32.totalorder %s15, 1
    %p33 = por %p31, %p32
    %p34 = scmp.ne.s32.totalorder %s23, %s24
    %p35 = scmp.eq.s32.totalorder %s15, 0
    %p36 = por %p34, %p35
    %p37 = scmp.ne.s32.totalorder %s23, %s24
    %p38 = scmp.eq.s32.totalorder %s16, 1
    %p39 = por %p37, %p38
    %p41 = scmp.ne.s32.totalorder %s24, %s40
    %p42 = scmp.eq.s32.totalorder %s16, 0
    %p43 = por %p41, %p42
    %s44 = ssub.s32 %s10, %s17
    %p45 = scmp.eq.s32.totalorder %s44, 0
    %s47 = sadd.s32 %s46, 1
    %s48 = scalar_select %p45, %s46, %s47
    %p51 = pneg %p45
    %p52 = scmp.eq.s32.totalorder %s10, 1
    %p53 = por %p51, %p52
    %p54 = scmp.ne.s32.totalorder %s46, %s49
    %p55 = scmp.eq.s32.totalorder %s10, 0
    %p56 = por %p54, %p55
    %p57 = scmp.ne.s32.totalorder %s46, %s49
    %p58 = scmp.eq.s32.totalorder %s15, 1
    %p59 = por %p57, %p58
    %p60 = scmp.ne.s32.totalorder %s49, %s50
    %p61 = scmp.eq.s32.totalorder %s15, 0
    %p62 = por %p60, %p61
    %p63 = scmp.ne.s32.totalorder %s49, %s50
    %p64 = scmp.eq.s32.totalorder %s16, 1
    %p65 = por %p63, %p64
    %p67 = scmp.ne.s32.totalorder %s50, %s66
    %p68 = scmp.eq.s32.totalorder %s16, 0
    %p69 = por %p67, %p68
    %s70 = ssub.s32 %s10, %s17
    %p71 = scmp.eq.s32.totalorder %s70, 0
    %s73 = sadd.s32 %s72, 1
    %s74 = scalar_select %p71, %s72, %s73
    %p77 = pneg %p71
    %p78 = scmp.eq.s32.totalorder %s10, 1
    %p79 = por %p77, %p78
    %p80 = scmp.ne.s32.totalorder %s72, %s75
    %p81 = scmp.eq.s32.totalorder %s10, 0
    %p82 = por %p80, %p81
    %p83 = scmp.ne.s32.totalorder %s72, %s75
    %p84 = scmp.eq.s32.totalorder %s15, 1
    %p85 = por %p83, %p84
    %p86 = scmp.ne.s32.totalorder %s75, %s76
    %p87 = scmp.eq.s32.totalorder %s15, 0
    %p88 = por %p86, %p87
    %p89 = scmp.ne.s32.totalorder %s75, %s76
    %p90 = scmp.eq.s32.totalorder %s16, 1
    %p91 = por %p89, %p90
    %p93 = scmp.ne.s32.totalorder %s76, %s92
    %p94 = scmp.eq.s32.totalorder %s16, 0
    %p95 = por %p93, %p94
    %s96 = ssub.s32 %s10, %s17
    %p97 = scmp.eq.s32.totalorder %s96, 0
    %s99 = sadd.s32 %s98, 1
    %s100 = scalar_select %p97, %s98, %s99
    %p103 = pneg %p97
    %p104 = scmp.eq.s32.totalorder %s10, 1
    %p105 = por %p103, %p104
    %p106 = scmp.ne.s32.totalorder %s98, %s101
    %p107 = scmp.eq.s32.totalorder %s10, 0
    %p108 = por %p106, %p107
    %p109 = scmp.ne.s32.totalorder %s98, %s101
    %p110 = scmp.eq.s32.totalorder %s15, 1
    %p111 = por %p109, %p110
    %p112 = scmp.ne.s32.totalorder %s101, %s102
    %p113 = scmp.eq.s32.totalorder %s15, 0
    %p114 = por %p112, %p113
    %p115 = scmp.ne.s32.totalorder %s101, %s102
    %p116 = scmp.eq.s32.totalorder %s16, 1
    %p117 = por %p115, %p116
    %p119 = scmp.ne.s32.totalorder %s102, %s118
    %p120 = scmp.eq.s32.totalorder %s16, 0
    %p121 = por %p119, %p120
    %s122 = ssub.s32 %s10, %s17
    %p123 = scmp.eq.s32.totalorder %s122, 0
    %s125 = sadd.s32 %s124, 1
    %s126 = scalar_select %p123, %s124, %s125
    %p129 = pneg %p123
    %p130 = scmp.eq.s32.totalorder %s10, 1
    %p131 = por %p129, %p130
    %p132 = scmp.ne.s32.totalorder %s124, %s127
    %p133 = scmp.eq.s32.totalorder %s10, 0
    %p134 = por %p132, %p133
    %p135 = scmp.ne.s32.totalorder %s124, %s127
    %p136 = scmp.eq.s32.totalorder %s15, 1
    %p137 = por %p135, %p136
    %p138 = scmp.ne.s32.totalorder %s127, %s128
    %p139 = scmp.eq.s32.totalorder %s15, 0
    %p140 = por %p138, %p139
    %p141 = scmp.ne.s32.totalorder %s127, %s128
    %p142 = scmp.eq.s32.totalorder %s16, 1
    %p143 = por %p141, %p142
    %p145 = scmp.ne.s32.totalorder %s128, %s144
    %p146 = scmp.eq.s32.totalorder %s16, 0
    %p147 = por %p145, %p146
    %p148 = scmp.le.s32.totalorder 1, %s10
    %p149 = scmp.lt.s32.totalorder %s10, 3
    %p150 = pnand %p148, %p149
    %p151 = pneg %p150
    // Predicated region
    $region9: #{bart_forward_dense.41} parent=5 // pred_check
      _
    $region10: #{bart_forward_dense.41} parent=5 // pred_check_branch
      %153 = sbr.rel (%p150) target = $region12
    $region11: #{bart_forward_dense.41} parent=5 // pred_region
      %s154 = ssub.s32 %s10, 1
    $region12: #{bart_forward_dense.41} parent=5 // pred_fallthru
      _
    %p155 = scmp.lt.s32.totalorder %s10, 2
    // Predicated region
    $region13: #{bart_forward_dense.41} parent=5 // pred_check
      %p156 = pneg %p155
    $region14: #{bart_forward_dense.41} parent=5 // pred_check_branch
      %158 = sbr.rel (%p156) target = $region16
    $region15: #{bart_forward_dense.41} parent=5 // pred_region
      // Predicated region
      $region17: #{bart_forward_dense.41} parent=15 // pred_check
        %p159 = pneg %p30
      $region18: #{bart_forward_dense.41} parent=15 // pred_check_branch
        %161 = sbr.rel (%p159) target = $region20
      $region19: #{bart_forward_dense.41} parent=15 // pred_region
        %p162 = scmp.lt.s32.totalorder %s10, 1
        %s163 = scalar_select %p162, %s10, 1
        %s164 = smul.addr %s163, 4
        %s165 = scalar_lea.vmem %s0, %s164
      $region20: #{bart_forward_dense.41} parent=15 // pred_fallthru
        _
      // Predicated region
      $region21: #{bart_forward_dense.41} parent=15 // pred_check
        %p166 = pneg %p56
      $region22: #{bart_forward_dense.41} parent=15 // pred_check_branch
        %168 = sbr.rel (%p166) target = $region24
      $region23: #{bart_forward_dense.41} parent=15 // pred_region
        %p169 = scmp.lt.s32.totalorder %s10, 1
        %s170 = scalar_select %p169, %s10, 1
        %s171 = smul.addr %s170, 4
        %s172 = scalar_lea.vmem %s1, %s171
      $region24: #{bart_forward_dense.41} parent=15 // pred_fallthru
        _
      // Predicated region
      $region25: #{bart_forward_dense.41} parent=15 // pred_check
        %p173 = pneg %p82
      $region26: #{bart_forward_dense.41} parent=15 // pred_check_branch
        %175 = sbr.rel (%p173) target = $region28
      $region27: #{bart_forward_dense.41} parent=15 // pred_region
        %p176 = scmp.lt.s32.totalorder %s10, 1
        %s177 = scalar_select %p176, %s10, 1
        %s178 = smul.addr %s177, 4
        %s179 = scalar_lea.vmem %s2, %s178
      $region28: #{bart_forward_dense.41} parent=15 // pred_fallthru
        _
      // Predicated region
      $region29: #{bart_forward_dense.41} parent=15 // pred_check
        %p180 = pneg %p108
      $region30: #{bart_forward_dense.41} parent=15 // pred_check_branch
        %182 = sbr.rel (%p180) target = $region32
      $region31: #{bart_forward_dense.41} parent=15 // pred_region
        %p183 = scmp.lt.s32.totalorder %s10, 1
        %s184 = scalar_select %p183, %s10, 1
        %s185 = scalar_lea.vmem %s3, %s184
      $region32: #{bart_forward_dense.41} parent=15 // pred_fallthru
        _
    $region16: #{bart_forward_dense.41} parent=5 // pred_fallthru
      _
    %p186 = scmp.le.s32.totalorder 1, %s10
    %p187 = scmp.lt.s32.totalorder %s10, 3
    %p188 = pnand %p186, %p187
    %p189 = pneg %p188
    // Predicated region
    $region33: #{bart_forward_dense.41} parent=5 // pred_check
      _
    $region34: #{bart_forward_dense.41} parent=5 // pred_check_branch
      %191 = sbr.rel (%p188) target = $region36
    $region35: #{bart_forward_dense.41} parent=5 // pred_region
      %s192 = ssub.s32 %s10, 1
      %p193 = scmp.lt.s32.totalorder %s15, 1
      %s194 = scalar_select %p193, %s15, 1
      %s195 = smul.addr %s194, 4
      %s196 = scalar_lea.vmem %s0, %s195
      %p197 = pneg %p36
      %p198 = pneg %p33
      %p199 = scmp.lt.s32.totalorder %s15, 1
      %s200 = scalar_select %p199, %s15, 1
      %s201 = smul.addr %s200, 4
      %s202 = scalar_lea.vmem %s1, %s201
      %p203 = pneg %p62
      %p204 = pneg %p59
      %p205 = scmp.lt.s32.totalorder %s15, 1
      %s206 = scalar_select %p205, %s15, 1
      %s207 = smul.addr %s206, 4
      %s208 = scalar_lea.vmem %s2, %s207
      %p209 = pneg %p88
      %p210 = pneg %p85
      %p211 = scmp.lt.s32.totalorder %s15, 1
      %s212 = scalar_select %p211, %s15, 1
      %s213 = scalar_lea.vmem %s3, %s212
      %p214 = pneg %p114
      %p215 = pneg %p111
      %p216 = pneg %p140
      %p217 = pneg %p137
      %p218 = scmp.lt.s32.totalorder %s15, 1
      %s219 = scalar_select %p218, %s15, 1
      %s220 = smul.addr %s219, 4
      %s221 = scalar_lea.vmem %s4, %s220
      %p222 = scmp.lt.s32.totalorder %s15, 1
      %s223 = scalar_select %p222, %s15, 1
      %s224 = smul.addr %s223, 4
      %s225 = scalar_lea.vmem %s0, %s224
      %p226 = scmp.lt.s32.totalorder %s15, 1
      %s227 = scalar_select %p226, %s15, 1
      %s228 = smul.addr %s227, 4
      %s229 = scalar_lea.vmem %s1, %s228
      %p230 = scmp.lt.s32.totalorder %s15, 1
      %s231 = scalar_select %p230, %s15, 1
      %s232 = smul.addr %s231, 4
      %s233 = scalar_lea.vmem %s2, %s232
      %p234 = scmp.lt.s32.totalorder %s15, 1
      %s235 = scalar_select %p234, %s15, 1
      %s236 = scalar_lea.vmem %s3, %s235
      %p237 = scmp.lt.s32.totalorder %s15, 1
      %s238 = scalar_select %p237, %s15, 1
      %s239 = smul.addr %s238, 4
      %s240 = scalar_lea.vmem %s4, %s239
      %v242 = vld [vmem:[%s225] sm:$0xf]
      %v243 = vld [vmem:[%s229] sm:$0xf]
      %v244 = vld [vmem:[%s233] sm:$0xf]
      %v245 = vunpack.c.l.bf16 %v242
      %v246 = vmul.f32 %v245, 0.35355338
      %v247 = vpack.c.bf16 %v246, %v246
      %v248 = vld [vmem:[%s236] sm:$0x1]
      %vm249 = vcmp.gt.s32.totalorder %v248, 0
      %v250 = vsel %vm249, 1, 0
      %v251 = vlaneseq
      %v252 = vshrl.u32 %v251, 7
      %v253 = vsub.s32 0, %v252
      %v254 = vrot.slane %v250, %v253
      %vm255 = vcmp.eq.s32.totalorder %v254, 1
      %v256 = vsel %vm255, 0.0, -1e+09
      %vm257 = vcmask 64512
      %v259 = vsel %vm257, %v247, 0
      %v262 = vsel %vm257, %v243, 0
      %264 = vmatprep.subr.bf16.mxu0 0
      %265 = vmatpush1.bf16.xpose.msra.mxu0 %v262
      %266 = vmatprep.subr.bf16.mxu0 0
      %267 = vmatpush1.bf16.xpose.msra.mxu0 0
      %268 = vmatprep.subr.bf16.mxu0 0
      %269 = vmatpush1.bf16.xpose.msra.mxu0 0
      %270 = vmatprep.subr.bf16.mxu0 0
      %271 = vmatpush1.bf16.xpose.msra.mxu0 0
      %272 = vmatprep.subr.bf16.mxu0 0
      %273 = vmatpush1.bf16.xpose.msra.mxu0 0
      %274 = vmatprep.subr.bf16.mxu0 0
      %275 = vmatpush1.bf16.xpose.msra.mxu0 0
      %276 = vmatprep.subr.bf16.mxu0 0
      %277 = vmatpush1.bf16.xpose.msra.mxu0 0
      %278 = vmatprep.subr.bf16.mxu0 0
      %279 = vmatpush1.bf16.xpose.msra.mxu0 0
      %280 = vmatprep.subr.bf16.mxu0 0
      %281 = vmatpush1.bf16.xpose.msra.mxu0 0
      %282 = vmatprep.subr.bf16.mxu0 0
      %283 = vmatpush1.bf16.xpose.msra.mxu0 0
      %284 = vmatprep.subr.bf16.mxu0 0
      %285 = vmatpush1.bf16.xpose.msra.mxu0 0
      %286 = vmatprep.subr.bf16.mxu0 0
      %287 = vmatpush1.bf16.xpose.msra.mxu0 0
      %288 = vmatprep.subr.bf16.mxu0 0
      %289 = vmatpush1.bf16.xpose.msra.mxu0 0
      %290 = vmatprep.subr.bf16.mxu0 0
      %291 = vmatpush1.bf16.xpose.msra.mxu0 0
      %292 = vmatprep.subr.bf16.mxu0 0
      %293 = vmatpush1.bf16.xpose.msra.mxu0 0
      %294 = vmatprep.subr.bf16.mxu0 0
      %295 = vmatpush1.bf16.xpose.msra.mxu0 0
      %296 = vmatprep.mubr.bf16.mxu0 0
      %297 = vmatmul.mubr.bf16.gmra.mrb[0].mxu0 %v259
      %v298 = vpop.f32.mrb[0].mxu0
      %v299 = vadd.f32 %v256, %v298
      %v300 = vpop.f32.mrb[0].mxu0
      %v301 = vpop.f32.mrb[0].mxu0
      %v302 = vpop.f32.mrb[0].mxu0
      %303 = vdwg.mxu0
      %v304 = vsel %vm257, %v299, -inf
      %305 = vmax.xlane.f32.xlu0 %v304
      %v306 = vpop.xlane.xlu0 %305
      %v307 = vsub.f32 %v299, %v306
      %v308 = vmul.f32 %v307, 1.442695
      %v309 = vpow.pop %v308
      %v310 = vsel %vm257, %v309, 0.0
      %311 = vadd.xlane.f32.xlu0 %v310
      %v312 = vpop.xlane.xlu0 %311
      %v313 = vrcp.pop %v312
      %v314 = vmul.f32 %v309, %v313
      %v315 = vpack.c.bf16 %v314, %v314
      %v317 = vsel %vm257, %v315, 0
      %vm319 = vcmask 1043456
      %v321 = vsel %vm319, %v244, 0
      %323 = vmatprep.subr.bf16.mxu0 0
      %324 = vmatpush1.bf16.msra.mxu0 %v321
      %325 = vmatprep.subr.bf16.mxu0 0
      %326 = vmatpush1.bf16.msra.mxu0 0
      %327 = vmatprep.subr.bf16.mxu0 0
      %328 = vmatpush1.bf16.msra.mxu0 0
      %329 = vmatprep.subr.bf16.mxu0 0
      %330 = vmatpush1.bf16.msra.mxu0 0
      %331 = vmatprep.subr.bf16.mxu0 0
      %332 = vmatpush1.bf16.msra.mxu0 0
      %333 = vmatprep.subr.bf16.mxu0 0
      %334 = vmatpush1.bf16.msra.mxu0 0
      %335 = vmatprep.subr.bf16.mxu0 0
      %336 = vmatpush1.bf16.msra.mxu0 0
      %337 = vmatprep.subr.bf16.mxu0 0
      %338 = vmatpush1.bf16.msra.mxu0 0
      %339 = vmatprep.subr.bf16.mxu0 0
      %340 = vmatpush1.bf16.msra.mxu0 0
      %341 = vmatprep.subr.bf16.mxu0 0
      %342 = vmatpush1.bf16.msra.mxu0 0
      %343 = vmatprep.subr.bf16.mxu0 0
      %344 = vmatpush1.bf16.msra.mxu0 0
      %345 = vmatprep.subr.bf16.mxu0 0
      %346 = vmatpush1.bf16.msra.mxu0 0
      %347 = vmatprep.subr.bf16.mxu0 0
      %348 = vmatpush1.bf16.msra.mxu0 0
      %349 = vmatprep.subr.bf16.mxu0 0
      %350 = vmatpush1.bf16.msra.mxu0 0
      %351 = vmatprep.subr.bf16.mxu0 0
      %352 = vmatpush1.bf16.msra.mxu0 0
      %353 = vmatprep.subr.bf16.mxu0 0
      %354 = vmatpush1.bf16.msra.mxu0 0
      %355 = vmatprep.mubr.bf16.mxu0 0
      %356 = vmatmul.mubr.bf16.gmra.mrb[0].mxu0 %v317
      %v357 = vpop.f32.mrb[0].mxu0
      %v358 = vadd.f32 0.0, %v357
      %v359 = vpop.f32.mrb[0].mxu0
      %v360 = vpop.f32.mrb[0].mxu0
      %v361 = vpop.f32.mrb[0].mxu0
      %362 = vdwg.mxu0
      %364 = vrot.lane.b32.xlu0 %v247, 120
      %v365 = vpop.permute.xlu0 %364
      %v367 = vunpack.c.l.b16 %v243
      %v368 = vpack.c.b16 %v367, %v367
      %369 = vrot.lane.b32.xlu0 %v368, 120
      %v370 = vpop.permute.xlu0 %369
      %v372 = vsel %vm257, %v365, 0
      %v375 = vsel %vm257, %v370, 0
      %377 = vmatprep.subr.bf16.mxu0 0
      %378 = vmatpush1.bf16.xpose.msra.mxu0 %v375
      %379 = vmatprep.subr.bf16.mxu0 0
      %380 = vmatpush1.bf16.xpose.msra.mxu0 0
      %381 = vmatprep.subr.bf16.mxu0 0
      %382 = vmatpush1.bf16.xpose.msra.mxu0 0
      %383 = vmatprep.subr.bf16.mxu0 0
      %384 = vmatpush1.bf16.xpose.msra.mxu0 0
      %385 = vmatprep.subr.bf16.mxu0 0
      %386 = vmatpush1.bf16.xpose.msra.mxu0 0
      %387 = vmatprep.subr.bf16.mxu0 0
      %388 = vmatpush1.bf16.xpose.msra.mxu0 0
      %389 = vmatprep.subr.bf16.mxu0 0
      %390 = vmatpush1.bf16.xpose.msra.mxu0 0
      %391 = vmatprep.subr.bf16.mxu0 0
      %392 = vmatpush1.bf16.xpose.msra.mxu0 0
      %393 = vmatprep.subr.bf16.mxu0 0
      %394 = vmatpush1.bf16.xpose.msra.mxu0 0
      %395 = vmatprep.subr.bf16.mxu0 0
      %396 = vmatpush1.bf16.xpose.msra.mxu0 0
      %397 = vmatprep.subr.bf16.mxu0 0
      %398 = vmatpush1.bf16.xpose.msra.mxu0 0
      %399 = vmatprep.subr.bf16.mxu0 0
      %400 = vmatpush1.bf16.xpose.msra.mxu0 0
      %401 = vmatprep.subr.bf16.mxu0 0
      %402 = vmatpush1.bf16.xpose.msra.mxu0 0
      %403 = vmatprep.subr.bf16.mxu0 0
      %404 = vmatpush1.bf16.xpose.msra.mxu0 0
      %405 = vmatprep.subr.bf16.mxu0 0
      %406 = vmatpush1.bf16.xpose.msra.mxu0 0
      %407 = vmatprep.subr.bf16.mxu0 0
      %408 = vmatpush1.bf16.xpose.msra.mxu0 0
      %409 = vmatprep.mubr.bf16.mxu0 0
      %410 = vmatmul.mubr.bf16.gmra.mrb[0].mxu0 %v372
      %v411 = vpop.f32.mrb[0].mxu0
      %v412 = vadd.f32 %v256, %v411
      %v413 = vpop.f32.mrb[0].mxu0
      %v414 = vpop.f32.mrb[0].mxu0
      %v415 = vpop.f32.mrb[0].mxu0
      %416 = vdwg.mxu0
      %v417 = vsel %vm257, %v412, -inf
      %418 = vmax.xlane.f32.xlu0 %v417
      %v419 = vpop.xlane.xlu0 %418
      %v420 = vsub.f32 %v412, %v419
      %v421 = vmul.f32 %v420, 1.442695
      %v422 = vpow.pop %v421
      %v423 = vsel %vm257, %v422, 0.0
      %424 = vadd.xlane.f32.xlu0 %v423
      %v425 = vpop.xlane.xlu0 %424
      %v426 = vrcp.pop %v425
      %v427 = vmul.f32 %v422, %v426
      %v428 = vpack.c.bf16 %v427, %v427
      %v430 = vunpack.c.l.b16 %v244
      %v431 = vpack.c.b16 %v430, %v430
      %432 = vrot.lane.b32.xlu0 %v431, 120
      %v433 = vpop.permute.xlu0 %432
      %v435 = vsel %vm257, %v428, 0
      %v438 = vsel %vm319, %v433, 0
      %440 = vmatprep.subr.bf16.mxu0 0
      %441 = vmatpush1.bf16.msra.mxu0 %v438
      %442 = vmatprep.subr.bf16.mxu0 0
      %443 = vmatpush1.bf16.msra.mxu0 0
      %444 = vmatprep.subr.bf16.mxu0 0
      %445 = vmatpush1.bf16.msra.mxu0 0
      %446 = vmatprep.subr.bf16.mxu0 0
      %447 = vmatpush1.bf16.msra.mxu0 0
      %448 = vmatprep.subr.bf16.mxu0 0
      %449 = vmatpush1.bf16.msra.mxu0 0
      %450 = vmatprep.subr.bf16.mxu0 0
      %451 = vmatpush1.bf16.msra.mxu0 0
      %452 = vmatprep.subr.bf16.mxu0 0
      %453 = vmatpush1.bf16.msra.mxu0 0
      %454 = vmatprep.subr.bf16.mxu0 0
      %455 = vmatpush1.bf16.msra.mxu0 0
      %456 = vmatprep.subr.bf16.mxu0 0
      %457 = vmatpush1.bf16.msra.mxu0 0
      %458 = vmatprep.subr.bf16.mxu0 0
      %459 = vmatpush1.bf16.msra.mxu0 0
      %460 = vmatprep.subr.bf16.mxu0 0
      %461 = vmatpush1.bf16.msra.mxu0 0
      %462 = vmatprep.subr.bf16.mxu0 0
      %463 = vmatpush1.bf16.msra.mxu0 0
      %464 = vmatprep.subr.bf16.mxu0 0
      %465 = vmatpush1.bf16.msra.mxu0 0
      %466 = vmatprep.subr.bf16.mxu0 0
      %467 = vmatpush1.bf16.msra.mxu0 0
      %468 = vmatprep.subr.bf16.mxu0 0
      %469 = vmatpush1.bf16.msra.mxu0 0
      %470 = vmatprep.subr.bf16.mxu0 0
      %471 = vmatpush1.bf16.msra.mxu0 0
      %472 = vmatprep.mubr.bf16.mxu0 0
      %473 = vmatmul.mubr.bf16.gmra.mrb[0].mxu0 %v435
      %v474 = vpop.f32.mrb[0].mxu0
      %v475 = vadd.f32 0.0, %v474
      %v476 = vpop.f32.mrb[0].mxu0
      %v477 = vpop.f32.mrb[0].mxu0
      %v478 = vpop.f32.mrb[0].mxu0
      %479 = vdwg.mxu0
      %480 = vrot.lane.b32.xlu0 %v247, 112
      %v481 = vpop.permute.xlu0 %480
      %482 = vrot.lane.b32.xlu0 %v368, 112
      %v483 = vpop.permute.xlu0 %482
      %v485 = vsel %vm257, %v481, 0
      %v488 = vsel %vm257, %v483, 0
      %490 = vmatprep.subr.bf16.mxu0 0
      %491 = vmatpush1.bf16.xpose.msra.mxu0 %v488
      %492 = vmatprep.subr.bf16.mxu0 0
      %493 = vmatpush1.bf16.xpose.msra.mxu0 0
      %494 = vmatprep.subr.bf16.mxu0 0
      %495 = vmatpush1.bf16.xpose.msra.mxu0 0
      %496 = vmatprep.subr.bf16.mxu0 0
      %497 = vmatpush1.bf16.xpose.msra.mxu0 0
      %498 = vmatprep.subr.bf16.mxu0 0
      %499 = vmatpush1.bf16.xpose.msra.mxu0 0
      %500 = vmatprep.subr.bf16.mxu0 0
      %501 = vmatpush1.bf16.xpose.msra.mxu0 0
      %502 = vmatprep.subr.bf16.mxu0 0
      %503 = vmatpush1.bf16.xpose.msra.mxu0 0
      %504 = vmatprep.subr.bf16.mxu0 0
      %505 = vmatpush1.bf16.xpose.msra.mxu0 0
      %506 = vmatprep.subr.bf16.mxu0 0
      %507 = vmatpush1.bf16.xpose.msra.mxu0 0
      %508 = vmatprep.subr.bf16.mxu0 0
      %509 = vmatpush1.bf16.xpose.msra.mxu0 0
      %510 = vmatprep.subr.bf16.mxu0 0
      %511 = vmatpush1.bf16.xpose.msra.mxu0 0
      %512 = vmatprep.subr.bf16.mxu0 0
      %513 = vmatpush1.bf16.xpose.msra.mxu0 0
      %514 = vmatprep.subr.bf16.mxu0 0
      %515 = vmatpush1.bf16.xpose.msra.mxu0 0
      %516 = vmatprep.subr.bf16.mxu0 0
      %517 = vmatpush1.bf16.xpose.msra.mxu0 0
      %518 = vmatprep.subr.bf16.mxu0 0
      %519 = vmatpush1.bf16.xpose.msra.mxu0 0
      %520 = vmatprep.subr.bf16.mxu0 0
      %521 = vmatpush1.bf16.xpose.msra.mxu0 0
      %522 = vmatprep.mubr.bf16.mxu0 0
      %523 = vmatmul.mubr.bf16.gmra.mrb[0].mxu0 %v485
      %v524 = vpop.f32.mrb[0].mxu0
      %v525 = vadd.f32 %v256, %v524
      %v526 = vpop.f32.mrb[0].mxu0
      %v527 = vpop.f32.mrb[0].mxu0
      %v528 = vpop.f32.mrb[0].mxu0
      %529 = vdwg.mxu0
      %v530 = vsel %vm257, %v525, -inf
      %531 = vmax.xlane.f32.xlu0 %v530
      %v532 = vpop.xlane.xlu0 %531
      %v533 = vsub.f32 %v525, %v532
      %v534 = vmul.f32 %v533, 1.442695
      %v535 = vpow.pop %v534
      %v536 = vsel %vm257, %v535, 0.0
      %537 = vadd.xlane.f32.xlu0 %v536
      %v538 = vpop.xlane.xlu0 %537
      %v539 = vrcp.pop %v538
      %v540 = vmul.f32 %v535, %v539
      %v541 = vpack.c.bf16 %v540, %v540
      %542 = vrot.lane.b32.xlu0 %v431, 112
      %v543 = vpop.permute.xlu0 %542
      %v545 = vsel %vm257, %v541, 0
      %v548 = vsel %vm319, %v543, 0
      %550 = vmatprep.subr.bf16.mxu0 0
      %551 = vmatpush1.bf16.msra.mxu0 %v548
      %552 = vmatprep.subr.bf16.mxu0 0
      %553 = vmatpush1.bf16.msra.mxu0 0
      %554 = vmatprep.subr.bf16.mxu0 0
      %555 = vmatpush1.bf16.msra.mxu0 0
      %556 = vmatprep.subr.bf16.mxu0 0
      %557 = vmatpush1.bf16.msra.mxu0 0
      %558 = vmatprep.subr.bf16.mxu0 0
      %559 = vmatpush1.bf16.msra.mxu0 0
      %560 = vmatprep.subr.bf16.mxu0 0
      %561 = vmatpush1.bf16.msra.mxu0 0
      %562 = vmatprep.subr.bf16.mxu0 0
      %563 = vmatpush1.bf16.msra.mxu0 0
      %564 = vmatprep.subr.bf16.mxu0 0
      %565 = vmatpush1.bf16.msra.mxu0 0
      %566 = vmatprep.subr.bf16.mxu0 0
      %567 = vmatpush1.bf16.msra.mxu0 0
      %568 = vmatprep.subr.bf16.mxu0 0
      %569 = vmatpush1.bf16.msra.mxu0 0
      %570 = vmatprep.subr.bf16.mxu0 0
      %571 = vmatpush1.bf16.msra.mxu0 0
      %572 = vmatprep.subr.bf16.mxu0 0
      %573 = vmatpush1.bf16.msra.mxu0 0
      %574 = vmatprep.subr.bf16.mxu0 0
      %575 = vmatpush1.bf16.msra.mxu0 0
      %576 = vmatprep.subr.bf16.mxu0 0
      %577 = vmatpush1.bf16.msra.mxu0 0
      %578 = vmatprep.subr.bf16.mxu0 0
      %579 = vmatpush1.bf16.msra.mxu0 0
      %580 = vmatprep.subr.bf16.mxu0 0
      %581 = vmatpush1.bf16.msra.mxu0 0
      %582 = vmatprep.mubr.bf16.mxu0 0
      %583 = vmatmul.mubr.bf16.gmra.mrb[0].mxu0 %v545
      %v584 = vpop.f32.mrb[0].mxu0
      %v585 = vadd.f32 0.0, %v584
      %v586 = vpop.f32.mrb[0].mxu0
      %v587 = vpop.f32.mrb[0].mxu0
      %v588 = vpop.f32.mrb[0].mxu0
      %589 = vdwg.mxu0
      %590 = vrot.lane.b32.xlu0 %v247, 104
      %v591 = vpop.permute.xlu0 %590
      %592 = vrot.lane.b32.xlu0 %v368, 104
      %v593 = vpop.permute.xlu0 %592
      %v595 = vsel %vm257, %v591, 0
      %v598 = vsel %vm257, %v593, 0
      %600 = vmatprep.subr.bf16.mxu0 0
      %601 = vmatpush1.bf16.xpose.msra.mxu0 %v598
      %602 = vmatprep.subr.bf16.mxu0 0
      %603 = vmatpush1.bf16.xpose.msra.mxu0 0
      %604 = vmatprep.subr.bf16.mxu0 0
      %605 = vmatpush1.bf16.xpose.msra.mxu0 0
      %606 = vmatprep.subr.bf16.mxu0 0
      %607 = vmatpush1.bf16.xpose.msra.mxu0 0
      %608 = vmatprep.subr.bf16.mxu0 0
      %609 = vmatpush1.bf16.xpose.msra.mxu0 0
      %610 = vmatprep.subr.bf16.mxu0 0
      %611 = vmatpush1.bf16.xpose.msra.mxu0 0
      %612 = vmatprep.subr.bf16.mxu0 0
      %613 = vmatpush1.bf16.xpose.msra.mxu0 0
      %614 = vmatprep.subr.bf16.mxu0 0
      %615 = vmatpush1.bf16.xpose.msra.mxu0 0
      %616 = vmatprep.subr.bf16.mxu0 0
      %617 = vmatpush1.bf16.xpose.msra.mxu0 0
      %618 = vmatprep.subr.bf16.mxu0 0
      %619 = vmatpush1.bf16.xpose.msra.mxu0 0
      %620 = vmatprep.subr.bf16.mxu0 0
      %621 = vmatpush1.bf16.xpose.msra.mxu0 0
      %622 = vmatprep.subr.bf16.mxu0 0
      %623 = vmatpush1.bf16.xpose.msra.mxu0 0
      %624 = vmatprep.subr.bf16.mxu0 0
      %625 = vmatpush1.bf16.xpose.msra.mxu0 0
      %626 = vmatprep.subr.bf16.mxu0 0
      %627 = vmatpush1.bf16.xpose.msra.mxu0 0
      %628 = vmatprep.subr.bf16.mxu0 0
      %629 = vmatpush1.bf16.xpose.msra.mxu0 0
      %630 = vmatprep.subr.bf16.mxu0 0
      %631 = vmatpush1.bf16.xpose.msra.mxu0 0
      %632 = vmatprep.mubr.bf16.mxu0 0
      %633 = vmatmul.mubr.bf16.gmra.mrb[0].mxu0 %v595
      %v634 = vpop.f32.mrb[0].mxu0
      %v635 = vadd.f32 %v256, %v634
      %v636 = vpop.f32.mrb[0].mxu0
      %v637 = vpop.f32.mrb[0].mxu0
      %v638 = vpop.f32.mrb[0].mxu0
      %639 = vdwg.mxu0
      %v640 = vsel %vm257, %v635, -inf
      %641 = vmax.xlane.f32.xlu0 %v640
      %v642 = vpop.xlane.xlu0 %641
      %v643 = vsub.f32 %v635, %v642
      %v644 = vmul.f32 %v643, 1.442695
      %v645 = vpow.pop %v644
      %v646 = vsel %vm257, %v645, 0.0
      %647 = vadd.xlane.f32.xlu0 %v646
      %v648 = vpop.xlane.xlu0 %647
      %v649 = vrcp.pop %v648
      %v650 = vmul.f32 %v645, %v649
      %v651 = vpack.c.bf16 %v650, %v650
      %652 = vrot.lane.b32.xlu0 %v431, 104
      %v653 = vpop.permute.xlu0 %652
      %v655 = vsel %vm257, %v651, 0
      %v658 = vsel %vm319, %v653, 0
      %660 = vmatprep.subr.bf16.mxu0 0
      %661 = vmatpush1.bf16.msra.mxu0 %v658
      %662 = vmatprep.subr.bf16.mxu0 0
      %663 = vmatpush1.bf16.msra.mxu0 0
      %664 = vmatprep.subr.bf16.mxu0 0
      %665 = vmatpush1.bf16.msra.mxu0 0
      %666 = vmatprep.subr.bf16.mxu0 0
      %667 = vmatpush1.bf16.msra.mxu0 0
      %668 = vmatprep.subr.bf16.mxu0 0
      %669 = vmatpush1.bf16.msra.mxu0 0
      %670 = vmatprep.subr.bf16.mxu0 0
      %671 = vmatpush1.bf16.msra.mxu0 0
      %672 = vmatprep.subr.bf16.mxu0 0
      %673 = vmatpush1.bf16.msra.mxu0 0
      %674 = vmatprep.subr.bf16.mxu0 0
      %675 = vmatpush1.bf16.msra.mxu0 0
      %676 = vmatprep.subr.bf16.mxu0 0
      %677 = vmatpush1.bf16.msra.mxu0 0
      %678 = vmatprep.subr.bf16.mxu0 0
      %679 = vmatpush1.bf16.msra.mxu0 0
      %680 = vmatprep.subr.bf16.mxu0 0
      %681 = vmatpush1.bf16.msra.mxu0 0
      %682 = vmatprep.subr.bf16.mxu0 0
      %683 = vmatpush1.bf16.msra.mxu0 0
      %684 = vmatprep.subr.bf16.mxu0 0
      %685 = vmatpush1.bf16.msra.mxu0 0
      %686 = vmatprep.subr.bf16.mxu0 0
      %687 = vmatpush1.bf16.msra.mxu0 0
      %688 = vmatprep.subr.bf16.mxu0 0
      %689 = vmatpush1.bf16.msra.mxu0 0
      %690 = vmatprep.subr.bf16.mxu0 0
      %691 = vmatpush1.bf16.msra.mxu0 0
      %692 = vmatprep.mubr.bf16.mxu0 0
      %693 = vmatmul.mubr.bf16.gmra.mrb[0].mxu0 %v655
      %v694 = vpop.f32.mrb[0].mxu0
      %v695 = vadd.f32 0.0, %v694
      %v696 = vpop.f32.mrb[0].mxu0
      %v697 = vpop.f32.mrb[0].mxu0
      %v698 = vpop.f32.mrb[0].mxu0
      %699 = vdwg.mxu0
      %701 = vrot.lane.b32.xlu0 %v475, 8
      %v702 = vpop.permute.xlu0 %701
      %705 = vrot.lane.b32.xlu0 %v585, 16
      %v706 = vpop.permute.xlu0 %705
      %709 = vrot.lane.b32.xlu0 %v695, 24
      %v710 = vpop.permute.xlu0 %709
      %v712 = vsel %vm257, %v358, %v702
      %vm713 = vcmask 130048
      %v714 = vsel %vm713, %v712, %v706
      %vm715 = vcmask 195584
      %v716 = vsel %vm715, %v714, %v710
      %v717 = vpack.c.bf16 %v716, %v716
      %vm718 = vcmask 257024
      %719 = vst.msk [vmem:[%s240] sm:$0xf] %vm718, %v717
      %p720 = scmp.lt.s32.totalorder %s15, 1
      %s721 = scalar_select %p720, %s15, 1
      %s722 = smul.addr %s721, 4
      %s723 = scalar_lea.vmem %s4, %s722
      // Predicated region
      $region37: #{bart_forward_dense.41} parent=35 // pred_check
        %p724 = pneg %p137
      $region38: #{bart_forward_dense.41} parent=35 // pred_check_branch
        %726 = sbr.rel (%p724) target = $region40
      $region39: #{bart_forward_dense.41} parent=35 // pred_region
        _
      $region40: #{bart_forward_dense.41} parent=35 // pred_fallthru
        _
    $region36: #{bart_forward_dense.41} parent=5 // pred_fallthru
      _
    %p727 = scmp.le.s32.totalorder 2, %s10
    // Predicated region
    $region41: #{bart_forward_dense.41} parent=5 // pred_check
      %p728 = pneg %p727
    $region42: #{bart_forward_dense.41} parent=5 // pred_check_branch
      %730 = sbr.rel (%p728) target = $region44
    $region43: #{bart_forward_dense.41} parent=5 // pred_region
      %s731 = ssub.s32 %s10, 2
      // Predicated region
      $region45: #{bart_forward_dense.41} parent=43 // pred_check
        %p732 = pneg %p143
      $region46: #{bart_forward_dense.41} parent=43 // pred_check_branch
        %734 = sbr.rel (%p732) target = $region48
      $region47: #{bart_forward_dense.41} parent=43 // pred_region
        %p735 = scmp.lt.s32.totalorder %s16, 1
        %s736 = scalar_select %p735, %s16, 1
        %s737 = smul.addr %s736, 4
        %s738 = scalar_lea.vmem %s4, %s737
      $region48: #{bart_forward_dense.41} parent=43 // pred_fallthru
        _
    $region44: #{bart_forward_dense.41} parent=5 // pred_fallthru
      _
  $region6: #{bart_forward_dense.41} parent=0 // loop_footer
    %s14 = sadd.s32 1, %s10
  $region7: #{bart_forward_dense.41} parent=0 // loop_footer_branch
    %9 = sbr.rel target = $region3
  $region8: #{bart_forward_dense.41} parent=0 // loop_exit
    _

// kernel: bart_forward_dense.45
$region0: #{bart_forward_dense.45}
  #allocation0 [shape = 'u32[]', space=smem, size = 0x4, offset = 0x4, fixed_abs, tag = 'smem constant byte address 0x4 - core index']
  #allocation1 [shape = 'u32[144,128]{1,0:T(1,128)}', space=vmem, size = 0x12000, scoped, tag = 'internal scratch']
  %s0 = inlined_call_operand.vmem [shape: bf16[16,128], index: 0, kind: input, shape index: {}]
  %s1 = inlined_call_operand.vmem [shape: bf16[128,32], index: 1, kind: input, shape index: {}]
  %s2 = inlined_call_operand.vmem [shape: bf16[1,32], index: 2, kind: input, shape index: {}]
  %s3 = inlined_call_operand.vmem [shape: bf16[16,32], index: 3, kind: output, shape index: {}]
  %s4 = sld [smem:[#allocation0]]
  $region22: #{bart_forward_dense.45} parent=0
    _
  %s6 = ssub.s32 1, %s4
  %s7 = scalar_select 0, %s6, %s4
  // Predicated region
  $region2: #{bart_forward_dense.45} parent=0 // pred_check
    _
  $region3: #{bart_forward_dense.45} parent=0 // pred_check_branch
    %9 = sbr.rel (0) target = $region5
  $region4: #{bart_forward_dense.45} parent=0 // pred_region
    _
  $region5: #{bart_forward_dense.45} parent=0 // pred_fallthru
    _
  // Predicated region
  $region6: #{bart_forward_dense.45} parent=0 // pred_check
    _
  $region7: #{bart_forward_dense.45} parent=0 // pred_check_branch
    %11 = sbr.rel (0) target = $region9
  $region8: #{bart_forward_dense.45} parent=0 // pred_region
    _
  $region9: #{bart_forward_dense.45} parent=0 // pred_fallthru
    _
  // Predicated region
  $region10: #{bart_forward_dense.45} parent=0 // pred_check
    _
  $region11: #{bart_forward_dense.45} parent=0 // pred_check_branch
    %13 = sbr.rel (0) target = $region13
  $region12: #{bart_forward_dense.45} parent=0 // pred_region
    _
  $region13: #{bart_forward_dense.45} parent=0 // pred_fallthru
    _
  %v15 = vld [vmem:[%s0] sm:$0xf]
  %v16 = vld [vmem:[%s0 + $0x4] sm:$0xf]
  %v17 = vld [vmem:[%s1] sm:$0xf]
  %v18 = vld [vmem:[%s1 + $0x4] sm:$0xf]
  %v19 = vld [vmem:[%s1 + $0x8] sm:$0xf]
  %v20 = vld [vmem:[%s1 + $0xc] sm:$0xf]
  %v21 = vld [vmem:[%s1 + $0x10] sm:$0xf]
  %v22 = vld [vmem:[%s1 + $0x14] sm:$0xf]
  %v23 = vld [vmem:[%s1 + $0x18] sm:$0xf]
  %v24 = vld [vmem:[%s1 + $0x1c] sm:$0xf]
  %v25 = vld [vmem:[%s1 + $0x20] sm:$0xf]
  %v26 = vld [vmem:[%s1 + $0x24] sm:$0xf]
  %v27 = vld [vmem:[%s1 + $0x28] sm:$0xf]
  %v28 = vld [vmem:[%s1 + $0x2c] sm:$0xf]
  %v29 = vld [vmem:[%s1 + $0x30] sm:$0xf]
  %v30 = vld [vmem:[%s1 + $0x34] sm:$0xf]
  %v31 = vld [vmem:[%s1 + $0x38] sm:$0xf]
  %v32 = vld [vmem:[%s1 + $0x3c] sm:$0xf]
  %v33 = vld [vmem:[%s2] sm:$0x1]
  %v34 = vunpack.c.l.bf16 %v33
  %v35 = vlaneseq
  %v36 = vshrl.u32 %v35, 7
  %v37 = vsub.s32 0, %v36
  %v38 = vrot.slane %v34, %v37
  %v41 = vunpack.c.l.b16 %v15
  %v42 = vunpack.c.l.b16 %v16
  %v43 = vpack.c.b16 %v42, %v41
  %v61 = vunpack.c.l.b16 %v17
  %v62 = vunpack.c.l.b16 %v18
  %v63 = vunpack.c.l.b16 %v19
  %v64 = vunpack.c.l.b16 %v20
  %v65 = vunpack.c.l.b16 %v21
  %v66 = vunpack.c.l.b16 %v22
  %v67 = vunpack.c.l.b16 %v23
  %v68 = vunpack.c.l.b16 %v24
  %v69 = vunpack.c.l.b16 %v25
  %v70 = vunpack.c.l.b16 %v26
  %v71 = vunpack.c.l.b16 %v27
  %v72 = vunpack.c.l.b16 %v28
  %v73 = vunpack.c.l.b16 %v29
  %v74 = vunpack.c.l.b16 %v30
  %v75 = vunpack.c.l.b16 %v31
  %v76 = vunpack.c.l.b16 %v32
  %v77 = vpack.c.b16 %v62, %v61
  %v78 = vpack.c.b16 %v64, %v63
  %v79 = vpack.c.b16 %v66, %v65
  %v80 = vpack.c.b16 %v68, %v67
  %v81 = vpack.c.b16 %v70, %v69
  %v82 = vpack.c.b16 %v72, %v71
  %v83 = vpack.c.b16 %v74, %v73
  %v84 = vpack.c.b16 %v76, %v75
  %93 = vmatprep.subr.bf16.mxu0 0
  %94 = vmatpush1.bf16.msra.mxu0 %v77
  %95 = vmatprep.subr.bf16.mxu0 0
  %96 = vmatpush1.bf16.msra.mxu0 %v78
  %97 = vmatprep.subr.bf16.mxu0 0
  %98 = vmatpush1.bf16.msra.mxu0 %v79
  %99 = vmatprep.subr.bf16.mxu0 0
  %100 = vmatpush1.bf16.msra.mxu0 %v80
  %101 = vmatprep.subr.bf16.mxu0 0
  %102 = vmatpush1.bf16.msra.mxu0 %v81
  %103 = vmatprep.subr.bf16.mxu0 0
  %104 = vmatpush1.bf16.msra.mxu0 %v82
  %105 = vmatprep.subr.bf16.mxu0 0
  %106 = vmatpush1.bf16.msra.mxu0 %v83
  %107 = vmatprep.subr.bf16.mxu0 0
  %108 = vmatpush1.bf16.msra.mxu0 %v84
  %109 = vmatprep.subr.bf16.mxu0 0
  %110 = vmatpush1.bf16.msra.mxu0 0
  %111 = vmatprep.subr.bf16.mxu0 0
  %112 = vmatpush1.bf16.msra.mxu0 0
  %113 = vmatprep.subr.bf16.mxu0 0
  %114 = vmatpush1.bf16.msra.mxu0 0
  %115 = vmatprep.subr.bf16.mxu0 0
  %116 = vmatpush1.bf16.msra.mxu0 0
  %117 = vmatprep.subr.bf16.mxu0 0
  %118 = vmatpush1.bf16.msra.mxu0 0
  %119 = vmatprep.subr.bf16.mxu0 0
  %120 = vmatpush1.bf16.msra.mxu0 0
  %121 = vmatprep.subr.bf16.mxu0 0
  %122 = vmatpush1.bf16.msra.mxu0 0
  %123 = vmatprep.subr.bf16.mxu0 0
  %124 = vmatpush1.bf16.msra.mxu0 0
  %125 = vmatprep.mubr.bf16.mxu0 0
  %126 = vmatmul.mubr.bf16.gmra.mrb[0].mxu0 %v43
  %v127 = vpop.f32.mrb[0].mxu0
  %v128 = vadd.f32 %v38, %v127
  %v129 = vpop.f32.mrb[0].mxu0
  %v130 = vpop.f32.mrb[0].mxu0
  %v131 = vadd.f32 %v38, %v130
  %v132 = vpop.f32.mrb[0].mxu0
  %133 = vdwg.mxu0
  %v134 = vpack.c.bf16 %v131, %v128
  %v136 = vunpack.c.l.b16 %v134
  %v137 = vunpack.c.h.b16 %v134
  %v138 = vpack.c.b16 %v136, %v136
  %v139 = vpack.c.b16 %v137, %v137
  %vm142 = vcmask 257024
  %143 = vst.msk [vmem:[%s3] sm:$0xf] %vm142, %v138
  %144 = vst.msk [vmem:[%s3 + $0x4] sm:$0xf] %vm142, %v139
  // Predicated region
  $region14: #{bart_forward_dense.45} parent=0 // pred_check
    _
  $region15: #{bart_forward_dense.45} parent=0 // pred_check_branch
    %146 = sbr.rel (0) target = $region17
  $region16: #{bart_forward_dense.45} parent=0 // pred_region
    _
  $region17: #{bart_forward_dense.45} parent=0 // pred_fallthru
    _
  // Predicated region
  $region18: #{bart_forward_dense.45} parent=0 // pred_check
    _
  $region19: #{bart_forward_dense.45} parent=0 // pred_check_branch
    %148 = sbr.rel (0) target = $region21
  $region20: #{bart_forward_dense.45} parent=0 // pred_region
    _
  $region21: #{bart_forward_dense.45} parent=0 // pred_fallthru
    _

// kernel: bart_forward_dense.59
$region0: #{bart_forward_dense.59}
  #allocation0 [shape = 'u32[]', space=smem, size = 0x4, offset = 0x4, fixed_abs, tag = 'smem constant byte address 0x4 - core index']
  #allocation1 [shape = 'u32[144,128]{1,0:T(1,128)}', space=vmem, size = 0x12000, scoped, tag = 'internal scratch']
  %s0 = inlined_call_operand.vmem [shape: bf16[16,32], index: 0, kind: input, shape index: {}]
  %s1 = inlined_call_operand.vmem [shape: bf16[32,64], index: 1, kind: input, shape index: {}]
  %s2 = inlined_call_operand.vmem [shape: bf16[1,64], index: 2, kind: input, shape index: {}]
  %s3 = inlined_call_operand.vmem [shape: bf16[16,64], index: 3, kind: output, shape index: {}]
  %s4 = sld [smem:[#allocation0]]
  $region22: #{bart_forward_dense.59} parent=0
    _
  %s6 = ssub.s32 1, %s4
  %s7 = scalar_select 0, %s6, %s4
  // Predicated region
  $region2: #{bart_forward_dense.59} parent=0 // pred_check
    _
  $region3: #{bart_forward_dense.59} parent=0 // pred_check_branch
    %9 = sbr.rel (0) target = $region5
  $region4: #{bart_forward_dense.59} parent=0 // pred_region
    _
  $region5: #{bart_forward_dense.59} parent=0 // pred_fallthru
    _
  // Predicated region
  $region6: #{bart_forward_dense.59} parent=0 // pred_check
    _
  $region7: #{bart_forward_dense.59} parent=0 // pred_check_branch
    %11 = sbr.rel (0) target = $region9
  $region8: #{bart_forward_dense.59} parent=0 // pred_region
    _
  $region9: #{bart_forward_dense.59} parent=0 // pred_fallthru
    _
  // Predicated region
  $region10: #{bart_forward_dense.59} parent=0 // pred_check
    _
  $region11: #{bart_forward_dense.59} parent=0 // pred_check_branch
    %13 = sbr.rel (0) target = $region13
  $region12: #{bart_forward_dense.59} parent=0 // pred_region
    _
  $region13: #{bart_forward_dense.59} parent=0 // pred_fallthru
    _
  %v15 = vld [vmem:[%s0] sm:$0xf]
  %v16 = vld [vmem:[%s0 + $0x4] sm:$0xf]
  %v17 = vld [vmem:[%s1] sm:$0xf]
  %v18 = vld [vmem:[%s1 + $0x4] sm:$0xf]
  %v19 = vld [vmem:[%s1 + $0x8] sm:$0xf]
  %v20 = vld [vmem:[%s1 + $0xc] sm:$0xf]
  %v21 = vld [vmem:[%s2] sm:$0x1]
  %v22 = vunpack.c.l.bf16 %v21
  %v23 = vlaneseq
  %v24 = vshrl.u32 %v23, 7
  %v25 = vsub.s32 0, %v24
  %v26 = vrot.slane %v22, %v25
  %v29 = vunpack.c.l.b16 %v15
  %v30 = vunpack.c.l.b16 %v16
  %v31 = vpack.c.b16 %v30, %v29
  %v36 = vunpack.c.l.b16 %v17
  %v37 = vunpack.c.l.b16 %v18
  %v38 = vunpack.c.l.b16 %v19
  %v39 = vunpack.c.l.b16 %v20
  %v40 = vpack.c.b16 %v37, %v36
  %v41 = vpack.c.b16 %v39, %v38
  %vm44 = vcmask 261120
  %v46 = vsel %vm44, %v31, 0
  %48 = vmatprep.subr.bf16.mxu0 0
  %49 = vmatpush1.bf16.msra.mxu0 %v40
  %50 = vmatprep.subr.bf16.mxu0 0
  %51 = vmatpush1.bf16.msra.mxu0 %v41
  %52 = vmatprep.subr.bf16.mxu0 0
  %53 = vmatpush1.bf16.msra.mxu0 0
  %54 = vmatprep.subr.bf16.mxu0 0
  %55 = vmatpush1.bf16.msra.mxu0 0
  %56 = vmatprep.subr.bf16.mxu0 0
  %57 = vmatpush1.bf16.msra.mxu0 0
  %58 = vmatprep.subr.bf16.mxu0 0
  %59 = vmatpush1.bf16.msra.mxu0 0
  %60 = vmatprep.subr.bf16.mxu0 0
  %61 = vmatpush1.bf16.msra.mxu0 0
  %62 = vmatprep.subr.bf16.mxu0 0
  %63 = vmatpush1.bf16.msra.mxu0 0
  %64 = vmatprep.subr.bf16.mxu0 0
  %65 = vmatpush1.bf16.msra.mxu0 0
  %66 = vmatprep.subr.bf16.mxu0 0
  %67 = vmatpush1.bf16.msra.mxu0 0
  %68 = vmatprep.subr.bf16.mxu0 0
  %69 = vmatpush1.bf16.msra.mxu0 0
  %70 = vmatprep.subr.bf16.mxu0 0
  %71 = vmatpush1.bf16.msra.mxu0 0
  %72 = vmatprep.subr.bf16.mxu0 0
  %73 = vmatpush1.bf16.msra.mxu0 0
  %74 = vmatprep.subr.bf16.mxu0 0
  %75 = vmatpush1.bf16.msra.mxu0 0
  %76 = vmatprep.subr.bf16.mxu0 0
  %77 = vmatpush1.bf16.msra.mxu0 0
  %78 = vmatprep.subr.bf16.mxu0 0
  %79 = vmatpush1.bf16.msra.mxu0 0
  %80 = vmatprep.mubr.bf16.mxu0 0
  %81 = vmatmul.mubr.bf16.gmra.mrb[0].mxu0 %v46
  %v82 = vpop.f32.mrb[0].mxu0
  %v83 = vadd.f32 %v26, %v82
  %v84 = vpop.f32.mrb[0].mxu0
  %v85 = vpop.f32.mrb[0].mxu0
  %v86 = vadd.f32 %v26, %v85
  %v87 = vpop.f32.mrb[0].mxu0
  %88 = vdwg.mxu0
  %v89 = vpack.c.bf16 %v86, %v83
  %v91 = vunpack.c.l.b16 %v89
  %v92 = vunpack.c.h.b16 %v89
  %v93 = vpack.c.b16 %v91, %v91
  %v94 = vpack.c.b16 %v92, %v92
  %vm97 = vcmask 519168
  %98 = vst.msk [vmem:[%s3] sm:$0xf] %vm97, %v93
  %99 = vst.msk [vmem:[%s3 + $0x4] sm:$0xf] %vm97, %v94
  // Predicated region
  $region14: #{bart_forward_dense.59} parent=0 // pred_check
    _
  $region15: #{bart_forward_dense.59} parent=0 // pred_check_branch
    %101 = sbr.rel (0) target = $region17
  $region16: #{bart_forward_dense.59} parent=0 // pred_region
    _
  $region17: #{bart_forward_dense.59} parent=0 // pred_fallthru
    _
  // Predicated region
  $region18: #{bart_forward_dense.59} parent=0 // pred_check
    _
  $region19: #{bart_forward_dense.59} parent=0 // pred_check_branch
    %103 = sbr.rel (0) target = $region21
  $region20: #{bart_forward_dense.59} parent=0 // pred_region
    _
  $region21: #{bart_forward_dense.59} parent=0 // pred_fallthru
    _

// kernel: bart_forward_dense.44
$region0: #{bart_forward_dense.44}
  #allocation0 [shape = 'u32[]', space=smem, size = 0x4, offset = 0x4, fixed_abs, tag = 'smem constant byte address 0x4 - core index']
  #allocation1 [shape = 'u32[144,128]{1,0:T(1,128)}', space=vmem, size = 0x12000, scoped, tag = 'internal scratch']
  %s0 = inlined_call_operand.vmem [shape: bf16[16,32], index: 0, kind: input, shape index: {}]
  %s1 = inlined_call_operand.vmem [shape: bf16[32,128], index: 1, kind: input, shape index: {}]
  %s2 = inlined_call_operand.vmem [shape: bf16[1,128], index: 2, kind: input, shape index: {}]
  %s3 = inlined_call_operand.vmem [shape: bf16[16,128], index: 3, kind: output, shape index: {}]
  %s4 = sld [smem:[#allocation0]]
  $region22: #{bart_forward_dense.44} parent=0
    _
  %s6 = ssub.s32 1, %s4
  %s7 = scalar_select 0, %s6, %s4
  // Predicated region
  $region2: #{bart_forward_dense.44} parent=0 // pred_check
    _
  $region3: #{bart_forward_dense.44} parent=0 // pred_check_branch
    %9 = sbr.rel (0) target = $region5
  $region4: #{bart_forward_dense.44} parent=0 // pred_region
    _
  $region5: #{bart_forward_dense.44} parent=0 // pred_fallthru
    _
  // Predicated region
  $region6: #{bart_forward_dense.44} parent=0 // pred_check
    _
  $region7: #{bart_forward_dense.44} parent=0 // pred_check_branch
    %11 = sbr.rel (0) target = $region9
  $region8: #{bart_forward_dense.44} parent=0 // pred_region
    _
  $region9: #{bart_forward_dense.44} parent=0 // pred_fallthru
    _
  // Predicated region
  $region10: #{bart_forward_dense.44} parent=0 // pred_check
    _
  $region11: #{bart_forward_dense.44} parent=0 // pred_check_branch
    %13 = sbr.rel (0) target = $region13
  $region12: #{bart_forward_dense.44} parent=0 // pred_region
    _
  $region13: #{bart_forward_dense.44} parent=0 // pred_fallthru
    _
  %v15 = vld [vmem:[%s0] sm:$0xf]
  %v16 = vld [vmem:[%s0 + $0x4] sm:$0xf]
  %v17 = vld [vmem:[%s1] sm:$0xf]
  %v18 = vld [vmem:[%s1 + $0x4] sm:$0xf]
  %v19 = vld [vmem:[%s1 + $0x8] sm:$0xf]
  %v20 = vld [vmem:[%s1 + $0xc] sm:$0xf]
  %v21 = vld [vmem:[%s2] sm:$0x1]
  %v22 = vunpack.c.l.bf16 %v21
  %v23 = vlaneseq
  %v24 = vshrl.u32 %v23, 7
  %v25 = vsub.s32 0, %v24
  %v26 = vrot.slane %v22, %v25
  %v29 = vunpack.c.l.b16 %v15
  %v30 = vunpack.c.l.b16 %v16
  %v31 = vpack.c.b16 %v30, %v29
  %v36 = vunpack.c.l.b16 %v17
  %v37 = vunpack.c.l.b16 %v18
  %v38 = vunpack.c.l.b16 %v19
  %v39 = vunpack.c.l.b16 %v20
  %v40 = vpack.c.b16 %v37, %v36
  %v41 = vpack.c.b16 %v39, %v38
  %vm44 = vcmask 261120
  %v46 = vsel %vm44, %v31, 0
  %48 = vmatprep.subr.bf16.mxu0 0
  %49 = vmatpush1.bf16.msra.mxu0 %v40
  %50 = vmatprep.subr.bf16.mxu0 0
  %51 = vmatpush1.bf16.msra.mxu0 %v41
  %52 = vmatprep.subr.bf16.mxu0 0
  %53 = vmatpush1.bf16.msra.mxu0 0
  %54 = vmatprep.subr.bf16.mxu0 0
  %55 = vmatpush1.bf16.msra.mxu0 0
  %56 = vmatprep.subr.bf16.mxu0 0
  %57 = vmatpush1.bf16.msra.mxu0 0
  %58 = vmatprep.subr.bf16.mxu0 0
  %59 = vmatpush1.bf16.msra.mxu0 0
  %60 = vmatprep.subr.bf16.mxu0 0
  %61 = vmatpush1.bf16.msra.mxu0 0
  %62 = vmatprep.subr.bf16.mxu0 0
  %63 = vmatpush1.bf16.msra.mxu0 0
  %64 = vmatprep.subr.bf16.mxu0 0
  %65 = vmatpush1.bf16.msra.mxu0 0
  %66 = vmatprep.subr.bf16.mxu0 0
  %67 = vmatpush1.bf16.msra.mxu0 0
  %68 = vmatprep.subr.bf16.mxu0 0
  %69 = vmatpush1.bf16.msra.mxu0 0
  %70 = vmatprep.subr.bf16.mxu0 0
  %71 = vmatpush1.bf16.msra.mxu0 0
  %72 = vmatprep.subr.bf16.mxu0 0
  %73 = vmatpush1.bf16.msra.mxu0 0
  %74 = vmatprep.subr.bf16.mxu0 0
  %75 = vmatpush1.bf16.msra.mxu0 0
  %76 = vmatprep.subr.bf16.mxu0 0
  %77 = vmatpush1.bf16.msra.mxu0 0
  %78 = vmatprep.subr.bf16.mxu0 0
  %79 = vmatpush1.bf16.msra.mxu0 0
  %80 = vmatprep.mubr.bf16.mxu0 0
  %81 = vmatmul.mubr.bf16.gmra.mrb[0].mxu0 %v46
  %v82 = vpop.f32.mrb[0].mxu0
  %v83 = vadd.f32 %v26, %v82
  %v84 = vpop.f32.mrb[0].mxu0
  %v85 = vpop.f32.mrb[0].mxu0
  %v86 = vadd.f32 %v26, %v85
  %v87 = vpop.f32.mrb[0].mxu0
  %88 = vdwg.mxu0
  %v89 = vmax.f32 %v83, 0.0
  %v90 = vmax.f32 %v86, 0.0
  %v91 = vpack.c.bf16 %v90, %v89
  %v93 = vunpack.c.l.b16 %v91
  %v94 = vunpack.c.h.b16 %v91
  %v95 = vpack.c.b16 %v93, %v93
  %v96 = vpack.c.b16 %v94, %v94
  %99 = vst [vmem:[%s3] sm:$0xf] %v95
  %100 = vst [vmem:[%s3 + $0x4] sm:$0xf] %v96
  // Predicated region
  $region14: #{bart_forward_dense.44} parent=0 // pred_check
    _
  $region15: #{bart_forward_dense.44} parent=0 // pred_check_branch
    %102 = sbr.rel (0) target = $region17
  $region16: #{bart_forward_dense.44} parent=0 // pred_region
    _
  $region17: #{bart_forward_dense.44} parent=0 // pred_fallthru
    _
  // Predicated region
  $region18: #{bart_forward_dense.44} parent=0 // pred_check
    _
  $region19: #{bart_forward_dense.44} parent=0 // pred_check_branch
    %104 = sbr.rel (0) target = $region21
  $region20: #{bart_forward_dense.44} parent=0 // pred_region
    _
  $region21: #{bart_forward_dense.44} parent=0 // pred_fallthru
    _

// kernel: bart_forward_dense.55
$region0: #{bart_forward_dense.55}
  #allocation0 [shape = 'u32[]', space=smem, size = 0x4, offset = 0x4, fixed_abs, tag = 'smem constant byte address 0x4 - core index']
  #allocation1 [shape = 'u32[144,128]{1,0:T(1,128)}', space=vmem, size = 0x12000, scoped, tag = 'internal scratch']
  %s0 = inlined_call_operand.vmem [shape: bf16[2,8,32], index: 0, kind: input, shape index: {}]
  %s1 = inlined_call_operand.vmem [shape: bf16[2,8,32], index: 1, kind: input, shape index: {}]
  %s2 = inlined_call_operand.vmem [shape: bf16[2,8,32], index: 2, kind: input, shape index: {}]
  %s3 = inlined_call_operand.vmem [shape: s32[2,1,8], index: 3, kind: input, shape index: {}]
  %s4 = inlined_call_operand.vmem [shape: bf16[2,8,32], index: 4, kind: output, shape index: {}]
  %s5 = sld [smem:[#allocation0]]
  $region49: #{bart_forward_dense.55} parent=0
    _
  %s7 = ssub.s32 1, %s5
  %s8 = scalar_select 0, %s7, %s5
  loop: start=0, step=1, limit=4
  $region2: #{bart_forward_dense.55} parent=0 // loop_pre_header
    _
  $region3: #{bart_forward_dense.55} parent=0 // loop_header
    %s10 = sphi 0, %s14
    %p11 = scmp.ge.s32.totalorder %s10, 4
    %s20 = sphi 0, %s22
    %s23 = sphi 0, %s20
    %s24 = sphi 0, %s23
    %s40 = sphi 0, %s24
    %s46 = sphi 0, %s48
    %s49 = sphi 0, %s46
    %s50 = sphi 0, %s49
    %s66 = sphi 0, %s50
    %s72 = sphi 0, %s74
    %s75 = sphi 0, %s72
    %s76 = sphi 0, %s75
    %s92 = sphi 0, %s76
    %s98 = sphi 0, %s100
    %s101 = sphi 0, %s98
    %s102 = sphi 0, %s101
    %s118 = sphi 0, %s102
    %s124 = sphi 0, %s126
    %s127 = sphi 0, %s124
    %s128 = sphi 0, %s127
    %s144 = sphi 0, %s128
  $region4: #{bart_forward_dense.55} parent=0 // loop_header_branch
    %13 = sbr.rel (%p11) target = $region8
  $region5: #{bart_forward_dense.55} parent=0 // loop_body
    %s15 = ssub.s32 %s10, 1
    %s16 = ssub.s32 %s10, 2
    %s17 = sadd.s32 %s10, 1
    %s18 = ssub.s32 %s10, %s17
    %p19 = scmp.eq.s32.totalorder %s18, 0
    %s21 = sadd.s32 %s20, 1
    %s22 = scalar_select %p19, %s20, %s21
    %p25 = pneg %p19
    %p26 = scmp.eq.s32.totalorder %s10, 1
    %p27 = por %p25, %p26
    %p28 = scmp.ne.s32.totalorder %s20, %s23
    %p29 = scmp.eq.s32.totalorder %s10, 0
    %p30 = por %p28, %p29
    %p31 = scmp.ne.s32.totalorder %s20, %s23
    %p32 = scmp.eq.s32.totalorder %s15, 1
    %p33 = por %p31, %p32
    %p34 = scmp.ne.s32.totalorder %s23, %s24
    %p35 = scmp.eq.s32.totalorder %s15, 0
    %p36 = por %p34, %p35
    %p37 = scmp.ne.s32.totalorder %s23, %s24
    %p38 = scmp.eq.s32.totalorder %s16, 1
    %p39 = por %p37, %p38
    %p41 = scmp.ne.s32.totalorder %s24, %s40
    %p42 = scmp.eq.s32.totalorder %s16, 0
    %p43 = por %p41, %p42
    %s44 = ssub.s32 %s10, %s17
    %p45 = scmp.eq.s32.totalorder %s44, 0
    %s47 = sadd.s32 %s46, 1
    %s48 = scalar_select %p45, %s46, %s47
    %p51 = pneg %p45
    %p52 = scmp.eq.s32.totalorder %s10, 1
    %p53 = por %p51, %p52
    %p54 = scmp.ne.s32.totalorder %s46, %s49
    %p55 = scmp.eq.s32.totalorder %s10, 0
    %p56 = por %p54, %p55
    %p57 = scmp.ne.s32.totalorder %s46, %s49
    %p58 = scmp.eq.s32.totalorder %s15, 1
    %p59 = por %p57, %p58
    %p60 = scmp.ne.s32.totalorder %s49, %s50
    %p61 = scmp.eq.s32.totalorder %s15, 0
    %p62 = por %p60, %p61
    %p63 = scmp.ne.s32.totalorder %s49, %s50
    %p64 = scmp.eq.s32.totalorder %s16, 1
    %p65 = por %p63, %p64
    %p67 = scmp.ne.s32.totalorder %s50, %s66
    %p68 = scmp.eq.s32.totalorder %s16, 0
    %p69 = por %p67, %p68
    %s70 = ssub.s32 %s10, %s17
    %p71 = scmp.eq.s32.totalorder %s70, 0
    %s73 = sadd.s32 %s72, 1
    %s74 = scalar_select %p71, %s72, %s73
    %p77 = pneg %p71
    %p78 = scmp.eq.s32.totalorder %s10, 1
    %p79 = por %p77, %p78
    %p80 = scmp.ne.s32.totalorder %s72, %s75
    %p81 = scmp.eq.s32.totalorder %s10, 0
    %p82 = por %p80, %p81
    %p83 = scmp.ne.s32.totalorder %s72, %s75
    %p84 = scmp.eq.s32.totalorder %s15, 1
    %p85 = por %p83, %p84
    %p86 = scmp.ne.s32.totalorder %s75, %s76
    %p87 = scmp.eq.s32.totalorder %s15, 0
    %p88 = por %p86, %p87
    %p89 = scmp.ne.s32.totalorder %s75, %s76
    %p90 = scmp.eq.s32.totalorder %s16, 1
    %p91 = por %p89, %p90
    %p93 = scmp.ne.s32.totalorder %s76, %s92
    %p94 = scmp.eq.s32.totalorder %s16, 0
    %p95 = por %p93, %p94
    %s96 = ssub.s32 %s10, %s17
    %p97 = scmp.eq.s32.totalorder %s96, 0
    %s99 = sadd.s32 %s98, 1
    %s100 = scalar_select %p97, %s98, %s99
    %p103 = pneg %p97
    %p104 = scmp.eq.s32.totalorder %s10, 1
    %p105 = por %p103, %p104
    %p106 = scmp.ne.s32.totalorder %s98, %s101
    %p107 = scmp.eq.s32.totalorder %s10, 0
    %p108 = por %p106, %p107
    %p109 = scmp.ne.s32.totalorder %s98, %s101
    %p110 = scmp.eq.s32.totalorder %s15, 1
    %p111 = por %p109, %p110
    %p112 = scmp.ne.s32.totalorder %s101, %s102
    %p113 = scmp.eq.s32.totalorder %s15, 0
    %p114 = por %p112, %p113
    %p115 = scmp.ne.s32.totalorder %s101, %s102
    %p116 = scmp.eq.s32.totalorder %s16, 1
    %p117 = por %p115, %p116
    %p119 = scmp.ne.s32.totalorder %s102, %s118
    %p120 = scmp.eq.s32.totalorder %s16, 0
    %p121 = por %p119, %p120
    %s122 = ssub.s32 %s10, %s17
    %p123 = scmp.eq.s32.totalorder %s122, 0
    %s125 = sadd.s32 %s124, 1
    %s126 = scalar_select %p123, %s124, %s125
    %p129 = pneg %p123
    %p130 = scmp.eq.s32.totalorder %s10, 1
    %p131 = por %p129, %p130
    %p132 = scmp.ne.s32.totalorder %s124, %s127
    %p133 = scmp.eq.s32.totalorder %s10, 0
    %p134 = por %p132, %p133
    %p135 = scmp.ne.s32.totalorder %s124, %s127
    %p136 = scmp.eq.s32.totalorder %s15, 1
    %p137 = por %p135, %p136
    %p138 = scmp.ne.s32.totalorder %s127, %s128
    %p139 = scmp.eq.s32.totalorder %s15, 0
    %p140 = por %p138, %p139
    %p141 = scmp.ne.s32.totalorder %s127, %s128
    %p142 = scmp.eq.s32.totalorder %s16, 1
    %p143 = por %p141, %p142
    %p145 = scmp.ne.s32.totalorder %s128, %s144
    %p146 = scmp.eq.s32.totalorder %s16, 0
    %p147 = por %p145, %p146
    %p148 = scmp.le.s32.totalorder 1, %s10
    %p149 = scmp.lt.s32.totalorder %s10, 3
    %p150 = pnand %p148, %p149
    %p151 = pneg %p150
    // Predicated region
    $region9: #{bart_forward_dense.55} parent=5 // pred_check
      _
    $region10: #{bart_forward_dense.55} parent=5 // pred_check_branch
      %153 = sbr.rel (%p150) target = $region12
    $region11: #{bart_forward_dense.55} parent=5 // pred_region
      %s154 = ssub.s32 %s10, 1
    $region12: #{bart_forward_dense.55} parent=5 // pred_fallthru
      _
    %p155 = scmp.lt.s32.totalorder %s10, 2
    // Predicated region
    $region13: #{bart_forward_dense.55} parent=5 // pred_check
      %p156 = pneg %p155
    $region14: #{bart_forward_dense.55} parent=5 // pred_check_branch
      %158 = sbr.rel (%p156) target = $region16
    $region15: #{bart_forward_dense.55} parent=5 // pred_region
      // Predicated region
      $region17: #{bart_forward_dense.55} parent=15 // pred_check
        %p159 = pneg %p30
      $region18: #{bart_forward_dense.55} parent=15 // pred_check_branch
        %161 = sbr.rel (%p159) target = $region20
      $region19: #{bart_forward_dense.55} parent=15 // pred_region
        %p162 = scmp.lt.s32.totalorder %s10, 1
        %s163 = scalar_select %p162, %s10, 1
        %s164 = smul.addr %s163, 4
        %s165 = scalar_lea.vmem %s0, %s164
      $region20: #{bart_forward_dense.55} parent=15 // pred_fallthru
        _
      // Predicated region
      $region21: #{bart_forward_dense.55} parent=15 // pred_check
        %p166 = pneg %p56
      $region22: #{bart_forward_dense.55} parent=15 // pred_check_branch
        %168 = sbr.rel (%p166) target = $region24
      $region23: #{bart_forward_dense.55} parent=15 // pred_region
        %p169 = scmp.lt.s32.totalorder %s10, 1
        %s170 = scalar_select %p169, %s10, 1
        %s171 = smul.addr %s170, 4
        %s172 = scalar_lea.vmem %s1, %s171
      $region24: #{bart_forward_dense.55} parent=15 // pred_fallthru
        _
      // Predicated region
      $region25: #{bart_forward_dense.55} parent=15 // pred_check
        %p173 = pneg %p82
      $region26: #{bart_forward_dense.55} parent=15 // pred_check_branch
        %175 = sbr.rel (%p173) target = $region28
      $region27: #{bart_forward_dense.55} parent=15 // pred_region
        %p176 = scmp.lt.s32.totalorder %s10, 1
        %s177 = scalar_select %p176, %s10, 1
        %s178 = smul.addr %s177, 4
        %s179 = scalar_lea.vmem %s2, %s178
      $region28: #{bart_forward_dense.55} parent=15 // pred_fallthru
        _
      // Predicated region
      $region29: #{bart_forward_dense.55} parent=15 // pred_check
        %p180 = pneg %p108
      $region30: #{bart_forward_dense.55} parent=15 // pred_check_branch
        %182 = sbr.rel (%p180) target = $region32
      $region31: #{bart_forward_dense.55} parent=15 // pred_region
        %p183 = scmp.lt.s32.totalorder %s10, 1
        %s184 = scalar_select %p183, %s10, 1
        %s185 = scalar_lea.vmem %s3, %s184
      $region32: #{bart_forward_dense.55} parent=15 // pred_fallthru
        _
    $region16: #{bart_forward_dense.55} parent=5 // pred_fallthru
      _
    %p186 = scmp.le.s32.totalorder 1, %s10
    %p187 = scmp.lt.s32.totalorder %s10, 3
    %p188 = pnand %p186, %p187
    %p189 = pneg %p188
    // Predicated region
    $region33: #{bart_forward_dense.55} parent=5 // pred_check
      _
    $region34: #{bart_forward_dense.55} parent=5 // pred_check_branch
      %191 = sbr.rel (%p188) target = $region36
    $region35: #{bart_forward_dense.55} parent=5 // pred_region
      %s192 = ssub.s32 %s10, 1
      %p193 = scmp.lt.s32.totalorder %s15, 1
      %s194 = scalar_select %p193, %s15, 1
      %s195 = smul.addr %s194, 4
      %s196 = scalar_lea.vmem %s0, %s195
      %p197 = pneg %p36
      %p198 = pneg %p33
      %p199 = scmp.lt.s32.totalorder %s15, 1
      %s200 = scalar_select %p199, %s15, 1
      %s201 = smul.addr %s200, 4
      %s202 = scalar_lea.vmem %s1, %s201
      %p203 = pneg %p62
      %p204 = pneg %p59
      %p205 = scmp.lt.s32.totalorder %s15, 1
      %s206 = scalar_select %p205, %s15, 1
      %s207 = smul.addr %s206, 4
      %s208 = scalar_lea.vmem %s2, %s207
      %p209 = pneg %p88
      %p210 = pneg %p85
      %p211 = scmp.lt.s32.totalorder %s15, 1
      %s212 = scalar_select %p211, %s15, 1
      %s213 = scalar_lea.vmem %s3, %s212
      %p214 = pneg %p114
      %p215 = pneg %p111
      %p216 = pneg %p140
      %p217 = pneg %p137
      %p218 = scmp.lt.s32.totalorder %s15, 1
      %s219 = scalar_select %p218, %s15, 1
      %s220 = smul.addr %s219, 4
      %s221 = scalar_lea.vmem %s4, %s220
      %p222 = scmp.lt.s32.totalorder %s15, 1
      %s223 = scalar_select %p222, %s15, 1
      %s224 = smul.addr %s223, 4
      %s225 = scalar_lea.vmem %s0, %s224
      %p226 = scmp.lt.s32.totalorder %s15, 1
      %s227 = scalar_select %p226, %s15, 1
      %s228 = smul.addr %s227, 4
      %s229 = scalar_lea.vmem %s1, %s228
      %p230 = scmp.lt.s32.totalorder %s15, 1
      %s231 = scalar_select %p230, %s15, 1
      %s232 = smul.addr %s231, 4
      %s233 = scalar_lea.vmem %s2, %s232
      %p234 = scmp.lt.s32.totalorder %s15, 1
      %s235 = scalar_select %p234, %s15, 1
      %s236 = scalar_lea.vmem %s3, %s235
      %p237 = scmp.lt.s32.totalorder %s15, 1
      %s238 = scalar_select %p237, %s15, 1
      %s239 = smul.addr %s238, 4
      %s240 = scalar_lea.vmem %s4, %s239
      %v242 = vld [vmem:[%s225] sm:$0xf]
      %v243 = vld [vmem:[%s229] sm:$0xf]
      %v244 = vld [vmem:[%s233] sm:$0xf]
      %v245 = vunpack.c.l.bf16 %v242
      %v246 = vmul.f32 %v245, 0.35355338
      %v247 = vpack.c.bf16 %v246, %v246
      %v248 = vld [vmem:[%s236] sm:$0x1]
      %vm249 = vcmp.gt.s32.totalorder %v248, 0
      %v250 = vsel %vm249, 1, 0
      %v251 = vlaneseq
      %v252 = vshrl.u32 %v251, 7
      %v253 = vsub.s32 0, %v252
      %v254 = vrot.slane %v250, %v253
      %vm255 = vcmp.eq.s32.totalorder %v254, 1
      %v256 = vlaneseq
      %v257 = vshrl.u32 %v256, 7
      %v258 = vlaneseq
      %v259 = vand.u32 %v258, 127
      %vm260 = vcmp.le.s32.totalorder %v259, %v257
      %vm261 = vmand %vm255, %vm260
      %v262 = vsel %vm261, 0.0, -1e+09
      %vm263 = vcmask 64512
      %v265 = vsel %vm263, %v247, 0
      %v268 = vsel %vm263, %v243, 0
      %270 = vmatprep.subr.bf16.mxu0 0
      %271 = vmatpush1.bf16.xpose.msra.mxu0 %v268
      %272 = vmatprep.subr.bf16.mxu0 0
      %273 = vmatpush1.bf16.xpose.msra.mxu0 0
      %274 = vmatprep.subr.bf16.mxu0 0
      %275 = vmatpush1.bf16.xpose.msra.mxu0 0
      %276 = vmatprep.subr.bf16.mxu0 0
      %277 = vmatpush1.bf16.xpose.msra.mxu0 0
      %278 = vmatprep.subr.bf16.mxu0 0
      %279 = vmatpush1.bf16.xpose.msra.mxu0 0
      %280 = vmatprep.subr.bf16.mxu0 0
      %281 = vmatpush1.bf16.xpose.msra.mxu0 0
      %282 = vmatprep.subr.bf16.mxu0 0
      %283 = vmatpush1.bf16.xpose.msra.mxu0 0
      %284 = vmatprep.subr.bf16.mxu0 0
      %285 = vmatpush1.bf16.xpose.msra.mxu0 0
      %286 = vmatprep.subr.bf16.mxu0 0
      %287 = vmatpush1.bf16.xpose.msra.mxu0 0
      %288 = vmatprep.subr.bf16.mxu0 0
      %289 = vmatpush1.bf16.xpose.msra.mxu0 0
      %290 = vmatprep.subr.bf16.mxu0 0
      %291 = vmatpush1.bf16.xpose.msra.mxu0 0
      %292 = vmatprep.subr.bf16.mxu0 0
      %293 = vmatpush1.bf16.xpose.msra.mxu0 0
      %294 = vmatprep.subr.bf16.mxu0 0
      %295 = vmatpush1.bf16.xpose.msra.mxu0 0
      %296 = vmatprep.subr.bf16.mxu0 0
      %297 = vmatpush1.bf16.xpose.msra.mxu0 0
      %298 = vmatprep.subr.bf16.mxu0 0
      %299 = vmatpush1.bf16.xpose.msra.mxu0 0
      %300 = vmatprep.subr.bf16.mxu0 0
      %301 = vmatpush1.bf16.xpose.msra.mxu0 0
      %302 = vmatprep.mubr.bf16.mxu0 0
      %303 = vmatmul.mubr.bf16.gmra.mrb[0].mxu0 %v265
      %v304 = vpop.f32.mrb[0].mxu0
      %v305 = vadd.f32 %v262, %v304
      %v306 = vpop.f32.mrb[0].mxu0
      %v307 = vpop.f32.mrb[0].mxu0
      %v308 = vpop.f32.mrb[0].mxu0
      %309 = vdwg.mxu0
      %v310 = vsel %vm263, %v305, -inf
      %311 = vmax.xlane.f32.xlu0 %v310
      %v312 = vpop.xlane.xlu0 %311
      %v313 = vsub.f32 %v305, %v312
      %v314 = vmul.f32 %v313, 1.442695
      %v315 = vpow.pop %v314
      %v316 = vsel %vm263, %v315, 0.0
      %317 = vadd.xlane.f32.xlu0 %v316
      %v318 = vpop.xlane.xlu0 %317
      %v319 = vrcp.pop %v318
      %v320 = vmul.f32 %v315, %v319
      %v321 = vpack.c.bf16 %v320, %v320
      %v323 = vsel %vm263, %v321, 0
      %vm325 = vcmask 1043456
      %v327 = vsel %vm325, %v244, 0
      %329 = vmatprep.subr.bf16.mxu0 0
      %330 = vmatpush1.bf16.msra.mxu0 %v327
      %331 = vmatprep.subr.bf16.mxu0 0
      %332 = vmatpush1.bf16.msra.mxu0 0
      %333 = vmatprep.subr.bf16.mxu0 0
      %334 = vmatpush1.bf16.msra.mxu0 0
      %335 = vmatprep.subr.bf16.mxu0 0
      %336 = vmatpush1.bf16.msra.mxu0 0
      %337 = vmatprep.subr.bf16.mxu0 0
      %338 = vmatpush1.bf16.msra.mxu0 0
      %339 = vmatprep.subr.bf16.mxu0 0
      %340 = vmatpush1.bf16.msra.mxu0 0
      %341 = vmatprep.subr.bf16.mxu0 0
      %342 = vmatpush1.bf16.msra.mxu0 0
      %343 = vmatprep.subr.bf16.mxu0 0
      %344 = vmatpush1.bf16.msra.mxu0 0
      %345 = vmatprep.subr.bf16.mxu0 0
      %346 = vmatpush1.bf16.msra.mxu0 0
      %347 = vmatprep.subr.bf16.mxu0 0
      %348 = vmatpush1.bf16.msra.mxu0 0
      %349 = vmatprep.subr.bf16.mxu0 0
      %350 = vmatpush1.bf16.msra.mxu0 0
      %351 = vmatprep.subr.bf16.mxu0 0
      %352 = vmatpush1.bf16.msra.mxu0 0
      %353 = vmatprep.subr.bf16.mxu0 0
      %354 = vmatpush1.bf16.msra.mxu0 0
      %355 = vmatprep.subr.bf16.mxu0 0
      %356 = vmatpush1.bf16.msra.mxu0 0
      %357 = vmatprep.subr.bf16.mxu0 0
      %358 = vmatpush1.bf16.msra.mxu0 0
      %359 = vmatprep.subr.bf16.mxu0 0
      %360 = vmatpush1.bf16.msra.mxu0 0
      %361 = vmatprep.mubr.bf16.mxu0 0
      %362 = vmatmul.mubr.bf16.gmra.mrb[0].mxu0 %v323
      %v363 = vpop.f32.mrb[0].mxu0
      %v364 = vadd.f32 0.0, %v363
      %v365 = vpop.f32.mrb[0].mxu0
      %v366 = vpop.f32.mrb[0].mxu0
      %v367 = vpop.f32.mrb[0].mxu0
      %368 = vdwg.mxu0
      %370 = vrot.lane.b32.xlu0 %v247, 120
      %v371 = vpop.permute.xlu0 %370
      %v373 = vunpack.c.l.b16 %v243
      %v374 = vpack.c.b16 %v373, %v373
      %375 = vrot.lane.b32.xlu0 %v374, 120
      %v376 = vpop.permute.xlu0 %375
      %v378 = vsel %vm263, %v371, 0
      %v381 = vsel %vm263, %v376, 0
      %383 = vmatprep.subr.bf16.mxu0 0
      %384 = vmatpush1.bf16.xpose.msra.mxu0 %v381
      %385 = vmatprep.subr.bf16.mxu0 0
      %386 = vmatpush1.bf16.xpose.msra.mxu0 0
      %387 = vmatprep.subr.bf16.mxu0 0
      %388 = vmatpush1.bf16.xpose.msra.mxu0 0
      %389 = vmatprep.subr.bf16.mxu0 0
      %390 = vmatpush1.bf16.xpose.msra.mxu0 0
      %391 = vmatprep.subr.bf16.mxu0 0
      %392 = vmatpush1.bf16.xpose.msra.mxu0 0
      %393 = vmatprep.subr.bf16.mxu0 0
      %394 = vmatpush1.bf16.xpose.msra.mxu0 0
      %395 = vmatprep.subr.bf16.mxu0 0
      %396 = vmatpush1.bf16.xpose.msra.mxu0 0
      %397 = vmatprep.subr.bf16.mxu0 0
      %398 = vmatpush1.bf16.xpose.msra.mxu0 0
      %399 = vmatprep.subr.bf16.mxu0 0
      %400 = vmatpush1.bf16.xpose.msra.mxu0 0
      %401 = vmatprep.subr.bf16.mxu0 0
      %402 = vmatpush1.bf16.xpose.msra.mxu0 0
      %403 = vmatprep.subr.bf16.mxu0 0
      %404 = vmatpush1.bf16.xpose.msra.mxu0 0
      %405 = vmatprep.subr.bf16.mxu0 0
      %406 = vmatpush1.bf16.xpose.msra.mxu0 0
      %407 = vmatprep.subr.bf16.mxu0 0
      %408 = vmatpush1.bf16.xpose.msra.mxu0 0
      %409 = vmatprep.subr.bf16.mxu0 0
      %410 = vmatpush1.bf16.xpose.msra.mxu0 0
      %411 = vmatprep.subr.bf16.mxu0 0
      %412 = vmatpush1.bf16.xpose.msra.mxu0 0
      %413 = vmatprep.subr.bf16.mxu0 0
      %414 = vmatpush1.bf16.xpose.msra.mxu0 0
      %415 = vmatprep.mubr.bf16.mxu0 0
      %416 = vmatmul.mubr.bf16.gmra.mrb[0].mxu0 %v378
      %v417 = vpop.f32.mrb[0].mxu0
      %v418 = vadd.f32 %v262, %v417
      %v419 = vpop.f32.mrb[0].mxu0
      %v420 = vpop.f32.mrb[0].mxu0
      %v421 = vpop.f32.mrb[0].mxu0
      %422 = vdwg.mxu0
      %v423 = vsel %vm263, %v418, -inf
      %424 = vmax.xlane.f32.xlu0 %v423
      %v425 = vpop.xlane.xlu0 %424
      %v426 = vsub.f32 %v418, %v425
      %v427 = vmul.f32 %v426, 1.442695
      %v428 = vpow.pop %v427
      %v429 = vsel %vm263, %v428, 0.0
      %430 = vadd.xlane.f32.xlu0 %v429
      %v431 = vpop.xlane.xlu0 %430
      %v432 = vrcp.pop %v431
      %v433 = vmul.f32 %v428, %v432
      %v434 = vpack.c.bf16 %v433, %v433
      %v436 = vunpack.c.l.b16 %v244
      %v437 = vpack.c.b16 %v436, %v436
      %438 = vrot.lane.b32.xlu0 %v437, 120
      %v439 = vpop.permute.xlu0 %438
      %v441 = vsel %vm263, %v434, 0
      %v444 = vsel %vm325, %v439, 0
      %446 = vmatprep.subr.bf16.mxu0 0
      %447 = vmatpush1.bf16.msra.mxu0 %v444
      %448 = vmatprep.subr.bf16.mxu0 0
      %449 = vmatpush1.bf16.msra.mxu0 0
      %450 = vmatprep.subr.bf16.mxu0 0
      %451 = vmatpush1.bf16.msra.mxu0 0
      %452 = vmatprep.subr.bf16.mxu0 0
      %453 = vmatpush1.bf16.msra.mxu0 0
      %454 = vmatprep.subr.bf16.mxu0 0
      %455 = vmatpush1.bf16.msra.mxu0 0
      %456 = vmatprep.subr.bf16.mxu0 0
      %457 = vmatpush1.bf16.msra.mxu0 0
      %458 = vmatprep.subr.bf16.mxu0 0
      %459 = vmatpush1.bf16.msra.mxu0 0
      %460 = vmatprep.subr.bf16.mxu0 0
      %461 = vmatpush1.bf16.msra.mxu0 0
      %462 = vmatprep.subr.bf16.mxu0 0
      %463 = vmatpush1.bf16.msra.mxu0 0
      %464 = vmatprep.subr.bf16.mxu0 0
      %465 = vmatpush1.bf16.msra.mxu0 0
      %466 = vmatprep.subr.bf16.mxu0 0
      %467 = vmatpush1.bf16.msra.mxu0 0
      %468 = vmatprep.subr.bf16.mxu0 0
      %469 = vmatpush1.bf16.msra.mxu0 0
      %470 = vmatprep.subr.bf16.mxu0 0
      %471 = vmatpush1.bf16.msra.mxu0 0
      %472 = vmatprep.subr.bf16.mxu0 0
      %473 = vmatpush1.bf16.msra.mxu0 0
      %474 = vmatprep.subr.bf16.mxu0 0
      %475 = vmatpush1.bf16.msra.mxu0 0
      %476 = vmatprep.subr.bf16.mxu0 0
      %477 = vmatpush1.bf16.msra.mxu0 0
      %478 = vmatprep.mubr.bf16.mxu0 0
      %479 = vmatmul.mubr.bf16.gmra.mrb[0].mxu0 %v441
      %v480 = vpop.f32.mrb[0].mxu0
      %v481 = vadd.f32 0.0, %v480
      %v482 = vpop.f32.mrb[0].mxu0
      %v483 = vpop.f32.mrb[0].mxu0
      %v484 = vpop.f32.mrb[0].mxu0
      %485 = vdwg.mxu0
      %486 = vrot.lane.b32.xlu0 %v247, 112
      %v487 = vpop.permute.xlu0 %486
      %488 = vrot.lane.b32.xlu0 %v374, 112
      %v489 = vpop.permute.xlu0 %488
      %v491 = vsel %vm263, %v487, 0
      %v494 = vsel %vm263, %v489, 0
      %496 = vmatprep.subr.bf16.mxu0 0
      %497 = vmatpush1.bf16.xpose.msra.mxu0 %v494
      %498 = vmatprep.subr.bf16.mxu0 0
      %499 = vmatpush1.bf16.xpose.msra.mxu0 0
      %500 = vmatprep.subr.bf16.mxu0 0
      %501 = vmatpush1.bf16.xpose.msra.mxu0 0
      %502 = vmatprep.subr.bf16.mxu0 0
      %503 = vmatpush1.bf16.xpose.msra.mxu0 0
      %504 = vmatprep.subr.bf16.mxu0 0
      %505 = vmatpush1.bf16.xpose.msra.mxu0 0
      %506 = vmatprep.subr.bf16.mxu0 0
      %507 = vmatpush1.bf16.xpose.msra.mxu0 0
      %508 = vmatprep.subr.bf16.mxu0 0
      %509 = vmatpush1.bf16.xpose.msra.mxu0 0
      %510 = vmatprep.subr.bf16.mxu0 0
      %511 = vmatpush1.bf16.xpose.msra.mxu0 0
      %512 = vmatprep.subr.bf16.mxu0 0
      %513 = vmatpush1.bf16.xpose.msra.mxu0 0
      %514 = vmatprep.subr.bf16.mxu0 0
      %515 = vmatpush1.bf16.xpose.msra.mxu0 0
      %516 = vmatprep.subr.bf16.mxu0 0
      %517 = vmatpush1.bf16.xpose.msra.mxu0 0
      %518 = vmatprep.subr.bf16.mxu0 0
      %519 = vmatpush1.bf16.xpose.msra.mxu0 0
      %520 = vmatprep.subr.bf16.mxu0 0
      %521 = vmatpush1.bf16.xpose.msra.mxu0 0
      %522 = vmatprep.subr.bf16.mxu0 0
      %523 = vmatpush1.bf16.xpose.msra.mxu0 0
      %524 = vmatprep.subr.bf16.mxu0 0
      %525 = vmatpush1.bf16.xpose.msra.mxu0 0
      %526 = vmatprep.subr.bf16.mxu0 0
      %527 = vmatpush1.bf16.xpose.msra.mxu0 0
      %528 = vmatprep.mubr.bf16.mxu0 0
      %529 = vmatmul.mubr.bf16.gmra.mrb[0].mxu0 %v491
      %v530 = vpop.f32.mrb[0].mxu0
      %v531 = vadd.f32 %v262, %v530
      %v532 = vpop.f32.mrb[0].mxu0
      %v533 = vpop.f32.mrb[0].mxu0
      %v534 = vpop.f32.mrb[0].mxu0
      %535 = vdwg.mxu0
      %v536 = vsel %vm263, %v531, -inf
      %537 = vmax.xlane.f32.xlu0 %v536
      %v538 = vpop.xlane.xlu0 %537
      %v539 = vsub.f32 %v531, %v538
      %v540 = vmul.f32 %v539, 1.442695
      %v541 = vpow.pop %v540
      %v542 = vsel %vm263, %v541, 0.0
      %543 = vadd.xlane.f32.xlu0 %v542
      %v544 = vpop.xlane.xlu0 %543
      %v545 = vrcp.pop %v544
      %v546 = vmul.f32 %v541, %v545
      %v547 = vpack.c.bf16 %v546, %v546
      %548 = vrot.lane.b32.xlu0 %v437, 112
      %v549 = vpop.permute.xlu0 %548
      %v551 = vsel %vm263, %v547, 0
      %v554 = vsel %vm325, %v549, 0
      %556 = vmatprep.subr.bf16.mxu0 0
      %557 = vmatpush1.bf16.msra.mxu0 %v554
      %558 = vmatprep.subr.bf16.mxu0 0
      %559 = vmatpush1.bf16.msra.mxu0 0
      %560 = vmatprep.subr.bf16.mxu0 0
      %561 = vmatpush1.bf16.msra.mxu0 0
      %562 = vmatprep.subr.bf16.mxu0 0
      %563 = vmatpush1.bf16.msra.mxu0 0
      %564 = vmatprep.subr.bf16.mxu0 0
      %565 = vmatpush1.bf16.msra.mxu0 0
      %566 = vmatprep.subr.bf16.mxu0 0
      %567 = vmatpush1.bf16.msra.mxu0 0
      %568 = vmatprep.subr.bf16.mxu0 0
      %569 = vmatpush1.bf16.msra.mxu0 0
      %570 = vmatprep.subr.bf16.mxu0 0
      %571 = vmatpush1.bf16.msra.mxu0 0
      %572 = vmatprep.subr.bf16.mxu0 0
      %573 = vmatpush1.bf16.msra.mxu0 0
      %574 = vmatprep.subr.bf16.mxu0 0
      %575 = vmatpush1.bf16.msra.mxu0 0
      %576 = vmatprep.subr.bf16.mxu0 0
      %577 = vmatpush1.bf16.msra.mxu0 0
      %578 = vmatprep.subr.bf16.mxu0 0
      %579 = vmatpush1.bf16.msra.mxu0 0
      %580 = vmatprep.subr.bf16.mxu0 0
      %581 = vmatpush1.bf16.msra.mxu0 0
      %582 = vmatprep.subr.bf16.mxu0 0
      %583 = vmatpush1.bf16.msra.mxu0 0
      %584 = vmatprep.subr.bf16.mxu0 0
      %585 = vmatpush1.bf16.msra.mxu0 0
      %586 = vmatprep.subr.bf16.mxu0 0
      %587 = vmatpush1.bf16.msra.mxu0 0
      %588 = vmatprep.mubr.bf16.mxu0 0
      %589 = vmatmul.mubr.bf16.gmra.mrb[0].mxu0 %v551
      %v590 = vpop.f32.mrb[0].mxu0
      %v591 = vadd.f32 0.0, %v590
      %v592 = vpop.f32.mrb[0].mxu0
      %v593 = vpop.f32.mrb[0].mxu0
      %v594 = vpop.f32.mrb[0].mxu0
      %595 = vdwg.mxu0
      %596 = vrot.lane.b32.xlu0 %v247, 104
      %v597 = vpop.permute.xlu0 %596
      %598 = vrot.lane.b32.xlu0 %v374, 104
      %v599 = vpop.permute.xlu0 %598
      %v601 = vsel %vm263, %v597, 0
      %v604 = vsel %vm263, %v599, 0
      %606 = vmatprep.subr.bf16.mxu0 0
      %607 = vmatpush1.bf16.xpose.msra.mxu0 %v604
      %608 = vmatprep.subr.bf16.mxu0 0
      %609 = vmatpush1.bf16.xpose.msra.mxu0 0
      %610 = vmatprep.subr.bf16.mxu0 0
      %611 = vmatpush1.bf16.xpose.msra.mxu0 0
      %612 = vmatprep.subr.bf16.mxu0 0
      %613 = vmatpush1.bf16.xpose.msra.mxu0 0
      %614 = vmatprep.subr.bf16.mxu0 0
      %615 = vmatpush1.bf16.xpose.msra.mxu0 0
      %616 = vmatprep.subr.bf16.mxu0 0
      %617 = vmatpush1.bf16.xpose.msra.mxu0 0
      %618 = vmatprep.subr.bf16.mxu0 0
      %619 = vmatpush1.bf16.xpose.msra.mxu0 0
      %620 = vmatprep.subr.bf16.mxu0 0
      %621 = vmatpush1.bf16.xpose.msra.mxu0 0
      %622 = vmatprep.subr.bf16.mxu0 0
      %623 = vmatpush1.bf16.xpose.msra.mxu0 0
      %624 = vmatprep.subr.bf16.mxu0 0
      %625 = vmatpush1.bf16.xpose.msra.mxu0 0
      %626 = vmatprep.subr.bf16.mxu0 0
      %627 = vmatpush1.bf16.xpose.msra.mxu0 0
      %628 = vmatprep.subr.bf16.mxu0 0
      %629 = vmatpush1.bf16.xpose.msra.mxu0 0
      %630 = vmatprep.subr.bf16.mxu0 0
      %631 = vmatpush1.bf16.xpose.msra.mxu0 0
      %632 = vmatprep.subr.bf16.mxu0 0
      %633 = vmatpush1.bf16.xpose.msra.mxu0 0
      %634 = vmatprep.subr.bf16.mxu0 0
      %635 = vmatpush1.bf16.xpose.msra.mxu0 0
      %636 = vmatprep.subr.bf16.mxu0 0
      %637 = vmatpush1.bf16.xpose.msra.mxu0 0
      %638 = vmatprep.mubr.bf16.mxu0 0
      %639 = vmatmul.mubr.bf16.gmra.mrb[0].mxu0 %v601
      %v640 = vpop.f32.mrb[0].mxu0
      %v641 = vadd.f32 %v262, %v640
      %v642 = vpop.f32.mrb[0].mxu0
      %v643 = vpop.f32.mrb[0].mxu0
      %v644 = vpop.f32.mrb[0].mxu0
      %645 = vdwg.mxu0
      %v646 = vsel %vm263, %v641, -inf
      %647 = vmax.xlane.f32.xlu0 %v646
      %v648 = vpop.xlane.xlu0 %647
      %v649 = vsub.f32 %v641, %v648
      %v650 = vmul.f32 %v649, 1.442695
      %v651 = vpow.pop %v650
      %v652 = vsel %vm263, %v651, 0.0
      %653 = vadd.xlane.f32.xlu0 %v652
      %v654 = vpop.xlane.xlu0 %653
      %v655 = vrcp.pop %v654
      %v656 = vmul.f32 %v651, %v655
      %v657 = vpack.c.bf16 %v656, %v656
      %658 = vrot.lane.b32.xlu0 %v437, 104
      %v659 = vpop.permute.xlu0 %658
      %v661 = vsel %vm263, %v657, 0
      %v664 = vsel %vm325, %v659, 0
      %666 = vmatprep.subr.bf16.mxu0 0
      %667 = vmatpush1.bf16.msra.mxu0 %v664
      %668 = vmatprep.subr.bf16.mxu0 0
      %669 = vmatpush1.bf16.msra.mxu0 0
      %670 = vmatprep.subr.bf16.mxu0 0
      %671 = vmatpush1.bf16.msra.mxu0 0
      %672 = vmatprep.subr.bf16.mxu0 0
      %673 = vmatpush1.bf16.msra.mxu0 0
      %674 = vmatprep.subr.bf16.mxu0 0
      %675 = vmatpush1.bf16.msra.mxu0 0
      %676 = vmatprep.subr.bf16.mxu0 0
      %677 = vmatpush1.bf16.msra.mxu0 0
      %678 = vmatprep.subr.bf16.mxu0 0
      %679 = vmatpush1.bf16.msra.mxu0 0
      %680 = vmatprep.subr.bf16.mxu0 0
      %681 = vmatpush1.bf16.msra.mxu0 0
      %682 = vmatprep.subr.bf16.mxu0 0
      %683 = vmatpush1.bf16.msra.mxu0 0
      %684 = vmatprep.subr.bf16.mxu0 0
      %685 = vmatpush1.bf16.msra.mxu0 0
      %686 = vmatprep.subr.bf16.mxu0 0
      %687 = vmatpush1.bf16.msra.mxu0 0
      %688 = vmatprep.subr.bf16.mxu0 0
      %689 = vmatpush1.bf16.msra.mxu0 0
      %690 = vmatprep.subr.bf16.mxu0 0
      %691 = vmatpush1.bf16.msra.mxu0 0
      %692 = vmatprep.subr.bf16.mxu0 0
      %693 = vmatpush1.bf16.msra.mxu0 0
      %694 = vmatprep.subr.bf16.mxu0 0
      %695 = vmatpush1.bf16.msra.mxu0 0
      %696 = vmatprep.subr.bf16.mxu0 0
      %697 = vmatpush1.bf16.msra.mxu0 0
      %698 = vmatprep.mubr.bf16.mxu0 0
      %699 = vmatmul.mubr.bf16.gmra.mrb[0].mxu0 %v661
      %v700 = vpop.f32.mrb[0].mxu0
      %v701 = vadd.f32 0.0, %v700
      %v702 = vpop.f32.mrb[0].mxu0
      %v703 = vpop.f32.mrb[0].mxu0
      %v704 = vpop.f32.mrb[0].mxu0
      %705 = vdwg.mxu0
      %707 = vrot.lane.b32.xlu0 %v481, 8
      %v708 = vpop.permute.xlu0 %707
      %711 = vrot.lane.b32.xlu0 %v591, 16
      %v712 = vpop.permute.xlu0 %711
      %715 = vrot.lane.b32.xlu0 %v701, 24
      %v716 = vpop.permute.xlu0 %715
      %v718 = vsel %vm263, %v364, %v708
      %vm719 = vcmask 130048
      %v720 = vsel %vm719, %v718, %v712
      %vm721 = vcmask 195584
      %v722 = vsel %vm721, %v720, %v716
      %v723 = vpack.c.bf16 %v722, %v722
      %vm724 = vcmask 257024
      %725 = vst.msk [vmem:[%s240] sm:$0xf] %vm724, %v723
      %p726 = scmp.lt.s32.totalorder %s15, 1
      %s727 = scalar_select %p726, %s15, 1
      %s728 = smul.addr %s727, 4
      %s729 = scalar_lea.vmem %s4, %s728
      // Predicated region
      $region37: #{bart_forward_dense.55} parent=35 // pred_check
        %p730 = pneg %p137
      $region38: #{bart_forward_dense.55} parent=35 // pred_check_branch
        %732 = sbr.rel (%p730) target = $region40
      $region39: #{bart_forward_dense.55} parent=35 // pred_region
        _
      $region40: #{bart_forward_dense.55} parent=35 // pred_fallthru
        _
    $region36: #{bart_forward_dense.55} parent=5 // pred_fallthru
      _
    %p733 = scmp.le.s32.totalorder 2, %s10
    // Predicated region
    $region41: #{bart_forward_dense.55} parent=5 // pred_check
      %p734 = pneg %p733
    $region42: #{bart_forward_dense.55} parent=5 // pred_check_branch
      %736 = sbr.rel (%p734) target = $region44
    $region43: #{bart_forward_dense.55} parent=5 // pred_region
      %s737 = ssub.s32 %s10, 2
      // Predicated region
      $region45: #{bart_forward_dense.55} parent=43 // pred_check
        %p738 = pneg %p143
      $region46: #{bart_forward_dense.55} parent=43 // pred_check_branch
        %740 = sbr.rel (%p738) target = $region48
      $region47: #{bart_forward_dense.55} parent=43 // pred_region
        %p741 = scmp.lt.s32.totalorder %s16, 1
        %s742 = scalar_select %p741, %s16, 1
        %s743 = smul.addr %s742, 4
        %s744 = scalar_lea.vmem %s4, %s743
      $region48: #{bart_forward_dense.55} parent=43 // pred_fallthru
        _
    $region44: #{bart_forward_dense.55} parent=5 // pred_fallthru
      _
  $region6: #{bart_forward_dense.55} parent=0 // loop_footer
    %s14 = sadd.s32 1, %s10
  $region7: #{bart_forward_dense.55} parent=0 // loop_footer_branch
    %9 = sbr.rel target = $region3
  $region8: #{bart_forward_dense.55} parent=0 // loop_exit
    _

// kernel: bart_forward_dense.79
$region0: #{bart_forward_dense.79}
  #allocation0 [shape = 'u32[]', space=smem, size = 0x4, offset = 0x4, fixed_abs, tag = 'smem constant byte address 0x4 - core index']
  #allocation1 [shape = 'u32[144,128]{1,0:T(1,128)}', space=vmem, size = 0x12000, scoped, tag = 'internal scratch']
  %s0 = inlined_call_operand.vmem [shape: bf16[2,32], index: 0, kind: input, shape index: {}]
  %s1 = inlined_call_operand.vmem [shape: bf16[32,4], index: 1, kind: input, shape index: {}]
  %s2 = inlined_call_operand.vmem [shape: bf16[1,4], index: 2, kind: input, shape index: {}]
  %s3 = inlined_call_operand.hbm [shape: f32[2,4], index: 3, kind: output, shape index: {}]
  %s4 = sld [smem:[#allocation0]]
  $region22: #{bart_forward_dense.79} parent=0
    _
  %s6 = ssub.s32 1, %s4
  %s7 = scalar_select 0, %s6, %s4
  $region1: #{bart_forward_dense.79} parent=0
    #allocation2 [shape = 'u8[1024]{0}', space=vmem, size = 0x400, scoped, tag = 'output window, operand 0, single buffered']
    #allocation3 [shape = 's32[1]{0}', space=sflag, size = 0x4, scoped, tag = 'scoped memory for bart_forward_dense.79']
    %8 = vsyncpa [#allocation3], 0
    // Predicated region
    $region2: #{bart_forward_dense.79} parent=1 // pred_check
      _
    $region3: #{bart_forward_dense.79} parent=1 // pred_check_branch
      %10 = sbr.rel (0) target = $region5
    $region4: #{bart_forward_dense.79} parent=1 // pred_region
      _
    $region5: #{bart_forward_dense.79} parent=1 // pred_fallthru
      _
    // Predicated region
    $region6: #{bart_forward_dense.79} parent=1 // pred_check
      _
    $region7: #{bart_forward_dense.79} parent=1 // pred_check_branch
      %12 = sbr.rel (0) target = $region9
    $region8: #{bart_forward_dense.79} parent=1 // pred_region
      _
    $region9: #{bart_forward_dense.79} parent=1 // pred_fallthru
      _
    // Predicated region
    $region10: #{bart_forward_dense.79} parent=1 // pred_check
      _
    $region11: #{bart_forward_dense.79} parent=1 // pred_check_branch
      %14 = sbr.rel (0) target = $region13
    $region12: #{bart_forward_dense.79} parent=1 // pred_region
      _
    $region13: #{bart_forward_dense.79} parent=1 // pred_fallthru
      _
    %v16 = vld [vmem:[%s0] sm:$0x1]
    %v17 = vld [vmem:[%s1] sm:$0xf]
    %v18 = vld [vmem:[%s1 + $0x4] sm:$0xf]
    %v19 = vld [vmem:[%s1 + $0x8] sm:$0xf]
    %v20 = vld [vmem:[%s1 + $0xc] sm:$0xf]
    %v21 = vld [vmem:[%s2] sm:$0x1]
    %v22 = vunpack.c.l.bf16 %v21
    %v23 = vlaneseq
    %v24 = vshrl.u32 %v23, 7
    %v25 = vsub.s32 0, %v24
    %v26 = vrot.slane %v22, %v25
    %v31 = vunpack.c.l.b16 %v17
    %v32 = vunpack.c.l.b16 %v18
    %v33 = vunpack.c.l.b16 %v19
    %v34 = vunpack.c.l.b16 %v20
    %v35 = vpack.c.b16 %v32, %v31
    %v36 = vpack.c.b16 %v34, %v33
    %vm39 = vcmask 261120
    %v41 = vsel %vm39, %v16, 0
    %43 = vmatprep.subr.bf16.mxu0 0
    %44 = vmatpush1.bf16.msra.mxu0 %v35
    %45 = vmatprep.subr.bf16.mxu0 0
    %46 = vmatpush1.bf16.msra.mxu0 %v36
    %47 = vmatprep.subr.bf16.mxu0 0
    %48 = vmatpush1.bf16.msra.mxu0 0
    %49 = vmatprep.subr.bf16.mxu0 0
    %50 = vmatpush1.bf16.msra.mxu0 0
    %51 = vmatprep.subr.bf16.mxu0 0
    %52 = vmatpush1.bf16.msra.mxu0 0
    %53 = vmatprep.subr.bf16.mxu0 0
    %54 = vmatpush1.bf16.msra.mxu0 0
    %55 = vmatprep.subr.bf16.mxu0 0
    %56 = vmatpush1.bf16.msra.mxu0 0
    %57 = vmatprep.subr.bf16.mxu0 0
    %58 = vmatpush1.bf16.msra.mxu0 0
    %59 = vmatprep.subr.bf16.mxu0 0
    %60 = vmatpush1.bf16.msra.mxu0 0
    %61 = vmatprep.subr.bf16.mxu0 0
    %62 = vmatpush1.bf16.msra.mxu0 0
    %63 = vmatprep.subr.bf16.mxu0 0
    %64 = vmatpush1.bf16.msra.mxu0 0
    %65 = vmatprep.subr.bf16.mxu0 0
    %66 = vmatpush1.bf16.msra.mxu0 0
    %67 = vmatprep.subr.bf16.mxu0 0
    %68 = vmatpush1.bf16.msra.mxu0 0
    %69 = vmatprep.subr.bf16.mxu0 0
    %70 = vmatpush1.bf16.msra.mxu0 0
    %71 = vmatprep.subr.bf16.mxu0 0
    %72 = vmatpush1.bf16.msra.mxu0 0
    %73 = vmatprep.subr.bf16.mxu0 0
    %74 = vmatpush1.bf16.msra.mxu0 0
    %75 = vmatprep.mubr.bf16.mxu0 0
    %76 = vmatmul.mubr.bf16.gmra.mrb[0].mxu0 %v41
    %v77 = vpop.f32.mrb[0].mxu0
    %v78 = vadd.f32 %v26, %v77
    %v79 = vpop.f32.mrb[0].mxu0
    %v80 = vpop.f32.mrb[0].mxu0
    %v81 = vpop.f32.mrb[0].mxu0
    %82 = vdwg.mxu0
    %vm83 = vcmask 25600
    %v84 = vsel %vm83, %v78, -inf
    %85 = vmax.xlane.f32.xlu0 %v84
    %v86 = vpop.xlane.xlu0 %85
    %v87 = vsub.f32 %v78, %v86
    %v88 = vmul.f32 %v87, 1.442695
    %v89 = vpow.pop %v88
    %v90 = vsel %vm83, %v89, 0.0
    %91 = vadd.xlane.f32.xlu0 %v90
    %v92 = vpop.xlane.xlu0 %91
    %v93 = vlog2.pop %v92
    %v94 = vmul.f32 %v93, 0.6931472
    %v95 = vsub.f32 %v87, %v94
    %96 = vst.msk [vmem:[#allocation2] sm:$0x3] %vm83, %v95
    // Predicated region
    $region14: #{bart_forward_dense.79} parent=1 // pred_check
      _
    $region15: #{bart_forward_dense.79} parent=1 // pred_check_branch
      %98 = sbr.rel (0) target = $region17
    $region16: #{bart_forward_dense.79} parent=1 // pred_region
      %s100 = ssub.s32 32, 32
      %101 = vsyncadd [#allocation3], %s100
      %s103 = sshll.u32 [#allocation2], 4
      %s104 = int_to_ptr.vmem [resolvable:$true] %s103
      %106 = dma.vmem_to_hbm [thread:$0]  %s104, 32, %s3, [#allocation3]
    $region17: #{bart_forward_dense.79} parent=1 // pred_fallthru
      _
    // Predicated region
    $region18: #{bart_forward_dense.79} parent=1 // pred_check
      _
    $region19: #{bart_forward_dense.79} parent=1 // pred_check_branch
      %108 = sbr.rel (0) target = $region21
    $region20: #{bart_forward_dense.79} parent=1 // pred_region
      %109 = dma.done [#allocation3], 32
    $region21: #{bart_forward_dense.79} parent=1 // pred_fallthru
      _
    %110 = vsyncpa [#allocation3], 1

// kernel: bart_forward_dense.78
$region0: #{bart_forward_dense.78}
  #allocation0 [shape = 'u32[]', space=smem, size = 0x4, offset = 0x4, fixed_abs, tag = 'smem constant byte address 0x4 - core index']
  #allocation1 [shape = 'u32[144,128]{1,0:T(1,128)}', space=vmem, size = 0x12000, scoped, tag = 'internal scratch']
  %s0 = inlined_call_operand.vmem [shape: bf16[16,32], index: 0, kind: input, shape index: {}]
  %s1 = inlined_call_operand.vmem [shape: bf16[32,64], index: 1, kind: input, shape index: {}]
  %s2 = inlined_call_operand.vmem [shape: bf16[1,64], index: 2, kind: input, shape index: {}]
  %s3 = inlined_call_operand.hbm [shape: f32[16,64], index: 3, kind: output, shape index: {}]
  %s4 = sld [smem:[#allocation0]]
  $region22: #{bart_forward_dense.78} parent=0
    _
  %s6 = ssub.s32 1, %s4
  %s7 = scalar_select 0, %s6, %s4
  $region1: #{bart_forward_dense.78} parent=0
    #allocation2 [shape = 'u8[8192]{0}', space=vmem, size = 0x2000, scoped, tag = 'output window, operand 0, single buffered']
    #allocation3 [shape = 's32[1]{0}', space=sflag, size = 0x4, scoped, tag = 'scoped memory for bart_forward_dense.78']
    %8 = vsyncpa [#allocation3], 0
    // Predicated region
    $region2: #{bart_forward_dense.78} parent=1 // pred_check
      _
    $region3: #{bart_forward_dense.78} parent=1 // pred_check_branch
      %10 = sbr.rel (0) target = $region5
    $region4: #{bart_forward_dense.78} parent=1 // pred_region
      _
    $region5: #{bart_forward_dense.78} parent=1 // pred_fallthru
      _
    // Predicated region
    $region6: #{bart_forward_dense.78} parent=1 // pred_check
      _
    $region7: #{bart_forward_dense.78} parent=1 // pred_check_branch
      %12 = sbr.rel (0) target = $region9
    $region8: #{bart_forward_dense.78} parent=1 // pred_region
      _
    $region9: #{bart_forward_dense.78} parent=1 // pred_fallthru
      _
    // Predicated region
    $region10: #{bart_forward_dense.78} parent=1 // pred_check
      _
    $region11: #{bart_forward_dense.78} parent=1 // pred_check_branch
      %14 = sbr.rel (0) target = $region13
    $region12: #{bart_forward_dense.78} parent=1 // pred_region
      _
    $region13: #{bart_forward_dense.78} parent=1 // pred_fallthru
      _
    %v16 = vld [vmem:[%s0] sm:$0xf]
    %v17 = vld [vmem:[%s0 + $0x4] sm:$0xf]
    %v18 = vld [vmem:[%s1] sm:$0xf]
    %v19 = vld [vmem:[%s1 + $0x4] sm:$0xf]
    %v20 = vld [vmem:[%s1 + $0x8] sm:$0xf]
    %v21 = vld [vmem:[%s1 + $0xc] sm:$0xf]
    %v22 = vld [vmem:[%s2] sm:$0x1]
    %v23 = vunpack.c.l.bf16 %v22
    %v24 = vlaneseq
    %v25 = vshrl.u32 %v24, 7
    %v26 = vsub.s32 0, %v25
    %v27 = vrot.slane %v23, %v26
    %v30 = vunpack.c.l.b16 %v16
    %v31 = vunpack.c.l.b16 %v17
    %v32 = vpack.c.b16 %v31, %v30
    %v37 = vunpack.c.l.b16 %v18
    %v38 = vunpack.c.l.b16 %v19
    %v39 = vunpack.c.l.b16 %v20
    %v40 = vunpack.c.l.b16 %v21
    %v41 = vpack.c.b16 %v38, %v37
    %v42 = vpack.c.b16 %v40, %v39
    %vm45 = vcmask 261120
    %v47 = vsel %vm45, %v32, 0
    %49 = vmatprep.subr.bf16.mxu0 0
    %50 = vmatpush1.bf16.msra.mxu0 %v41
    %51 = vmatprep.subr.bf16.mxu0 0
    %52 = vmatpush1.bf16.msra.mxu0 %v42
    %53 = vmatprep.subr.bf16.mxu0 0
    %54 = vmatpush1.bf16.msra.mxu0 0
    %55 = vmatprep.subr.bf16.mxu0 0
    %56 = vmatpush1.bf16.msra.mxu0 0
    %57 = vmatprep.subr.bf16.mxu0 0
    %58 = vmatpush1.bf16.msra.mxu0 0
    %59 = vmatprep.subr.bf16.mxu0 0
    %60 = vmatpush1.bf16.msra.mxu0 0
    %61 = vmatprep.subr.bf16.mxu0 0
    %62 = vmatpush1.bf16.msra.mxu0 0
    %63 = vmatprep.subr.bf16.mxu0 0
    %64 = vmatpush1.bf16.msra.mxu0 0
    %65 = vmatprep.subr.bf16.mxu0 0
    %66 = vmatpush1.bf16.msra.mxu0 0
    %67 = vmatprep.subr.bf16.mxu0 0
    %68 = vmatpush1.bf16.msra.mxu0 0
    %69 = vmatprep.subr.bf16.mxu0 0
    %70 = vmatpush1.bf16.msra.mxu0 0
    %71 = vmatprep.subr.bf16.mxu0 0
    %72 = vmatpush1.bf16.msra.mxu0 0
    %73 = vmatprep.subr.bf16.mxu0 0
    %74 = vmatpush1.bf16.msra.mxu0 0
    %75 = vmatprep.subr.bf16.mxu0 0
    %76 = vmatpush1.bf16.msra.mxu0 0
    %77 = vmatprep.subr.bf16.mxu0 0
    %78 = vmatpush1.bf16.msra.mxu0 0
    %79 = vmatprep.subr.bf16.mxu0 0
    %80 = vmatpush1.bf16.msra.mxu0 0
    %81 = vmatprep.mubr.bf16.mxu0 0
    %82 = vmatmul.mubr.bf16.gmra.mrb[0].mxu0 %v47
    %v83 = vpop.f32.mrb[0].mxu0
    %v84 = vadd.f32 %v27, %v83
    %v85 = vpop.f32.mrb[0].mxu0
    %v86 = vpop.f32.mrb[0].mxu0
    %v87 = vadd.f32 %v27, %v86
    %v88 = vpop.f32.mrb[0].mxu0
    %89 = vdwg.mxu0
    %vm90 = vcmask 523264
    %v91 = vsel %vm90, %v84, -inf
    %92 = vmax.xlane.f32.xlu0 %v91
    %v93 = vpop.xlane.xlu0 %92
    %v94 = vsel %vm90, %v87, -inf
    %95 = vmax.xlane.f32.xlu0 %v94
    %v96 = vpop.xlane.xlu0 %95
    %v97 = vsub.f32 %v84, %v93
    %v98 = vsub.f32 %v87, %v96
    %v99 = vmul.f32 %v97, 1.442695
    %v100 = vpow.pop %v99
    %v101 = vmul.f32 %v98, 1.442695
    %v102 = vpow.pop %v101
    %v103 = vsel %vm90, %v100, 0.0
    %104 = vadd.xlane.f32.xlu0 %v103
    %v105 = vpop.xlane.xlu0 %104
    %v106 = vsel %vm90, %v102, 0.0
    %107 = vadd.xlane.f32.xlu0 %v106
    %v108 = vpop.xlane.xlu0 %107
    %v109 = vlog2.pop %v105
    %v110 = vmul.f32 %v109, 0.6931472
    %v111 = vlog2.pop %v108
    %v112 = vmul.f32 %v111, 0.6931472
    %v113 = vsub.f32 %v97, %v110
    %v114 = vsub.f32 %v98, %v112
    %115 = vst.msk [vmem:[#allocation2] sm:$0xff] %vm90, %v113
    %116 = vst.msk [vmem:[#allocation2 + $0x8] sm:$0xff] %vm90, %v114
    // Predicated region
    $region14: #{bart_forward_dense.78} parent=1 // pred_check
      _
    $region15: #{bart_forward_dense.78} parent=1 // pred_check_branch
      %118 = sbr.rel (0) target = $region17
    $region16: #{bart_forward_dense.78} parent=1 // pred_region
      %s120 = ssub.s32 256, 256
      %121 = vsyncadd [#allocation3], %s120
      %s122 = sshll.u32 [#allocation2], 4
      %s123 = int_to_ptr.vmem [resolvable:$true] %s122
      %128 = dma.vmem_to_hbm [thread:$0]  %s123, 256, %s3, [#allocation3], 128, 128, 8
    $region17: #{bart_forward_dense.78} parent=1 // pred_fallthru
      _
    // Predicated region
    $region18: #{bart_forward_dense.78} parent=1 // pred_check
      _
    $region19: #{bart_forward_dense.78} parent=1 // pred_check_branch
      %130 = sbr.rel (0) target = $region21
    $region20: #{bart_forward_dense.78} parent=1 // pred_region
      %131 = dma.done [#allocation3], 256
    $region21: #{bart_forward_dense.78} parent=1 // pred_fallthru
      _
    %132 = vsyncpa [#allocation3], 1

</llo_original>
